<compile_context>
chip_gen: v6e
topology: v6e:2x2x1
jax: 0.10.0
libtpu: 0.0.40
codegen_flags: <defaults>
</compile_context>

<pallas_src>
import math
import functools

import jax
import jax.numpy as jnp
from jax.experimental import pallas as pl
from jax.experimental.pallas import tpu as pltpu

LN_EPS = 1e-12          # RoFormerConfig.layer_norm_eps default
MASK_VALUE = -1e9       # large finite additive mask (HF uses f32-min; finite is safer)


# ----------------------------- math helpers (used in-kernel) ------------------

def _layernorm(x, g, b):
    mu = jnp.mean(x, axis=-1, keepdims=True)
    xc = x - mu
    var = jnp.mean(xc * xc, axis=-1, keepdims=True)
    return xc * jax.lax.rsqrt(var + LN_EPS) * g + b


def _erf_poly(x):
    # Abramowitz & Stegun 7.1.26, |err| < 1.5e-7; the divide goes to the EUP slot.
    a1, a2, a3, a4, a5 = 0.254829592, -0.284496736, 1.421413741, -1.453152027, 1.061405429
    pc = 0.3275911
    ax = jnp.abs(x)
    t = pl.reciprocal(1.0 + pc * ax, approx=True)
    poly = ((((a5 * t + a4) * t + a3) * t + a2) * t + a1) * t
    y = 1.0 - poly * jnp.exp(-ax * ax)
    return jnp.where(x >= 0.0, y, -y)


def _gelu_kernel(x):
    return 0.5 * x * (1.0 + _erf_poly(x * 0.7071067811865476))


def _gelu_exact(x):
    return 0.5 * x * (1.0 + jax.lax.erf(x * 0.7071067811865476))


# ----------------------------- rotary tables ----------------------------------

def rope_tables(S, H, num_heads):
    """HF-RoFormer sinusoidal tables, interleave-duplicated and tiled across heads.

    Returns (cos, sin, sin_neg_even, sin_pos_odd), each [S, H].  The last two are the
    sin table with signs/zeros arranged so interleaved rotate-half becomes
        x*cos + roll(x, H-1)*sin_neg_even + roll(x, 1)*sin_pos_odd
    (pure XLU roll + VPU work, no matmul).  Correct only because the lanes that wrap
    at the roll boundary land on zeroed entries -- requires dh % 2 == 0 (asserted)."""
    dh = H // num_heads
    half = dh // 2
    inv_freq = 1.0 / (10000.0 ** (2.0 * jnp.arange(half, dtype=jnp.float32) / dh))
    theta = jnp.arange(S, dtype=jnp.float32)[:, None] * inv_freq[None, :]       # [S, half]
    sin = jnp.repeat(jnp.sin(theta), 2, axis=-1)                                # [S, dh]
    cos = jnp.repeat(jnp.cos(theta), 2, axis=-1)
    sin_f = jnp.tile(sin, (1, num_heads))                                       # [S, H]
    cos_f = jnp.tile(cos, (1, num_heads))
    even = (jnp.arange(H) % 2 == 0)[None, :]
    sneg = jnp.where(even, -sin_f, 0.0)   # picks -x[j+1]*sin at even lanes
    spos = jnp.where(even, 0.0, sin_f)    # picks +x[j-1]*sin at odd lanes
    return cos_f, sin_f, sneg, spos


# ----------------------------- fused Pallas kernel -----------------------------

def road_encoder_kernel(emb_ref, bias_ref, cos_ref, sneg_ref, spos_ref,
                        tt_ref, eg_ref, eb_ref,
                        wqkv_ref, bqkv_ref, wo_ref, bo_ref,
                        ln1g_ref, ln1b_ref, w1_ref, b1_ref,
                        w2_ref, b2_ref, ln2g_ref, ln2b_ref,
                        out_ref, x_ref, *, num_heads):
    # grid = (B, L); this invocation handles batch pl.program_id(0), layer l below.
    l = pl.program_id(1)
    S, H = x_ref.shape
    nh = num_heads
    dh = H // nh
    scale = 1.0 / math.sqrt(dh)
    cdt = wqkv_ref.dtype                  # matmul compute dtype (bf16); accumulate f32

    # ---- layer 0 only: token-type add + embedding LayerNorm (projection = Identity)
    @pl.when(l == 0)
    def _():
        x_ref[...] = _layernorm(emb_ref[...] + tt_ref[...], eg_ref[...], eb_ref[...])

    x = x_ref[...]                        # [S, H] f32, carried in VMEM across layers

    cos = cos_ref[...]
    sneg = sneg_ref[...]
    spos = spos_ref[...]

    def rope(t):
        # interleaved rotary: out[2i] = t[2i]cos - t[2i+1]sin ; out[2i+1] = t[2i+1]cos + t[2i]sin
        return (t * cos
                + pltpu.roll(t, H - 1, axis=1) * sneg      # neighbour t[j+1]
                + pltpu.roll(t, 1, axis=1) * spos)         # neighbour t[j-1]

    def mm(a, w):
        return jnp.dot(a.astype(cdt), w, preferred_element_type=jnp.float32)

    # ---- fused QKV projection: one [S,H] @ [H,3H] MXU matmul, heads stay lane-packed
    qkv = mm(x, wqkv_ref[...]) + bqkv_ref[...]             # [S, 3H] f32
    q = rope(qkv[:, 0:H])
    k = rope(qkv[:, H:2 * H])
    v = rope(qkv[:, 2 * H:3 * H])                          # rotary_value=True

    # ---- head split: one reshape + one transpose (no per-head slice/stack)
    q3 = jnp.swapaxes(q.reshape(S, nh, dh), 0, 1)          # [nh, S, dh]
    k3 = jnp.swapaxes(k.reshape(S, nh, dh), 0, 1)
    v3 = jnp.swapaxes(v.reshape(S, nh, dh), 0, 1)

    bias = bias_ref[...].reshape(1, 1, S)                  # per-batch key-padding mask
    s = jnp.einsum("hqd,hkd->hqk", q3.astype(cdt), k3.astype(cdt),
                   preferred_element_type=jnp.float32) * scale + bias   # [nh, S, S] f32
    s = s - jnp.max(s, axis=-1, keepdims=True)
    e = jnp.exp(s)
    p = e * pl.reciprocal(jnp.sum(e, axis=-1, keepdims=True), approx=True)
    ctx = jnp.einsum("hqk,hkd->hqd", p.astype(cdt), v3.astype(cdt),
                     preferred_element_type=jnp.float32)                # [nh, S, dh]
    ctx = jnp.swapaxes(ctx, 0, 1).reshape(S, H)            # merge heads back to lanes

    # ---- single well-shaped K=H output projection + residual/LN + FFN
    attn = mm(ctx, wo_ref[...]) + bo_ref[...]
    h1 = _layernorm(attn + x, ln1g_ref[...], ln1b_ref[...])
    ff = _gelu_kernel(mm(h1, w1_ref[...]) + b1_ref[...])
    ff = mm(ff, w2_ref[...]) + b2_ref[...]
    x_new = _layernorm(ff + h1, ln2g_ref[...], ln2b_ref[...])
    x_ref[...] = x_new

    # ---- 'bos' pooling: only the pooled [1, H] row leaves VMEM, after the last layer
    @pl.when(l == pl.num_programs(1) - 1)
    def _():
        out_ref[...] = x_new[0:1, :]


# ----------------------------- wrapper -----------------------------------------

def _stack_layers(layers, matmul_dtype):
    """Stack per-layer params along a leading L axis; matmul weights cast to bf16."""
    def stk(name):
        return jnp.stack([p[name] for p in layers])
    wqkv = jnp.stack([jnp.concatenate([p["wq"], p["wk"], p["wv"]], axis=1) for p in layers])
    bqkv = jnp.stack([jnp.concatenate([p["bq"], p["bk"], p["bv"]], axis=1) for p in layers])
    return {
        "wqkv": wqkv.astype(matmul_dtype),       # [L, H, 3H]
        "bqkv": bqkv,                            # biases / LN params stay f32
        "wo":   stk("wo").astype(matmul_dtype),  # [L, H, H] (original matrix, no head reshape)
        "bo":   stk("bo"),
        "ln1g": stk("ln1g"), "ln1b": stk("ln1b"),
        "w1":   stk("w1").astype(matmul_dtype), "b1": stk("b1"),
        "w2":   stk("w2").astype(matmul_dtype), "b2": stk("b2"),
        "ln2g": stk("ln2g"), "ln2b": stk("ln2b"),
    }


def road_encoder_forward(params, x_ids, attention_mask, num_heads,
                         matmul_dtype=jnp.bfloat16):
    B, S = x_ids.shape
    H = params["emb"].shape[1]
    nh = num_heads
    dh = H // nh
    assert H % nh == 0 and dh % 2 == 0, "head_dim must be even for interleaved rotary"

    # glue: embedding-table gather (padding row is zero) + per-batch additive key mask
    emb = jnp.take(params["emb"], x_ids, axis=0).astype(jnp.float32)           # [B, S, H]
    bias = ((1.0 - attention_mask.astype(jnp.float32)) * MASK_VALUE).reshape(B, 1, S)

    cos_f, _sin_f, sneg, spos = rope_tables(S, H, nh)                          # [S, H] each

    st = _stack_layers(params["layers"], matmul_dtype)
    L = st["wqkv"].shape[0]
    I = st["w1"].shape[2]

    inputs = (emb, bias, cos_f, sneg, spos,
              params["tt"], params["emb_ln_g"], params["emb_ln_b"],
              st["wqkv"], st["bqkv"], st["wo"], st["bo"],
              st["ln1g"], st["ln1b"], st["w1"], st["b1"],
              st["w2"], st["b2"], st["ln2g"], st["ln2b"])

    # BlockSpec helpers: per-batch block, grid-shared full block, per-layer block.
    def per_batch(shp):
        return pl.BlockSpec((None,) + shp[1:], lambda b, l, _n=len(shp): (b,) + (0,) * (_n - 1))

    def shared(shp):
        return pl.BlockSpec(shp, lambda b, l, _n=len(shp): (0,) * _n)

    def per_layer(shp):
        return pl.BlockSpec((None,) + shp[1:], lambda b, l, _n=len(shp): (l,) + (0,) * (_n - 1))

    in_specs = ([per_batch(emb.shape), per_batch(bias.shape),
                 shared(cos_f.shape), shared(sneg.shape), shared(spos.shape),
                 shared(params["tt"].shape), shared(params["emb_ln_g"].shape),
                 shared(params["emb_ln_b"].shape)]
                + [per_layer(st[k].shape) for k in
                   ("wqkv", "bqkv", "wo", "bo", "ln1g", "ln1b",
                    "w1", "b1", "w2", "b2", "ln2g", "ln2b")])

    # advisory cost estimate so XLA schedules around the fused custom call sensibly
    flops_per_bl = (2 * S * H * 3 * H            # fused QKV
                    + 2 * nh * S * S * dh * 2    # scores + context
                    + 2 * S * H * H              # output projection
                    + 2 * S * H * I * 2)         # MLP
    cost = pl.CostEstimate(
        flops=int(B * L * flops_per_bl),
        transcendentals=int(B * L * (nh * S * S + 2 * S * I + 6 * S) + 2 * B * S),
        bytes_accessed=int(sum(int(a.size) * a.dtype.itemsize for a in inputs) + B * H * 4),
    )

    kernel = functools.partial(road_encoder_kernel, num_heads=nh)
    out = pl.pallas_call(
        kernel,
        out_shape=jax.ShapeDtypeStruct((B, 1, H), jnp.float32),
        grid=(B, L),
        in_specs=in_specs,
        out_specs=pl.BlockSpec((None, 1, H), lambda b, l: (b, 0, 0)),
        scratch_shapes=[pltpu.VMEM((S, H), jnp.float32)],   # hidden-state carry
        compiler_params=pltpu.CompilerParams(
            dimension_semantics=("parallel", "arbitrary"),   # batch across cores, layers sequential
            vmem_limit_bytes=48 * 1024 * 1024),              # headroom below 64 MiB (v7x)
        cost_estimate=cost,
    )(*inputs)
    return out.reshape(B, H)


# ----------------------------- pure-JAX reference ------------------------------

def reference_forward(params, x_ids, attention_mask, num_heads):
    B, S = x_ids.shape
    H = params["emb"].shape[1]
    dh = H // num_heads
    cos_f, sin_f, _, _ = rope_tables(S, H, num_heads)

    def rot_half(t):                     # HF interleaved rotate-half
        te = t[..., 0::2]
        to = t[..., 1::2]
        return jnp.stack([-to, te], axis=-1).reshape(t.shape)

    x = jnp.take(params["emb"], x_ids, axis=0) + params["tt"]
    x = _layernorm(x, params["emb_ln_g"], params["emb_ln_b"])
    mask_add = (1.0 - attention_mask.astype(jnp.float32)) * MASK_VALUE          # [B, S]
    for p in params["layers"]:
        q = x @ p["wq"] + p["bq"]
        k = x @ p["wk"] + p["bk"]
        v = x @ p["wv"] + p["bv"]
        q = q * cos_f + rot_half(q) * sin_f
        k = k * cos_f + rot_half(k) * sin_f
        v = v * cos_f + rot_half(v) * sin_f                                     # rotary_value
        qh = q.reshape(B, S, num_heads, dh).transpose(0, 2, 1, 3)
        kh = k.reshape(B, S, num_heads, dh).transpose(0, 2, 1, 3)
        vh = v.reshape(B, S, num_heads, dh).transpose(0, 2, 1, 3)
        s = jnp.einsum("bhqd,bhkd->bhqk", qh, kh) / math.sqrt(dh)
        s = s + mask_add[:, None, None, :]
        prob = jax.nn.softmax(s, axis=-1)
        ctx = jnp.einsum("bhqk,bhkd->bhqd", prob, vh).transpose(0, 2, 1, 3).reshape(B, S, H)
        x = _layernorm(ctx @ p["wo"] + p["bo"] + x, p["ln1g"], p["ln1b"])
        ff = _gelu_exact(x @ p["w1"] + p["b1"]) @ p["w2"] + p["b2"]
        x = _layernorm(ff + x, p["ln2g"], p["ln2b"])
    return x[:, 0]                        # pooling_strategy / pool == 'bos'


# ----------------------------- parameter init ----------------------------------

def init_params(key, num_roads, H, I, num_layers):
    def normal(k, shape):
        return 0.02 * jax.random.normal(k, shape, jnp.float32)

    k_emb, k_tt, k_layers = jax.random.split(key, 3)
    emb = normal(k_emb, (num_roads, H)).at[0].set(0.0)         # padding_idx = 0
    params = {
        "emb": emb,
        "tt": normal(k_tt, (1, H)),                            # token_type_embeddings[0]
        "emb_ln_g": jnp.ones((1, H), jnp.float32),
        "emb_ln_b": jnp.zeros((1, H), jnp.float32),
        "layers": [],
    }
    for lk in jax.random.split(k_layers, num_layers):
        ks = jax.random.split(lk, 6)
        params["layers"].append(dict(
            wq=normal(ks[0], (H, H)), bq=jnp.zeros((1, H), jnp.float32),
            wk=normal(ks[1], (H, H)), bk=jnp.zeros((1, H), jnp.float32),
            wv=normal(ks[2], (H, H)), bv=jnp.zeros((1, H), jnp.float32),
            wo=normal(ks[3], (H, H)), bo=jnp.zeros((1, H), jnp.float32),
            ln1g=jnp.ones((1, H), jnp.float32), ln1b=jnp.zeros((1, H), jnp.float32),
            w1=normal(ks[4], (H, I)), b1=jnp.zeros((1, I), jnp.float32),
            w2=normal(ks[5], (I, H)), b2=jnp.zeros((1, H), jnp.float32),
            ln2g=jnp.ones((1, H), jnp.float32), ln2b=jnp.zeros((1, H), jnp.float32),
        ))
    return params


# ----------------------------- main ---------------------------------------------

if __name__ == "__main__":
    # small config: num_roads=1000, embed_dim=output_dim=32, heads=4, layers=2,
    # intermediate = 2*hidden = 64, pooling 'bos'
    B, S = 2, 8
    NUM_ROADS, H, NUM_HEADS, NUM_LAYERS = 1000, 32, 4, 2
    I = 2 * H

    key = jax.random.PRNGKey(0)
    k_params, k_x = jax.random.split(key)
    params = init_params(k_params, NUM_ROADS, H, I, NUM_LAYERS)

    x_ids = jax.random.randint(k_x, (B, S), 1, NUM_ROADS)
    attention_mask = jnp.ones((B, S), jnp.float32)
    attention_mask = attention_mask.at[1, S - 2:].set(0.0)     # some padding
    x_ids = jnp.where(attention_mask > 0, x_ids, 0)            # PAD_IDX at padded spots

    # pure-JAX reference (f32, exact erf / exact divides)
    with jax.default_matmul_precision("float32"):
        ref = reference_forward(params, x_ids, attention_mask, NUM_HEADS)
    ref = jax.block_until_ready(ref)

    # f32-matmul kernel path: tight numerical check of the fused kernel structure
    out_f32 = road_encoder_forward(params, x_ids, attention_mask, NUM_HEADS,
                                   matmul_dtype=jnp.float32)
    out_f32 = jax.block_until_ready(out_f32)
    assert out_f32.shape == (B, H) and out_f32.dtype == jnp.float32
    assert bool(jnp.allclose(out_f32, ref, rtol=5e-3, atol=5e-3)), "f32 path mismatch"

    # bf16-matmul kernel path (the performance configuration): looser tolerance
    out_bf16 = road_encoder_forward(params, x_ids, attention_mask, NUM_HEADS,
                                    matmul_dtype=jnp.bfloat16)
    out_bf16 = jax.block_until_ready(out_bf16)
    assert out_bf16.shape == (B, H) and out_bf16.dtype == jnp.float32
    assert bool(jnp.allclose(out_bf16, ref, rtol=2.5e-2, atol=2.5e-2)), "bf16 path mismatch"

    print("KERNEL_OK")
</pallas_src>

<mosaic_0001>
module attributes {stable_mosaic.version = 11 : i64} {
  func.func @road_encoder_kernel(%arg0: i32, %arg1: i32, %arg2: memref<1x8x32xf32, #tpu.memory_space<vmem>>, %arg3: memref<1x1x8xf32, #tpu.memory_space<vmem>>, %arg4: memref<8x32xf32, #tpu.memory_space<vmem>>, %arg5: memref<8x32xf32, #tpu.memory_space<vmem>>, %arg6: memref<8x32xf32, #tpu.memory_space<vmem>>, %arg7: memref<1x32xf32, #tpu.memory_space<vmem>>, %arg8: memref<1x32xf32, #tpu.memory_space<vmem>>, %arg9: memref<1x32xf32, #tpu.memory_space<vmem>>, %arg10: memref<1x32x96xf32, #tpu.memory_space<vmem>>, %arg11: memref<1x1x96xf32, #tpu.memory_space<vmem>>, %arg12: memref<1x32x32xf32, #tpu.memory_space<vmem>>, %arg13: memref<1x1x32xf32, #tpu.memory_space<vmem>>, %arg14: memref<1x1x32xf32, #tpu.memory_space<vmem>>, %arg15: memref<1x1x32xf32, #tpu.memory_space<vmem>>, %arg16: memref<1x32x64xf32, #tpu.memory_space<vmem>>, %arg17: memref<1x1x64xf32, #tpu.memory_space<vmem>>, %arg18: memref<1x64x32xf32, #tpu.memory_space<vmem>>, %arg19: memref<1x1x32xf32, #tpu.memory_space<vmem>>, %arg20: memref<1x1x32xf32, #tpu.memory_space<vmem>>, %arg21: memref<1x1x32xf32, #tpu.memory_space<vmem>>, %arg22: memref<1x1x32xf32, #tpu.memory_space<vmem>>, %arg23: memref<8x32xf32, #tpu.memory_space<vmem>>) attributes {dimension_semantics = [#tpu.dimension_semantics<parallel>, #tpu.dimension_semantics<arbitrary>], iteration_bounds = array<i64: 2, 2>, scalar_prefetch = 0 : i64, scratch_operands = 1 : i64, tpu.core_type = #tpu.core_type<tc>, window_params = [{transform_indices = @transform_0, window_bounds = array<i64: 1, 8, 32>}, {transform_indices = @transform_1, window_bounds = array<i64: 1, 1, 8>}, {pipeline_mode = #tpu.pipeline_mode<synchronous>, transform_indices = @transform_2, window_bounds = array<i64: 8, 32>}, {pipeline_mode = #tpu.pipeline_mode<synchronous>, transform_indices = @transform_3, window_bounds = array<i64: 8, 32>}, {pipeline_mode = #tpu.pipeline_mode<synchronous>, transform_indices = @transform_4, window_bounds = array<i64: 8, 32>}, {pipeline_mode = #tpu.pipeline_mode<synchronous>, transform_indices = @transform_5, window_bounds = array<i64: 1, 32>}, {pipeline_mode = #tpu.pipeline_mode<synchronous>, transform_indices = @transform_6, window_bounds = array<i64: 1, 32>}, {pipeline_mode = #tpu.pipeline_mode<synchronous>, transform_indices = @transform_7, window_bounds = array<i64: 1, 32>}, {transform_indices = @transform_8, window_bounds = array<i64: 1, 32, 96>}, {transform_indices = @transform_9, window_bounds = array<i64: 1, 1, 96>}, {transform_indices = @transform_10, window_bounds = array<i64: 1, 32, 32>}, {transform_indices = @transform_11, window_bounds = array<i64: 1, 1, 32>}, {transform_indices = @transform_12, window_bounds = array<i64: 1, 1, 32>}, {transform_indices = @transform_13, window_bounds = array<i64: 1, 1, 32>}, {transform_indices = @transform_14, window_bounds = array<i64: 1, 32, 64>}, {transform_indices = @transform_15, window_bounds = array<i64: 1, 1, 64>}, {transform_indices = @transform_16, window_bounds = array<i64: 1, 64, 32>}, {transform_indices = @transform_17, window_bounds = array<i64: 1, 1, 32>}, {transform_indices = @transform_18, window_bounds = array<i64: 1, 1, 32>}, {transform_indices = @transform_19, window_bounds = array<i64: 1, 1, 32>}, {transform_indices = @transform_20, window_bounds = array<i64: 1, 1, 32>}]} {
    %c0_i32 = arith.constant 0 : i32
    %0 = arith.cmpi eq, %arg1, %c0_i32 : i32
    %1 = arith.extui %0 : i1 to i32
    %c0_i32_0 = arith.constant 0 : i32
    %2 = arith.cmpi ne, %1, %c0_i32_0 : i32
    scf.if %2 {
      %c0_87 = arith.constant 0 : index
      %c0_88 = arith.constant 0 : index
      %c0_89 = arith.constant 0 : index
      %179 = vector.load %arg2[%c0_87, %c0_88, %c0_89] : memref<1x8x32xf32, #tpu.memory_space<vmem>>, vector<1x8x32xf32>
      %180 = vector.shape_cast %179 : vector<1x8x32xf32> to vector<8x32xf32>
      %c0_90 = arith.constant 0 : index
      %c0_91 = arith.constant 0 : index
      %181 = vector.load %arg7[%c0_90, %c0_91] : memref<1x32xf32, #tpu.memory_space<vmem>>, vector<1x32xf32>
      %182 = vector.broadcast %181 : vector<1x32xf32> to vector<8x32xf32>
      %183 = arith.addf %180, %182 : vector<8x32xf32>
      %c0_92 = arith.constant 0 : index
      %c0_93 = arith.constant 0 : index
      %184 = vector.load %arg8[%c0_92, %c0_93] : memref<1x32xf32, #tpu.memory_space<vmem>>, vector<1x32xf32>
      %c0_94 = arith.constant 0 : index
      %c0_95 = arith.constant 0 : index
      %185 = vector.load %arg9[%c0_94, %c0_95] : memref<1x32xf32, #tpu.memory_space<vmem>>, vector<1x32xf32>
      %cst_96 = arith.constant dense<0.000000e+00> : vector<8xf32>
      %186 = vector.multi_reduction <add>, %183, %cst_96 [1] : vector<8x32xf32> to vector<8xf32>
      %187 = vector.shape_cast %186 : vector<8xf32> to vector<8x1xf32>
      %cst_97 = arith.constant 3.200000e+01 : f32
      %188 = vector.broadcast %cst_97 : f32 to vector<8x1xf32>
      %189 = arith.divf %187, %188 : vector<8x1xf32>
      %190 = vector.broadcast %189 : vector<8x1xf32> to vector<8x32xf32>
      %191 = arith.subf %183, %190 : vector<8x32xf32>
      %192 = arith.mulf %191, %191 : vector<8x32xf32>
      %cst_98 = arith.constant dense<0.000000e+00> : vector<8xf32>
      %193 = vector.multi_reduction <add>, %192, %cst_98 [1] : vector<8x32xf32> to vector<8xf32>
      %194 = vector.shape_cast %193 : vector<8xf32> to vector<8x1xf32>
      %cst_99 = arith.constant 3.200000e+01 : f32
      %195 = vector.broadcast %cst_99 : f32 to vector<8x1xf32>
      %196 = arith.divf %194, %195 : vector<8x1xf32>
      %cst_100 = arith.constant 9.99999996E-13 : f32
      %197 = vector.broadcast %cst_100 : f32 to vector<8x1xf32>
      %198 = arith.addf %196, %197 : vector<8x1xf32>
      %199 = math.rsqrt %198 : vector<8x1xf32>
      %200 = vector.broadcast %199 : vector<8x1xf32> to vector<8x32xf32>
      %201 = arith.mulf %191, %200 : vector<8x32xf32>
      %202 = vector.broadcast %184 : vector<1x32xf32> to vector<8x32xf32>
      %203 = arith.mulf %201, %202 : vector<8x32xf32>
      %204 = vector.broadcast %185 : vector<1x32xf32> to vector<8x32xf32>
      %205 = arith.addf %203, %204 : vector<8x32xf32>
      %c0_101 = arith.constant 0 : index
      %c0_102 = arith.constant 0 : index
      %206 = vector.load %arg23[%c0_101, %c0_102] : memref<8x32xf32, #tpu.memory_space<vmem>>, vector<8x32xf32>
      tpu.vector_store %arg23[%c0_101, %c0_102], %205 {strides = array<i32>} : memref<8x32xf32, #tpu.memory_space<vmem>>, vector<8x32xf32>,
    } else {
    }
    %c0 = arith.constant 0 : index
    %c0_1 = arith.constant 0 : index
    %3 = vector.load %arg23[%c0, %c0_1] : memref<8x32xf32, #tpu.memory_space<vmem>>, vector<8x32xf32>
    %c0_2 = arith.constant 0 : index
    %c0_3 = arith.constant 0 : index
    %4 = vector.load %arg4[%c0_2, %c0_3] : memref<8x32xf32, #tpu.memory_space<vmem>>, vector<8x32xf32>
    %c0_4 = arith.constant 0 : index
    %c0_5 = arith.constant 0 : index
    %5 = vector.load %arg5[%c0_4, %c0_5] : memref<8x32xf32, #tpu.memory_space<vmem>>, vector<8x32xf32>
    %c0_6 = arith.constant 0 : index
    %c0_7 = arith.constant 0 : index
    %6 = vector.load %arg6[%c0_6, %c0_7] : memref<8x32xf32, #tpu.memory_space<vmem>>, vector<8x32xf32>
    %c0_8 = arith.constant 0 : index
    %c0_9 = arith.constant 0 : index
    %c0_10 = arith.constant 0 : index
    %7 = vector.load %arg10[%c0_8, %c0_9, %c0_10] : memref<1x32x96xf32, #tpu.memory_space<vmem>>, vector<1x32x96xf32>
    %8 = vector.shape_cast %7 : vector<1x32x96xf32> to vector<32x96xf32>
    %cst = arith.constant dense<0.000000e+00> : vector<8x96xf32>
    %9 = tpu.matmul %3, %8, %cst {dimension_numbers = #tpu.dot_dimension_numbers<[1], [0], [0], [1], [0, 0, 1, 1], [], []>} : vector<8x32xf32>, vector<32x96xf32>, vector<8x96xf32> -> vector<8x96xf32>
    %c0_11 = arith.constant 0 : index
    %c0_12 = arith.constant 0 : index
    %c0_13 = arith.constant 0 : index
    %10 = vector.load %arg11[%c0_11, %c0_12, %c0_13] : memref<1x1x96xf32, #tpu.memory_space<vmem>>, vector<1x1x96xf32>
    %11 = vector.shape_cast %10 : vector<1x1x96xf32> to vector<1x96xf32>
    %12 = vector.broadcast %11 : vector<1x96xf32> to vector<8x96xf32>
    %13 = arith.addf %9, %12 : vector<8x96xf32>
    %14 = vector.extract_strided_slice %13 {offsets = [0, 0], sizes = [8, 32], strides = [1, 1]} : vector<8x96xf32> to vector<8x32xf32>
    %15 = arith.mulf %14, %4 : vector<8x32xf32>
    %c31_i32 = arith.constant 31 : i32
    %16 = tpu.dynamic_rotate %14 by %c31_i32 dim 1 : vector<8x32xf32>, i32 -> vector<8x32xf32>
    %17 = arith.mulf %16, %5 : vector<8x32xf32>
    %18 = arith.addf %15, %17 : vector<8x32xf32>
    %c1_i32 = arith.constant 1 : i32
    %19 = tpu.dynamic_rotate %14 by %c1_i32 dim 1 : vector<8x32xf32>, i32 -> vector<8x32xf32>
    %20 = arith.mulf %19, %6 : vector<8x32xf32>
    %21 = arith.addf %18, %20 : vector<8x32xf32>
    %22 = vector.extract_strided_slice %13 {offsets = [0, 32], sizes = [8, 32], strides = [1, 1]} : vector<8x96xf32> to vector<8x32xf32>
    %23 = arith.mulf %22, %4 : vector<8x32xf32>
    %c31_i32_14 = arith.constant 31 : i32
    %24 = tpu.dynamic_rotate %22 by %c31_i32_14 dim 1 : vector<8x32xf32>, i32 -> vector<8x32xf32>
    %25 = arith.mulf %24, %5 : vector<8x32xf32>
    %26 = arith.addf %23, %25 : vector<8x32xf32>
    %c1_i32_15 = arith.constant 1 : i32
    %27 = tpu.dynamic_rotate %22 by %c1_i32_15 dim 1 : vector<8x32xf32>, i32 -> vector<8x32xf32>
    %28 = arith.mulf %27, %6 : vector<8x32xf32>
    %29 = arith.addf %26, %28 : vector<8x32xf32>
    %30 = vector.extract_strided_slice %13 {offsets = [0, 64], sizes = [8, 32], strides = [1, 1]} : vector<8x96xf32> to vector<8x32xf32>
    %31 = arith.mulf %30, %4 : vector<8x32xf32>
    %c31_i32_16 = arith.constant 31 : i32
    %32 = tpu.dynamic_rotate %30 by %c31_i32_16 dim 1 : vector<8x32xf32>, i32 -> vector<8x32xf32>
    %33 = arith.mulf %32, %5 : vector<8x32xf32>
    %34 = arith.addf %31, %33 : vector<8x32xf32>
    %c1_i32_17 = arith.constant 1 : i32
    %35 = tpu.dynamic_rotate %30 by %c1_i32_17 dim 1 : vector<8x32xf32>, i32 -> vector<8x32xf32>
    %36 = arith.mulf %35, %6 : vector<8x32xf32>
    %37 = arith.addf %34, %36 : vector<8x32xf32>
    %38 = vector.shape_cast %21 : vector<8x32xf32> to vector<8x4x8xf32>
    %39 = tpu.transpose %38, [1, 0, 2] : vector<8x4x8xf32> -> vector<4x8x8xf32>
    %40 = vector.shape_cast %29 : vector<8x32xf32> to vector<8x4x8xf32>
    %41 = tpu.transpose %40, [1, 0, 2] : vector<8x4x8xf32> -> vector<4x8x8xf32>
    %42 = vector.shape_cast %37 : vector<8x32xf32> to vector<8x4x8xf32>
    %43 = tpu.transpose %42, [1, 0, 2] : vector<8x4x8xf32> -> vector<4x8x8xf32>
    %c0_18 = arith.constant 0 : index
    %c0_19 = arith.constant 0 : index
    %c0_20 = arith.constant 0 : index
    %44 = vector.load %arg3[%c0_18, %c0_19, %c0_20] : memref<1x1x8xf32, #tpu.memory_space<vmem>>, vector<1x1x8xf32>
    %45 = vector.shape_cast %44 : vector<1x1x8xf32> to vector<1x8xf32>
    %46 = vector.shape_cast %45 : vector<1x8xf32> to vector<1x1x8xf32>
    "tpu.trace_start"() <{level = 10 : i32, message = "hqd,hkd->hqk"}> : () -> ()
    %cst_21 = arith.constant dense<0.000000e+00> : vector<4x8x8xf32>
    %47 = tpu.matmul %39, %41, %cst_21 {dimension_numbers = #tpu.dot_dimension_numbers<[2], [2], [1], [1], [0, 0, 0, 1, 1, 1], [0], [0]>} : vector<4x8x8xf32>, vector<4x8x8xf32>, vector<4x8x8xf32> -> vector<4x8x8xf32>
    "tpu.trace_stop"() : () -> ()
    %cst_22 = arith.constant 0.353553385 : f32
    %48 = vector.broadcast %cst_22 : f32 to vector<4x8x8xf32>
    %49 = arith.mulf %47, %48 : vector<4x8x8xf32>
    %50 = vector.broadcast %46 : vector<1x1x8xf32> to vector<4x8x8xf32>
    %51 = arith.addf %49, %50 : vector<4x8x8xf32>
    %cst_23 = arith.constant dense<0xFF800000> : vector<4x8xf32>
    %52 = vector.multi_reduction <maximumf>, %51, %cst_23 [2] : vector<4x8x8xf32> to vector<4x8xf32>
    %53 = vector.shape_cast %52 : vector<4x8xf32> to vector<4x8x1xf32>
    %54 = vector.broadcast %53 : vector<4x8x1xf32> to vector<4x8x8xf32>
    %55 = arith.subf %51, %54 : vector<4x8x8xf32>
    %56 = math.exp %55 : vector<4x8x8xf32>
    %cst_24 = arith.constant dense<0.000000e+00> : vector<4x8xf32>
    %57 = vector.multi_reduction <add>, %56, %cst_24 [2] : vector<4x8x8xf32> to vector<4x8xf32>
    %58 = vector.shape_cast %57 : vector<4x8xf32> to vector<4x8x1xf32>
    %59 = tpu.reciprocal %58 {approx = true} : vector<4x8x1xf32> -> vector<4x8x1xf32>
    %60 = vector.broadcast %59 : vector<4x8x1xf32> to vector<4x8x8xf32>
    %61 = arith.mulf %56, %60 : vector<4x8x8xf32>
    "tpu.trace_start"() <{level = 10 : i32, message = "hqk,hkd->hqd"}> : () -> ()
    %cst_25 = arith.constant dense<0.000000e+00> : vector<4x8x8xf32>
    %62 = tpu.matmul %61, %43, %cst_25 {dimension_numbers = #tpu.dot_dimension_numbers<[2], [1], [1], [2], [0, 0, 0, 1, 1, 2], [0], [0]>} : vector<4x8x8xf32>, vector<4x8x8xf32>, vector<4x8x8xf32> -> vector<4x8x8xf32>
    "tpu.trace_stop"() : () -> ()
    %63 = tpu.transpose %62, [1, 0, 2] : vector<4x8x8xf32> -> vector<8x4x8xf32>
    %64 = vector.shape_cast %63 : vector<8x4x8xf32> to vector<8x32xf32>
    %c0_26 = arith.constant 0 : index
    %c0_27 = arith.constant 0 : index
    %c0_28 = arith.constant 0 : index
    %65 = vector.load %arg12[%c0_26, %c0_27, %c0_28] : memref<1x32x32xf32, #tpu.memory_space<vmem>>, vector<1x32x32xf32>
    %66 = vector.shape_cast %65 : vector<1x32x32xf32> to vector<32x32xf32>
    %cst_29 = arith.constant dense<0.000000e+00> : vector<8x32xf32>
    %67 = tpu.matmul %64, %66, %cst_29 {dimension_numbers = #tpu.dot_dimension_numbers<[1], [0], [0], [1], [0, 0, 1, 1], [], []>} : vector<8x32xf32>, vector<32x32xf32>, vector<8x32xf32> -> vector<8x32xf32>
    %c0_30 = arith.constant 0 : index
    %c0_31 = arith.constant 0 : index
    %c0_32 = arith.constant 0 : index
    %68 = vector.load %arg13[%c0_30, %c0_31, %c0_32] : memref<1x1x32xf32, #tpu.memory_space<vmem>>, vector<1x1x32xf32>
    %69 = vector.shape_cast %68 : vector<1x1x32xf32> to vector<1x32xf32>
    %70 = vector.broadcast %69 : vector<1x32xf32> to vector<8x32xf32>
    %71 = arith.addf %67, %70 : vector<8x32xf32>
    %72 = arith.addf %71, %3 : vector<8x32xf32>
    %c0_33 = arith.constant 0 : index
    %c0_34 = arith.constant 0 : index
    %c0_35 = arith.constant 0 : index
    %73 = vector.load %arg14[%c0_33, %c0_34, %c0_35] : memref<1x1x32xf32, #tpu.memory_space<vmem>>, vector<1x1x32xf32>
    %74 = vector.shape_cast %73 : vector<1x1x32xf32> to vector<1x32xf32>
    %c0_36 = arith.constant 0 : index
    %c0_37 = arith.constant 0 : index
    %c0_38 = arith.constant 0 : index
    %75 = vector.load %arg15[%c0_36, %c0_37, %c0_38] : memref<1x1x32xf32, #tpu.memory_space<vmem>>, vector<1x1x32xf32>
    %76 = vector.shape_cast %75 : vector<1x1x32xf32> to vector<1x32xf32>
    %cst_39 = arith.constant dense<0.000000e+00> : vector<8xf32>
    %77 = vector.multi_reduction <add>, %72, %cst_39 [1] : vector<8x32xf32> to vector<8xf32>
    %78 = vector.shape_cast %77 : vector<8xf32> to vector<8x1xf32>
    %cst_40 = arith.constant 3.200000e+01 : f32
    %79 = vector.broadcast %cst_40 : f32 to vector<8x1xf32>
    %80 = arith.divf %78, %79 : vector<8x1xf32>
    %81 = vector.broadcast %80 : vector<8x1xf32> to vector<8x32xf32>
    %82 = arith.subf %72, %81 : vector<8x32xf32>
    %83 = arith.mulf %82, %82 : vector<8x32xf32>
    %cst_41 = arith.constant dense<0.000000e+00> : vector<8xf32>
    %84 = vector.multi_reduction <add>, %83, %cst_41 [1] : vector<8x32xf32> to vector<8xf32>
    %85 = vector.shape_cast %84 : vector<8xf32> to vector<8x1xf32>
    %cst_42 = arith.constant 3.200000e+01 : f32
    %86 = vector.broadcast %cst_42 : f32 to vector<8x1xf32>
    %87 = arith.divf %85, %86 : vector<8x1xf32>
    %cst_43 = arith.constant 9.99999996E-13 : f32
    %88 = vector.broadcast %cst_43 : f32 to vector<8x1xf32>
    %89 = arith.addf %87, %88 : vector<8x1xf32>
    %90 = math.rsqrt %89 : vector<8x1xf32>
    %91 = vector.broadcast %90 : vector<8x1xf32> to vector<8x32xf32>
    %92 = arith.mulf %82, %91 : vector<8x32xf32>
    %93 = vector.broadcast %74 : vector<1x32xf32> to vector<8x32xf32>
    %94 = arith.mulf %92, %93 : vector<8x32xf32>
    %95 = vector.broadcast %76 : vector<1x32xf32> to vector<8x32xf32>
    %96 = arith.addf %94, %95 : vector<8x32xf32>
    %c0_44 = arith.constant 0 : index
    %c0_45 = arith.constant 0 : index
    %c0_46 = arith.constant 0 : index
    %97 = vector.load %arg16[%c0_44, %c0_45, %c0_46] : memref<1x32x64xf32, #tpu.memory_space<vmem>>, vector<1x32x64xf32>
    %98 = vector.shape_cast %97 : vector<1x32x64xf32> to vector<32x64xf32>
    %cst_47 = arith.constant dense<0.000000e+00> : vector<8x64xf32>
    %99 = tpu.matmul %96, %98, %cst_47 {dimension_numbers = #tpu.dot_dimension_numbers<[1], [0], [0], [1], [0, 0, 1, 1], [], []>} : vector<8x32xf32>, vector<32x64xf32>, vector<8x64xf32> -> vector<8x64xf32>
    %c0_48 = arith.constant 0 : index
    %c0_49 = arith.constant 0 : index
    %c0_50 = arith.constant 0 : index
    %100 = vector.load %arg17[%c0_48, %c0_49, %c0_50] : memref<1x1x64xf32, #tpu.memory_space<vmem>>, vector<1x1x64xf32>
    %101 = vector.shape_cast %100 : vector<1x1x64xf32> to vector<1x64xf32>
    %102 = vector.broadcast %101 : vector<1x64xf32> to vector<8x64xf32>
    %103 = arith.addf %99, %102 : vector<8x64xf32>
    %cst_51 = arith.constant 5.000000e-01 : f32
    %104 = vector.broadcast %cst_51 : f32 to vector<8x64xf32>
    %105 = arith.mulf %104, %103 : vector<8x64xf32>
    %cst_52 = arith.constant 0.707106769 : f32
    %106 = vector.broadcast %cst_52 : f32 to vector<8x64xf32>
    %107 = arith.mulf %103, %106 : vector<8x64xf32>
    %108 = math.absf %107 : vector<8x64xf32>
    %cst_53 = arith.constant 0.327591091 : f32
    %109 = vector.broadcast %cst_53 : f32 to vector<8x64xf32>
    %110 = arith.mulf %109, %108 : vector<8x64xf32>
    %cst_54 = arith.constant 1.000000e+00 : f32
    %111 = vector.broadcast %cst_54 : f32 to vector<8x64xf32>
    %112 = arith.addf %111, %110 : vector<8x64xf32>
    %113 = tpu.reciprocal %112 {approx = true} : vector<8x64xf32> -> vector<8x64xf32>
    %cst_55 = arith.constant 1.06140542 : f32
    %114 = vector.broadcast %cst_55 : f32 to vector<8x64xf32>
    %115 = arith.mulf %114, %113 : vector<8x64xf32>
    %cst_56 = arith.constant -1.45315206 : f32
    %116 = vector.broadcast %cst_56 : f32 to vector<8x64xf32>
    %117 = arith.addf %115, %116 : vector<8x64xf32>
    %118 = arith.mulf %117, %113 : vector<8x64xf32>
    %cst_57 = arith.constant 1.42141378 : f32
    %119 = vector.broadcast %cst_57 : f32 to vector<8x64xf32>
    %120 = arith.addf %118, %119 : vector<8x64xf32>
    %121 = arith.mulf %120, %113 : vector<8x64xf32>
    %cst_58 = arith.constant -0.284496725 : f32
    %122 = vector.broadcast %cst_58 : f32 to vector<8x64xf32>
    %123 = arith.addf %121, %122 : vector<8x64xf32>
    %124 = arith.mulf %123, %113 : vector<8x64xf32>
    %cst_59 = arith.constant 0.254829586 : f32
    %125 = vector.broadcast %cst_59 : f32 to vector<8x64xf32>
    %126 = arith.addf %124, %125 : vector<8x64xf32>
    %127 = arith.mulf %126, %113 : vector<8x64xf32>
    %cst_60 = arith.constant 0.000000e+00 : f32
    %128 = vector.broadcast %cst_60 : f32 to vector<8x64xf32>
    %129 = arith.subf %128, %108 : vector<8x64xf32>
    %130 = arith.mulf %129, %108 : vector<8x64xf32>
    %131 = math.exp %130 : vector<8x64xf32>
    %132 = arith.mulf %127, %131 : vector<8x64xf32>
    %cst_61 = arith.constant 1.000000e+00 : f32
    %133 = vector.broadcast %cst_61 : f32 to vector<8x64xf32>
    %134 = arith.subf %133, %132 : vector<8x64xf32>
    %cst_62 = arith.constant 0.000000e+00 : f32
    %135 = vector.broadcast %cst_62 : f32 to vector<8x64xf32>
    %136 = arith.cmpf oge, %107, %135 : vector<8x64xf32>
    %cst_63 = arith.constant 0.000000e+00 : f32
    %137 = vector.broadcast %cst_63 : f32 to vector<8x64xf32>
    %138 = arith.subf %137, %134 : vector<8x64xf32>
    %139 = arith.select %136, %134, %138 : vector<8x64xi1>, vector<8x64xf32>
    %cst_64 = arith.constant 1.000000e+00 : f32
    %140 = vector.broadcast %cst_64 : f32 to vector<8x64xf32>
    %141 = arith.addf %140, %139 : vector<8x64xf32>
    %142 = arith.mulf %105, %141 : vector<8x64xf32>
    %c0_65 = arith.constant 0 : index
    %c0_66 = arith.constant 0 : index
    %c0_67 = arith.constant 0 : index
    %143 = vector.load %arg18[%c0_65, %c0_66, %c0_67] : memref<1x64x32xf32, #tpu.memory_space<vmem>>, vector<1x64x32xf32>
    %144 = vector.shape_cast %143 : vector<1x64x32xf32> to vector<64x32xf32>
    %cst_68 = arith.constant dense<0.000000e+00> : vector<8x32xf32>
    %145 = tpu.matmul %142, %144, %cst_68 {dimension_numbers = #tpu.dot_dimension_numbers<[1], [0], [0], [1], [0, 0, 1, 1], [], []>} : vector<8x64xf32>, vector<64x32xf32>, vector<8x32xf32> -> vector<8x32xf32>
    %c0_69 = arith.constant 0 : index
    %c0_70 = arith.constant 0 : index
    %c0_71 = arith.constant 0 : index
    %146 = vector.load %arg19[%c0_69, %c0_70, %c0_71] : memref<1x1x32xf32, #tpu.memory_space<vmem>>, vector<1x1x32xf32>
    %147 = vector.shape_cast %146 : vector<1x1x32xf32> to vector<1x32xf32>
    %148 = vector.broadcast %147 : vector<1x32xf32> to vector<8x32xf32>
    %149 = arith.addf %145, %148 : vector<8x32xf32>
    %150 = arith.addf %149, %96 : vector<8x32xf32>
    %c0_72 = arith.constant 0 : index
    %c0_73 = arith.constant 0 : index
    %c0_74 = arith.constant 0 : index
    %151 = vector.load %arg20[%c0_72, %c0_73, %c0_74] : memref<1x1x32xf32, #tpu.memory_space<vmem>>, vector<1x1x32xf32>
    %152 = vector.shape_cast %151 : vector<1x1x32xf32> to vector<1x32xf32>
    %c0_75 = arith.constant 0 : index
    %c0_76 = arith.constant 0 : index
    %c0_77 = arith.constant 0 : index
    %153 = vector.load %arg21[%c0_75, %c0_76, %c0_77] : memref<1x1x32xf32, #tpu.memory_space<vmem>>, vector<1x1x32xf32>
    %154 = vector.shape_cast %153 : vector<1x1x32xf32> to vector<1x32xf32>
    %cst_78 = arith.constant dense<0.000000e+00> : vector<8xf32>
    %155 = vector.multi_reduction <add>, %150, %cst_78 [1] : vector<8x32xf32> to vector<8xf32>
    %156 = vector.shape_cast %155 : vector<8xf32> to vector<8x1xf32>
    %cst_79 = arith.constant 3.200000e+01 : f32
    %157 = vector.broadcast %cst_79 : f32 to vector<8x1xf32>
    %158 = arith.divf %156, %157 : vector<8x1xf32>
    %159 = vector.broadcast %158 : vector<8x1xf32> to vector<8x32xf32>
    %160 = arith.subf %150, %159 : vector<8x32xf32>
    %161 = arith.mulf %160, %160 : vector<8x32xf32>
    %cst_80 = arith.constant dense<0.000000e+00> : vector<8xf32>
    %162 = vector.multi_reduction <add>, %161, %cst_80 [1] : vector<8x32xf32> to vector<8xf32>
    %163 = vector.shape_cast %162 : vector<8xf32> to vector<8x1xf32>
    %cst_81 = arith.constant 3.200000e+01 : f32
    %164 = vector.broadcast %cst_81 : f32 to vector<8x1xf32>
    %165 = arith.divf %163, %164 : vector<8x1xf32>
    %cst_82 = arith.constant 9.99999996E-13 : f32
    %166 = vector.broadcast %cst_82 : f32 to vector<8x1xf32>
    %167 = arith.addf %165, %166 : vector<8x1xf32>
    %168 = math.rsqrt %167 : vector<8x1xf32>
    %169 = vector.broadcast %168 : vector<8x1xf32> to vector<8x32xf32>
    %170 = arith.mulf %160, %169 : vector<8x32xf32>
    %171 = vector.broadcast %152 : vector<1x32xf32> to vector<8x32xf32>
    %172 = arith.mulf %170, %171 : vector<8x32xf32>
    %173 = vector.broadcast %154 : vector<1x32xf32> to vector<8x32xf32>
    %174 = arith.addf %172, %173 : vector<8x32xf32>
    %c0_83 = arith.constant 0 : index
    %c0_84 = arith.constant 0 : index
    %175 = vector.load %arg23[%c0_83, %c0_84] : memref<8x32xf32, #tpu.memory_space<vmem>>, vector<8x32xf32>
    tpu.vector_store %arg23[%c0_83, %c0_84], %174 {strides = array<i32>} : memref<8x32xf32, #tpu.memory_space<vmem>>, vector<8x32xf32>,
    %c1_i32_85 = arith.constant 1 : i32
    %176 = arith.cmpi eq, %arg1, %c1_i32_85 : i32
    %177 = arith.extui %176 : i1 to i32
    %c0_i32_86 = arith.constant 0 : i32
    %178 = arith.cmpi ne, %177, %c0_i32_86 : i32
    scf.if %178 {
      %179 = vector.extract_strided_slice %174 {offsets = [0, 0], sizes = [1, 32], strides = [1, 1]} : vector<8x32xf32> to vector<1x32xf32>
      %c0_87 = arith.constant 0 : index
      %c0_88 = arith.constant 0 : index
      %c0_89 = arith.constant 0 : index
      %180 = vector.load %arg22[%c0_87, %c0_88, %c0_89] : memref<1x1x32xf32, #tpu.memory_space<vmem>>, vector<1x1x32xf32>
      %181 = vector.shape_cast %180 : vector<1x1x32xf32> to vector<1x32xf32>
      %182 = vector.shape_cast %179 : vector<1x32xf32> to vector<1x1x32xf32>
      tpu.vector_store %arg22[%c0_87, %c0_88, %c0_89], %182 {strides = array<i32>} : memref<1x1x32xf32, #tpu.memory_space<vmem>>, vector<1x1x32xf32>,
    } else {
    }
    return
  }
  func.func @transform_0(%arg0: i32, %arg1: i32) -> (i32, i32, i32) {
    %c0_i32 = arith.constant 0 : i32
    %c0_i32_0 = arith.constant 0 : i32
    %c0_i32_1 = arith.constant 0 : i32
    return %arg0, %c0_i32, %c0_i32_0 : i32, i32, i32
  }
  func.func @transform_1(%arg0: i32, %arg1: i32) -> (i32, i32, i32) {
    %c0_i32 = arith.constant 0 : i32
    %c0_i32_0 = arith.constant 0 : i32
    %c0_i32_1 = arith.constant 0 : i32
    return %arg0, %c0_i32, %c0_i32_0 : i32, i32, i32
  }
  func.func @transform_2(%arg0: i32, %arg1: i32) -> (i32, i32) {
    %c0_i32 = arith.constant 0 : i32
    %c0_i32_0 = arith.constant 0 : i32
    %c0_i32_1 = arith.constant 0 : i32
    return %c0_i32, %c0_i32_0 : i32, i32
  }
  func.func @transform_3(%arg0: i32, %arg1: i32) -> (i32, i32) {
    %c0_i32 = arith.constant 0 : i32
    %c0_i32_0 = arith.constant 0 : i32
    %c0_i32_1 = arith.constant 0 : i32
    return %c0_i32, %c0_i32_0 : i32, i32
  }
  func.func @transform_4(%arg0: i32, %arg1: i32) -> (i32, i32) {
    %c0_i32 = arith.constant 0 : i32
    %c0_i32_0 = arith.constant 0 : i32
    %c0_i32_1 = arith.constant 0 : i32
    return %c0_i32, %c0_i32_0 : i32, i32
  }
  func.func @transform_5(%arg0: i32, %arg1: i32) -> (i32, i32) {
    %c0_i32 = arith.constant 0 : i32
    %c0_i32_0 = arith.constant 0 : i32
    %c0_i32_1 = arith.constant 0 : i32
    return %c0_i32, %c0_i32_0 : i32, i32
  }
  func.func @transform_6(%arg0: i32, %arg1: i32) -> (i32, i32) {
    %c0_i32 = arith.constant 0 : i32
    %c0_i32_0 = arith.constant 0 : i32
    %c0_i32_1 = arith.constant 0 : i32
    return %c0_i32, %c0_i32_0 : i32, i32
  }
  func.func @transform_7(%arg0: i32, %arg1: i32) -> (i32, i32) {
    %c0_i32 = arith.constant 0 : i32
    %c0_i32_0 = arith.constant 0 : i32
    %c0_i32_1 = arith.constant 0 : i32
    return %c0_i32, %c0_i32_0 : i32, i32
  }
  func.func @transform_8(%arg0: i32, %arg1: i32) -> (i32, i32, i32) {
    %c0_i32 = arith.constant 0 : i32
    %c0_i32_0 = arith.constant 0 : i32
    %c0_i32_1 = arith.constant 0 : i32
    return %arg1, %c0_i32, %c0_i32_0 : i32, i32, i32
  }
  func.func @transform_9(%arg0: i32, %arg1: i32) -> (i32, i32, i32) {
    %c0_i32 = arith.constant 0 : i32
    %c0_i32_0 = arith.constant 0 : i32
    %c0_i32_1 = arith.constant 0 : i32
    return %arg1, %c0_i32, %c0_i32_0 : i32, i32, i32
  }
  func.func @transform_10(%arg0: i32, %arg1: i32) -> (i32, i32, i32) {
    %c0_i32 = arith.constant 0 : i32
    %c0_i32_0 = arith.constant 0 : i32
    %c0_i32_1 = arith.constant 0 : i32
    return %arg1, %c0_i32, %c0_i32_0 : i32, i32, i32
  }
  func.func @transform_11(%arg0: i32, %arg1: i32) -> (i32, i32, i32) {
    %c0_i32 = arith.constant 0 : i32
    %c0_i32_0 = arith.constant 0 : i32
    %c0_i32_1 = arith.constant 0 : i32
    return %arg1, %c0_i32, %c0_i32_0 : i32, i32, i32
  }
  func.func @transform_12(%arg0: i32, %arg1: i32) -> (i32, i32, i32) {
    %c0_i32 = arith.constant 0 : i32
    %c0_i32_0 = arith.constant 0 : i32
    %c0_i32_1 = arith.constant 0 : i32
    return %arg1, %c0_i32, %c0_i32_0 : i32, i32, i32
  }
  func.func @transform_13(%arg0: i32, %arg1: i32) -> (i32, i32, i32) {
    %c0_i32 = arith.constant 0 : i32
    %c0_i32_0 = arith.constant 0 : i32
    %c0_i32_1 = arith.constant 0 : i32
    return %arg1, %c0_i32, %c0_i32_0 : i32, i32, i32
  }
  func.func @transform_14(%arg0: i32, %arg1: i32) -> (i32, i32, i32) {
    %c0_i32 = arith.constant 0 : i32
    %c0_i32_0 = arith.constant 0 : i32
    %c0_i32_1 = arith.constant 0 : i32
    return %arg1, %c0_i32, %c0_i32_0 : i32, i32, i32
  }
  func.func @transform_15(%arg0: i32, %arg1: i32) -> (i32, i32, i32) {
    %c0_i32 = arith.constant 0 : i32
    %c0_i32_0 = arith.constant 0 : i32
    %c0_i32_1 = arith.constant 0 : i32
    return %arg1, %c0_i32, %c0_i32_0 : i32, i32, i32
  }
  func.func @transform_16(%arg0: i32, %arg1: i32) -> (i32, i32, i32) {
    %c0_i32 = arith.constant 0 : i32
    %c0_i32_0 = arith.constant 0 : i32
    %c0_i32_1 = arith.constant 0 : i32
    return %arg1, %c0_i32, %c0_i32_0 : i32, i32, i32
  }
  func.func @transform_17(%arg0: i32, %arg1: i32) -> (i32, i32, i32) {
    %c0_i32 = arith.constant 0 : i32
    %c0_i32_0 = arith.constant 0 : i32
    %c0_i32_1 = arith.constant 0 : i32
    return %arg1, %c0_i32, %c0_i32_0 : i32, i32, i32
  }
  func.func @transform_18(%arg0: i32, %arg1: i32) -> (i32, i32, i32) {
    %c0_i32 = arith.constant 0 : i32
    %c0_i32_0 = arith.constant 0 : i32
    %c0_i32_1 = arith.constant 0 : i32
    return %arg1, %c0_i32, %c0_i32_0 : i32, i32, i32
  }
  func.func @transform_19(%arg0: i32, %arg1: i32) -> (i32, i32, i32) {
    %c0_i32 = arith.constant 0 : i32
    %c0_i32_0 = arith.constant 0 : i32
    %c0_i32_1 = arith.constant 0 : i32
    return %arg1, %c0_i32, %c0_i32_0 : i32, i32, i32
  }
  func.func @transform_20(%arg0: i32, %arg1: i32) -> (i32, i32, i32) {
    %c0_i32 = arith.constant 0 : i32
    %c0_i32_0 = arith.constant 0 : i32
    %c0_i32_1 = arith.constant 0 : i32
    return %arg0, %c0_i32, %c0_i32_0 : i32, i32, i32
  }
}

</mosaic_0001>

<llo_original>
// kernel: tpu_custom_call.1
$region0: #{tpu_custom_call.1}
  #allocation0 [shape = 'u32[]', space=smem, size = 0x4, offset = 0x4, fixed_abs, tag = 'smem constant byte address 0x4 - core index']
  #allocation1 [shape = 'u32[144,128]{1,0:T(1,128)}', space=vmem, size = 0x12000, scoped, tag = 'internal scratch']
  #allocation2 [shape = 'f32[8,32]{1,0:T(8,128)}', space=vmem, size = 0x1000, scoped, tag = 'scratch operand']
  %s0 = inlined_call_operand.hbm [shape: f32[2,8,32], index: 0, kind: input, shape index: {}]
  %s1 = inlined_call_operand.hbm [shape: f32[2,1,8], index: 1, kind: input, shape index: {}]
  %s2 = inlined_call_operand.hbm [shape: f32[8,32], index: 2, kind: input, shape index: {}]
  %s3 = inlined_call_operand.hbm [shape: f32[8,32], index: 3, kind: input, shape index: {}]
  %s4 = inlined_call_operand.hbm [shape: f32[8,32], index: 4, kind: input, shape index: {}]
  %s5 = inlined_call_operand.hbm [shape: f32[1,32], index: 5, kind: input, shape index: {}]
  %s6 = inlined_call_operand.hbm [shape: f32[1,32], index: 6, kind: input, shape index: {}]
  %s7 = inlined_call_operand.hbm [shape: f32[1,32], index: 7, kind: input, shape index: {}]
  %s8 = inlined_call_operand.vmem [shape: f32[2,32,96], index: 8, kind: input, shape index: {}]
  %s9 = inlined_call_operand.vmem [shape: f32[2,1,96], index: 9, kind: input, shape index: {}]
  %s10 = inlined_call_operand.vmem [shape: f32[2,32,32], index: 10, kind: input, shape index: {}]
  %s11 = inlined_call_operand.vmem [shape: f32[2,1,32], index: 11, kind: input, shape index: {}]
  %s12 = inlined_call_operand.vmem [shape: f32[2,1,32], index: 12, kind: input, shape index: {}]
  %s13 = inlined_call_operand.vmem [shape: f32[2,1,32], index: 13, kind: input, shape index: {}]
  %s14 = inlined_call_operand.vmem [shape: f32[2,32,64], index: 14, kind: input, shape index: {}]
  %s15 = inlined_call_operand.vmem [shape: f32[2,1,64], index: 15, kind: input, shape index: {}]
  %s16 = inlined_call_operand.vmem [shape: f32[2,64,32], index: 16, kind: input, shape index: {}]
  %s17 = inlined_call_operand.vmem [shape: f32[2,1,32], index: 17, kind: input, shape index: {}]
  %s18 = inlined_call_operand.vmem [shape: f32[2,1,32], index: 18, kind: input, shape index: {}]
  %s19 = inlined_call_operand.vmem [shape: f32[2,1,32], index: 19, kind: input, shape index: {}]
  %s20 = inlined_call_operand.hbm [shape: f32[2,1,32], index: 20, kind: output, shape index: {}]
  %s21 = sld [smem:[#allocation0]]
  $region153: #{tpu_custom_call.1} parent=0
    _
  %s23 = ssub.s32 1, %s21
  %s24 = scalar_select 0, %s23, %s21
  $region1: #{tpu_custom_call.1} parent=0
    #allocation3 [shape = 'u8[8192]{0}', space=vmem, size = 0x2000, scoped, tag = 'input window, operand 0']
    #allocation4 [shape = 's32[2]{0}', space=sflag, size = 0x8, scoped, tag = 'scoped memory for tpu_custom_call.1']
    #allocation5 [shape = 's32[2]{0}', space=sflag, size = 0x8, scoped, tag = 'scoped memory for tpu_custom_call.1']
    #allocation6 [shape = 'u8[1024]{0}', space=vmem, size = 0x400, scoped, tag = 'input window, operand 1']
    #allocation7 [shape = 's32[2]{0}', space=sflag, size = 0x8, scoped, tag = 'scoped memory for tpu_custom_call.1']
    #allocation8 [shape = 'u8[4096]{0}', space=vmem, size = 0x1000, scoped, tag = 'input window, operand 2, single buffered']
    #allocation9 [shape = 'u8[4096]{0}', space=vmem, size = 0x1000, scoped, tag = 'input window, operand 3, single buffered']
    #allocation10 [shape = 's32[1]{0}', space=sflag, size = 0x4, scoped, tag = 'scoped memory for tpu_custom_call.1']
    #allocation11 [shape = 'u8[4096]{0}', space=vmem, size = 0x1000, scoped, tag = 'input window, operand 4, single buffered']
    #allocation12 [shape = 'u8[512]{0}', space=vmem, size = 0x400, scoped, tag = 'input window, operand 5, single buffered']
    #allocation13 [shape = 's32[1]{0}', space=sflag, size = 0x4, scoped, tag = 'scoped memory for tpu_custom_call.1']
    #allocation14 [shape = 'u8[512]{0}', space=vmem, size = 0x400, scoped, tag = 'input window, operand 6, single buffered']
    #allocation15 [shape = 'u8[512]{0}', space=vmem, size = 0x400, scoped, tag = 'input window, operand 7, single buffered']
    #allocation16 [shape = 's32[1]{0}', space=sflag, size = 0x4, scoped, tag = 'scoped memory for tpu_custom_call.1']
    #allocation17 [shape = 'u8[1024]{0}', space=vmem, size = 0x400, scoped, tag = 'output window, operand 0']
    %25 = vsyncpa [#allocation4], 0
    %s26 = scalar_lea.sflag [#allocation4], 1
    %27 = vsyncpa %s26, 0
    %28 = vsyncpa [#allocation7], 0
    %s29 = scalar_lea.sflag [#allocation7], 1
    %30 = vsyncpa %s29, 0
    %31 = vsyncpa [#allocation10], 0
    %32 = vsyncpa [#allocation13], 0
    %33 = vsyncpa [#allocation16], 0
    %34 = vsyncpa [#allocation5], 0
    %s35 = scalar_lea.sflag [#allocation5], 1
    %36 = vsyncpa %s35, 0
    loop: start=0, step=1, limit=6
    $region2: #{tpu_custom_call.1} parent=1 // loop_pre_header
      _
    $region3: #{tpu_custom_call.1} parent=1 // loop_header
      %s38 = sphi 0, %s42
      %p39 = scmp.ge.s32.totalorder %s38, 6
      %s45 = sphi 0, %s57
      %s46 = sphi 0, %s53
      %s47 = sphi 0, %s45
      %s48 = sphi 0, %s46
      %s49 = sphi 0, %s47
      %s50 = sphi 0, %s48
      %s60 = sphi 0, %s62
      %s63 = sphi 0, %s60
      %s64 = sphi 0, %s63
      %s80 = sphi 0, %s64
      %s86 = sphi 0, %s88
      %s89 = sphi 0, %s86
      %s90 = sphi 0, %s89
      %s106 = sphi 0, %s90
      %s110 = sphi 0, %s110
      %s112 = sphi 0, %s110
      %s113 = sphi 0, %s112
      %s127 = sphi 0, %s113
      %s131 = sphi 0, %s131
      %s133 = sphi 0, %s131
      %s134 = sphi 0, %s133
      %s148 = sphi 0, %s134
      %s152 = sphi 0, %s152
      %s154 = sphi 0, %s152
      %s155 = sphi 0, %s154
      %s169 = sphi 0, %s155
      %s173 = sphi 0, %s173
      %s175 = sphi 0, %s173
      %s176 = sphi 0, %s175
      %s190 = sphi 0, %s176
      %s194 = sphi 0, %s194
      %s196 = sphi 0, %s194
      %s197 = sphi 0, %s196
      %s211 = sphi 0, %s197
      %s215 = sphi 0, %s215
      %s217 = sphi 0, %s215
      %s218 = sphi 0, %s217
      %s232 = sphi 0, %s218
      %s238 = sphi 0, %s240
      %s241 = sphi 0, %s238
      %s242 = sphi 0, %s241
      %s258 = sphi 0, %s242
      %s264 = sphi 0, %s266
      %s267 = sphi 0, %s264
      %s268 = sphi 0, %s267
      %s284 = sphi 0, %s268
      %s290 = sphi 0, %s292
      %s293 = sphi 0, %s290
      %s294 = sphi 0, %s293
      %s310 = sphi 0, %s294
      %s316 = sphi 0, %s318
      %s319 = sphi 0, %s316
      %s320 = sphi 0, %s319
      %s336 = sphi 0, %s320
      %s342 = sphi 0, %s344
      %s345 = sphi 0, %s342
      %s346 = sphi 0, %s345
      %s362 = sphi 0, %s346
      %s368 = sphi 0, %s370
      %s371 = sphi 0, %s368
      %s372 = sphi 0, %s371
      %s388 = sphi 0, %s372
      %s394 = sphi 0, %s396
      %s397 = sphi 0, %s394
      %s398 = sphi 0, %s397
      %s414 = sphi 0, %s398
      %s420 = sphi 0, %s422
      %s423 = sphi 0, %s420
      %s424 = sphi 0, %s423
      %s440 = sphi 0, %s424
      %s446 = sphi 0, %s448
      %s449 = sphi 0, %s446
      %s450 = sphi 0, %s449
      %s466 = sphi 0, %s450
      %s472 = sphi 0, %s474
      %s475 = sphi 0, %s472
      %s476 = sphi 0, %s475
      %s492 = sphi 0, %s476
      %s498 = sphi 0, %s500
      %s501 = sphi 0, %s498
      %s502 = sphi 0, %s501
      %s518 = sphi 0, %s502
      %s524 = sphi 0, %s526
      %s527 = sphi 0, %s524
      %s528 = sphi 0, %s527
      %s544 = sphi 0, %s528
      %s550 = sphi 0, %s552
      %s553 = sphi 0, %s550
      %s554 = sphi 0, %s553
      %s570 = sphi 0, %s554
    $region4: #{tpu_custom_call.1} parent=1 // loop_header_branch
      %41 = sbr.rel (%p39) target = $region8
    $region5: #{tpu_custom_call.1} parent=1 // loop_body
      %s43 = ssub.s32 %s38, 1
      %s44 = ssub.s32 %s38, 2
      %s51 = sadd.s32 1, %s46
      %p52 = scmp.ge.s32.totalorder %s51, 2
      %s53 = scalar_select %p52, 0, %s51
      %s54 = sadd.s32 1, %s45
      %s55 = scalar_select %p52, %s54, %s45
      %p56 = scmp.ge.s32.totalorder %s55, 2
      %s57 = scalar_select %p56, 0, %s55
      %s58 = ssub.s32 %s45, %s57
      %p59 = scmp.eq.s32.totalorder %s58, 0
      %s61 = sadd.s32 %s60, 1
      %s62 = scalar_select %p59, %s60, %s61
      %p65 = pneg %p59
      %p66 = scmp.eq.s32.totalorder %s38, 3
      %p67 = por %p65, %p66
      %p68 = scmp.ne.s32.totalorder %s60, %s63
      %p69 = scmp.eq.s32.totalorder %s38, 0
      %p70 = por %p68, %p69
      %p71 = scmp.ne.s32.totalorder %s60, %s63
      %p72 = scmp.eq.s32.totalorder %s43, 3
      %p73 = por %p71, %p72
      %p74 = scmp.ne.s32.totalorder %s63, %s64
      %p75 = scmp.eq.s32.totalorder %s43, 0
      %p76 = por %p74, %p75
      %p77 = scmp.ne.s32.totalorder %s63, %s64
      %p78 = scmp.eq.s32.totalorder %s44, 3
      %p79 = por %p77, %p78
      %p81 = scmp.ne.s32.totalorder %s64, %s80
      %p82 = scmp.eq.s32.totalorder %s44, 0
      %p83 = por %p81, %p82
      %s84 = ssub.s32 %s45, %s57
      %p85 = scmp.eq.s32.totalorder %s84, 0
      %s87 = sadd.s32 %s86, 1
      %s88 = scalar_select %p85, %s86, %s87
      %p91 = pneg %p85
      %p92 = scmp.eq.s32.totalorder %s38, 3
      %p93 = por %p91, %p92
      %p94 = scmp.ne.s32.totalorder %s86, %s89
      %p95 = scmp.eq.s32.totalorder %s38, 0
      %p96 = por %p94, %p95
      %p97 = scmp.ne.s32.totalorder %s86, %s89
      %p98 = scmp.eq.s32.totalorder %s43, 3
      %p99 = por %p97, %p98
      %p100 = scmp.ne.s32.totalorder %s89, %s90
      %p101 = scmp.eq.s32.totalorder %s43, 0
      %p102 = por %p100, %p101
      %p103 = scmp.ne.s32.totalorder %s89, %s90
      %p104 = scmp.eq.s32.totalorder %s44, 3
      %p105 = por %p103, %p104
      %p107 = scmp.ne.s32.totalorder %s90, %s106
      %p108 = scmp.eq.s32.totalorder %s44, 0
      %p109 = por %p107, %p108
      %s111 = sadd.s32 %s110, 1
      %p114 = scmp.eq.s32.totalorder %s38, 3
      %p115 = scmp.ne.s32.totalorder %s110, %s112
      %p116 = scmp.eq.s32.totalorder %s38, 0
      %p117 = por %p115, %p116
      %p118 = scmp.ne.s32.totalorder %s110, %s112
      %p119 = scmp.eq.s32.totalorder %s43, 3
      %p120 = por %p118, %p119
      %p121 = scmp.ne.s32.totalorder %s112, %s113
      %p122 = scmp.eq.s32.totalorder %s43, 0
      %p123 = por %p121, %p122
      %p124 = scmp.ne.s32.totalorder %s112, %s113
      %p125 = scmp.eq.s32.totalorder %s44, 3
      %p126 = por %p124, %p125
      %p128 = scmp.ne.s32.totalorder %s113, %s127
      %p129 = scmp.eq.s32.totalorder %s44, 0
      %p130 = por %p128, %p129
      %s132 = sadd.s32 %s131, 1
      %p135 = scmp.eq.s32.totalorder %s38, 3
      %p136 = scmp.ne.s32.totalorder %s131, %s133
      %p137 = scmp.eq.s32.totalorder %s38, 0
      %p138 = por %p136, %p137
      %p139 = scmp.ne.s32.totalorder %s131, %s133
      %p140 = scmp.eq.s32.totalorder %s43, 3
      %p141 = por %p139, %p140
      %p142 = scmp.ne.s32.totalorder %s133, %s134
      %p143 = scmp.eq.s32.totalorder %s43, 0
      %p144 = por %p142, %p143
      %p145 = scmp.ne.s32.totalorder %s133, %s134
      %p146 = scmp.eq.s32.totalorder %s44, 3
      %p147 = por %p145, %p146
      %p149 = scmp.ne.s32.totalorder %s134, %s148
      %p150 = scmp.eq.s32.totalorder %s44, 0
      %p151 = por %p149, %p150
      %s153 = sadd.s32 %s152, 1
      %p156 = scmp.eq.s32.totalorder %s38, 3
      %p157 = scmp.ne.s32.totalorder %s152, %s154
      %p158 = scmp.eq.s32.totalorder %s38, 0
      %p159 = por %p157, %p158
      %p160 = scmp.ne.s32.totalorder %s152, %s154
      %p161 = scmp.eq.s32.totalorder %s43, 3
      %p162 = por %p160, %p161
      %p163 = scmp.ne.s32.totalorder %s154, %s155
      %p164 = scmp.eq.s32.totalorder %s43, 0
      %p165 = por %p163, %p164
      %p166 = scmp.ne.s32.totalorder %s154, %s155
      %p167 = scmp.eq.s32.totalorder %s44, 3
      %p168 = por %p166, %p167
      %p170 = scmp.ne.s32.totalorder %s155, %s169
      %p171 = scmp.eq.s32.totalorder %s44, 0
      %p172 = por %p170, %p171
      %s174 = sadd.s32 %s173, 1
      %p177 = scmp.eq.s32.totalorder %s38, 3
      %p178 = scmp.ne.s32.totalorder %s173, %s175
      %p179 = scmp.eq.s32.totalorder %s38, 0
      %p180 = por %p178, %p179
      %p181 = scmp.ne.s32.totalorder %s173, %s175
      %p182 = scmp.eq.s32.totalorder %s43, 3
      %p183 = por %p181, %p182
      %p184 = scmp.ne.s32.totalorder %s175, %s176
      %p185 = scmp.eq.s32.totalorder %s43, 0
      %p186 = por %p184, %p185
      %p187 = scmp.ne.s32.totalorder %s175, %s176
      %p188 = scmp.eq.s32.totalorder %s44, 3
      %p189 = por %p187, %p188
      %p191 = scmp.ne.s32.totalorder %s176, %s190
      %p192 = scmp.eq.s32.totalorder %s44, 0
      %p193 = por %p191, %p192
      %s195 = sadd.s32 %s194, 1
      %p198 = scmp.eq.s32.totalorder %s38, 3
      %p199 = scmp.ne.s32.totalorder %s194, %s196
      %p200 = scmp.eq.s32.totalorder %s38, 0
      %p201 = por %p199, %p200
      %p202 = scmp.ne.s32.totalorder %s194, %s196
      %p203 = scmp.eq.s32.totalorder %s43, 3
      %p204 = por %p202, %p203
      %p205 = scmp.ne.s32.totalorder %s196, %s197
      %p206 = scmp.eq.s32.totalorder %s43, 0
      %p207 = por %p205, %p206
      %p208 = scmp.ne.s32.totalorder %s196, %s197
      %p209 = scmp.eq.s32.totalorder %s44, 3
      %p210 = por %p208, %p209
      %p212 = scmp.ne.s32.totalorder %s197, %s211
      %p213 = scmp.eq.s32.totalorder %s44, 0
      %p214 = por %p212, %p213
      %s216 = sadd.s32 %s215, 1
      %p219 = scmp.eq.s32.totalorder %s38, 3
      %p220 = scmp.ne.s32.totalorder %s215, %s217
      %p221 = scmp.eq.s32.totalorder %s38, 0
      %p222 = por %p220, %p221
      %p223 = scmp.ne.s32.totalorder %s215, %s217
      %p224 = scmp.eq.s32.totalorder %s43, 3
      %p225 = por %p223, %p224
      %p226 = scmp.ne.s32.totalorder %s217, %s218
      %p227 = scmp.eq.s32.totalorder %s43, 0
      %p228 = por %p226, %p227
      %p229 = scmp.ne.s32.totalorder %s217, %s218
      %p230 = scmp.eq.s32.totalorder %s44, 3
      %p231 = por %p229, %p230
      %p233 = scmp.ne.s32.totalorder %s218, %s232
      %p234 = scmp.eq.s32.totalorder %s44, 0
      %p235 = por %p233, %p234
      %s236 = ssub.s32 %s46, %s53
      %p237 = scmp.eq.s32.totalorder %s236, 0
      %s239 = sadd.s32 %s238, 1
      %s240 = scalar_select %p237, %s238, %s239
      %p243 = pneg %p237
      %p244 = scmp.eq.s32.totalorder %s38, 3
      %p245 = por %p243, %p244
      %p246 = scmp.ne.s32.totalorder %s238, %s241
      %p247 = scmp.eq.s32.totalorder %s38, 0
      %p248 = por %p246, %p247
      %p249 = scmp.ne.s32.totalorder %s238, %s241
      %p250 = scmp.eq.s32.totalorder %s43, 3
      %p251 = por %p249, %p250
      %p252 = scmp.ne.s32.totalorder %s241, %s242
      %p253 = scmp.eq.s32.totalorder %s43, 0
      %p254 = por %p252, %p253
      %p255 = scmp.ne.s32.totalorder %s241, %s242
      %p256 = scmp.eq.s32.totalorder %s44, 3
      %p257 = por %p255, %p256
      %p259 = scmp.ne.s32.totalorder %s242, %s258
      %p260 = scmp.eq.s32.totalorder %s44, 0
      %p261 = por %p259, %p260
      %s262 = ssub.s32 %s46, %s53
      %p263 = scmp.eq.s32.totalorder %s262, 0
      %s265 = sadd.s32 %s264, 1
      %s266 = scalar_select %p263, %s264, %s265
      %p269 = pneg %p263
      %p270 = scmp.eq.s32.totalorder %s38, 3
      %p271 = por %p269, %p270
      %p272 = scmp.ne.s32.totalorder %s264, %s267
      %p273 = scmp.eq.s32.totalorder %s38, 0
      %p274 = por %p272, %p273
      %p275 = scmp.ne.s32.totalorder %s264, %s267
      %p276 = scmp.eq.s32.totalorder %s43, 3
      %p277 = por %p275, %p276
      %p278 = scmp.ne.s32.totalorder %s267, %s268
      %p279 = scmp.eq.s32.totalorder %s43, 0
      %p280 = por %p278, %p279
      %p281 = scmp.ne.s32.totalorder %s267, %s268
      %p282 = scmp.eq.s32.totalorder %s44, 3
      %p283 = por %p281, %p282
      %p285 = scmp.ne.s32.totalorder %s268, %s284
      %p286 = scmp.eq.s32.totalorder %s44, 0
      %p287 = por %p285, %p286
      %s288 = ssub.s32 %s46, %s53
      %p289 = scmp.eq.s32.totalorder %s288, 0
      %s291 = sadd.s32 %s290, 1
      %s292 = scalar_select %p289, %s290, %s291
      %p295 = pneg %p289
      %p296 = scmp.eq.s32.totalorder %s38, 3
      %p297 = por %p295, %p296
      %p298 = scmp.ne.s32.totalorder %s290, %s293
      %p299 = scmp.eq.s32.totalorder %s38, 0
      %p300 = por %p298, %p299
      %p301 = scmp.ne.s32.totalorder %s290, %s293
      %p302 = scmp.eq.s32.totalorder %s43, 3
      %p303 = por %p301, %p302
      %p304 = scmp.ne.s32.totalorder %s293, %s294
      %p305 = scmp.eq.s32.totalorder %s43, 0
      %p306 = por %p304, %p305
      %p307 = scmp.ne.s32.totalorder %s293, %s294
      %p308 = scmp.eq.s32.totalorder %s44, 3
      %p309 = por %p307, %p308
      %p311 = scmp.ne.s32.totalorder %s294, %s310
      %p312 = scmp.eq.s32.totalorder %s44, 0
      %p313 = por %p311, %p312
      %s314 = ssub.s32 %s46, %s53
      %p315 = scmp.eq.s32.totalorder %s314, 0
      %s317 = sadd.s32 %s316, 1
      %s318 = scalar_select %p315, %s316, %s317
      %p321 = pneg %p315
      %p322 = scmp.eq.s32.totalorder %s38, 3
      %p323 = por %p321, %p322
      %p324 = scmp.ne.s32.totalorder %s316, %s319
      %p325 = scmp.eq.s32.totalorder %s38, 0
      %p326 = por %p324, %p325
      %p327 = scmp.ne.s32.totalorder %s316, %s319
      %p328 = scmp.eq.s32.totalorder %s43, 3
      %p329 = por %p327, %p328
      %p330 = scmp.ne.s32.totalorder %s319, %s320
      %p331 = scmp.eq.s32.totalorder %s43, 0
      %p332 = por %p330, %p331
      %p333 = scmp.ne.s32.totalorder %s319, %s320
      %p334 = scmp.eq.s32.totalorder %s44, 3
      %p335 = por %p333, %p334
      %p337 = scmp.ne.s32.totalorder %s320, %s336
      %p338 = scmp.eq.s32.totalorder %s44, 0
      %p339 = por %p337, %p338
      %s340 = ssub.s32 %s46, %s53
      %p341 = scmp.eq.s32.totalorder %s340, 0
      %s343 = sadd.s32 %s342, 1
      %s344 = scalar_select %p341, %s342, %s343
      %p347 = pneg %p341
      %p348 = scmp.eq.s32.totalorder %s38, 3
      %p349 = por %p347, %p348
      %p350 = scmp.ne.s32.totalorder %s342, %s345
      %p351 = scmp.eq.s32.totalorder %s38, 0
      %p352 = por %p350, %p351
      %p353 = scmp.ne.s32.totalorder %s342, %s345
      %p354 = scmp.eq.s32.totalorder %s43, 3
      %p355 = por %p353, %p354
      %p356 = scmp.ne.s32.totalorder %s345, %s346
      %p357 = scmp.eq.s32.totalorder %s43, 0
      %p358 = por %p356, %p357
      %p359 = scmp.ne.s32.totalorder %s345, %s346
      %p360 = scmp.eq.s32.totalorder %s44, 3
      %p361 = por %p359, %p360
      %p363 = scmp.ne.s32.totalorder %s346, %s362
      %p364 = scmp.eq.s32.totalorder %s44, 0
      %p365 = por %p363, %p364
      %s366 = ssub.s32 %s46, %s53
      %p367 = scmp.eq.s32.totalorder %s366, 0
      %s369 = sadd.s32 %s368, 1
      %s370 = scalar_select %p367, %s368, %s369
      %p373 = pneg %p367
      %p374 = scmp.eq.s32.totalorder %s38, 3
      %p375 = por %p373, %p374
      %p376 = scmp.ne.s32.totalorder %s368, %s371
      %p377 = scmp.eq.s32.totalorder %s38, 0
      %p378 = por %p376, %p377
      %p379 = scmp.ne.s32.totalorder %s368, %s371
      %p380 = scmp.eq.s32.totalorder %s43, 3
      %p381 = por %p379, %p380
      %p382 = scmp.ne.s32.totalorder %s371, %s372
      %p383 = scmp.eq.s32.totalorder %s43, 0
      %p384 = por %p382, %p383
      %p385 = scmp.ne.s32.totalorder %s371, %s372
      %p386 = scmp.eq.s32.totalorder %s44, 3
      %p387 = por %p385, %p386
      %p389 = scmp.ne.s32.totalorder %s372, %s388
      %p390 = scmp.eq.s32.totalorder %s44, 0
      %p391 = por %p389, %p390
      %s392 = ssub.s32 %s46, %s53
      %p393 = scmp.eq.s32.totalorder %s392, 0
      %s395 = sadd.s32 %s394, 1
      %s396 = scalar_select %p393, %s394, %s395
      %p399 = pneg %p393
      %p400 = scmp.eq.s32.totalorder %s38, 3
      %p401 = por %p399, %p400
      %p402 = scmp.ne.s32.totalorder %s394, %s397
      %p403 = scmp.eq.s32.totalorder %s38, 0
      %p404 = por %p402, %p403
      %p405 = scmp.ne.s32.totalorder %s394, %s397
      %p406 = scmp.eq.s32.totalorder %s43, 3
      %p407 = por %p405, %p406
      %p408 = scmp.ne.s32.totalorder %s397, %s398
      %p409 = scmp.eq.s32.totalorder %s43, 0
      %p410 = por %p408, %p409
      %p411 = scmp.ne.s32.totalorder %s397, %s398
      %p412 = scmp.eq.s32.totalorder %s44, 3
      %p413 = por %p411, %p412
      %p415 = scmp.ne.s32.totalorder %s398, %s414
      %p416 = scmp.eq.s32.totalorder %s44, 0
      %p417 = por %p415, %p416
      %s418 = ssub.s32 %s46, %s53
      %p419 = scmp.eq.s32.totalorder %s418, 0
      %s421 = sadd.s32 %s420, 1
      %s422 = scalar_select %p419, %s420, %s421
      %p425 = pneg %p419
      %p426 = scmp.eq.s32.totalorder %s38, 3
      %p427 = por %p425, %p426
      %p428 = scmp.ne.s32.totalorder %s420, %s423
      %p429 = scmp.eq.s32.totalorder %s38, 0
      %p430 = por %p428, %p429
      %p431 = scmp.ne.s32.totalorder %s420, %s423
      %p432 = scmp.eq.s32.totalorder %s43, 3
      %p433 = por %p431, %p432
      %p434 = scmp.ne.s32.totalorder %s423, %s424
      %p435 = scmp.eq.s32.totalorder %s43, 0
      %p436 = por %p434, %p435
      %p437 = scmp.ne.s32.totalorder %s423, %s424
      %p438 = scmp.eq.s32.totalorder %s44, 3
      %p439 = por %p437, %p438
      %p441 = scmp.ne.s32.totalorder %s424, %s440
      %p442 = scmp.eq.s32.totalorder %s44, 0
      %p443 = por %p441, %p442
      %s444 = ssub.s32 %s46, %s53
      %p445 = scmp.eq.s32.totalorder %s444, 0
      %s447 = sadd.s32 %s446, 1
      %s448 = scalar_select %p445, %s446, %s447
      %p451 = pneg %p445
      %p452 = scmp.eq.s32.totalorder %s38, 3
      %p453 = por %p451, %p452
      %p454 = scmp.ne.s32.totalorder %s446, %s449
      %p455 = scmp.eq.s32.totalorder %s38, 0
      %p456 = por %p454, %p455
      %p457 = scmp.ne.s32.totalorder %s446, %s449
      %p458 = scmp.eq.s32.totalorder %s43, 3
      %p459 = por %p457, %p458
      %p460 = scmp.ne.s32.totalorder %s449, %s450
      %p461 = scmp.eq.s32.totalorder %s43, 0
      %p462 = por %p460, %p461
      %p463 = scmp.ne.s32.totalorder %s449, %s450
      %p464 = scmp.eq.s32.totalorder %s44, 3
      %p465 = por %p463, %p464
      %p467 = scmp.ne.s32.totalorder %s450, %s466
      %p468 = scmp.eq.s32.totalorder %s44, 0
      %p469 = por %p467, %p468
      %s470 = ssub.s32 %s46, %s53
      %p471 = scmp.eq.s32.totalorder %s470, 0
      %s473 = sadd.s32 %s472, 1
      %s474 = scalar_select %p471, %s472, %s473
      %p477 = pneg %p471
      %p478 = scmp.eq.s32.totalorder %s38, 3
      %p479 = por %p477, %p478
      %p480 = scmp.ne.s32.totalorder %s472, %s475
      %p481 = scmp.eq.s32.totalorder %s38, 0
      %p482 = por %p480, %p481
      %p483 = scmp.ne.s32.totalorder %s472, %s475
      %p484 = scmp.eq.s32.totalorder %s43, 3
      %p485 = por %p483, %p484
      %p486 = scmp.ne.s32.totalorder %s475, %s476
      %p487 = scmp.eq.s32.totalorder %s43, 0
      %p488 = por %p486, %p487
      %p489 = scmp.ne.s32.totalorder %s475, %s476
      %p490 = scmp.eq.s32.totalorder %s44, 3
      %p491 = por %p489, %p490
      %p493 = scmp.ne.s32.totalorder %s476, %s492
      %p494 = scmp.eq.s32.totalorder %s44, 0
      %p495 = por %p493, %p494
      %s496 = ssub.s32 %s46, %s53
      %p497 = scmp.eq.s32.totalorder %s496, 0
      %s499 = sadd.s32 %s498, 1
      %s500 = scalar_select %p497, %s498, %s499
      %p503 = pneg %p497
      %p504 = scmp.eq.s32.totalorder %s38, 3
      %p505 = por %p503, %p504
      %p506 = scmp.ne.s32.totalorder %s498, %s501
      %p507 = scmp.eq.s32.totalorder %s38, 0
      %p508 = por %p506, %p507
      %p509 = scmp.ne.s32.totalorder %s498, %s501
      %p510 = scmp.eq.s32.totalorder %s43, 3
      %p511 = por %p509, %p510
      %p512 = scmp.ne.s32.totalorder %s501, %s502
      %p513 = scmp.eq.s32.totalorder %s43, 0
      %p514 = por %p512, %p513
      %p515 = scmp.ne.s32.totalorder %s501, %s502
      %p516 = scmp.eq.s32.totalorder %s44, 3
      %p517 = por %p515, %p516
      %p519 = scmp.ne.s32.totalorder %s502, %s518
      %p520 = scmp.eq.s32.totalorder %s44, 0
      %p521 = por %p519, %p520
      %s522 = ssub.s32 %s46, %s53
      %p523 = scmp.eq.s32.totalorder %s522, 0
      %s525 = sadd.s32 %s524, 1
      %s526 = scalar_select %p523, %s524, %s525
      %p529 = pneg %p523
      %p530 = scmp.eq.s32.totalorder %s38, 3
      %p531 = por %p529, %p530
      %p532 = scmp.ne.s32.totalorder %s524, %s527
      %p533 = scmp.eq.s32.totalorder %s38, 0
      %p534 = por %p532, %p533
      %p535 = scmp.ne.s32.totalorder %s524, %s527
      %p536 = scmp.eq.s32.totalorder %s43, 3
      %p537 = por %p535, %p536
      %p538 = scmp.ne.s32.totalorder %s527, %s528
      %p539 = scmp.eq.s32.totalorder %s43, 0
      %p540 = por %p538, %p539
      %p541 = scmp.ne.s32.totalorder %s527, %s528
      %p542 = scmp.eq.s32.totalorder %s44, 3
      %p543 = por %p541, %p542
      %p545 = scmp.ne.s32.totalorder %s528, %s544
      %p546 = scmp.eq.s32.totalorder %s44, 0
      %p547 = por %p545, %p546
      %s548 = ssub.s32 %s45, %s57
      %p549 = scmp.eq.s32.totalorder %s548, 0
      %s551 = sadd.s32 %s550, 1
      %s552 = scalar_select %p549, %s550, %s551
      %p555 = pneg %p549
      %p556 = scmp.eq.s32.totalorder %s38, 3
      %p557 = por %p555, %p556
      %p558 = scmp.ne.s32.totalorder %s550, %s553
      %p559 = scmp.eq.s32.totalorder %s38, 0
      %p560 = por %p558, %p559
      %p561 = scmp.ne.s32.totalorder %s550, %s553
      %p562 = scmp.eq.s32.totalorder %s43, 3
      %p563 = por %p561, %p562
      %p564 = scmp.ne.s32.totalorder %s553, %s554
      %p565 = scmp.eq.s32.totalorder %s43, 0
      %p566 = por %p564, %p565
      %p567 = scmp.ne.s32.totalorder %s553, %s554
      %p568 = scmp.eq.s32.totalorder %s44, 3
      %p569 = por %p567, %p568
      %p571 = scmp.ne.s32.totalorder %s554, %s570
      %p572 = scmp.eq.s32.totalorder %s44, 0
      %p573 = por %p571, %p572
      %p574 = scmp.le.s32.totalorder 1, %s38
      %p575 = scmp.lt.s32.totalorder %s38, 5
      %p576 = pnand %p574, %p575
      %p577 = pneg %p576
      // Predicated region
      $region9: #{tpu_custom_call.1} parent=5 // pred_check
        _
      $region10: #{tpu_custom_call.1} parent=5 // pred_check_branch
        %579 = sbr.rel (%p576) target = $region12
      $region11: #{tpu_custom_call.1} parent=5 // pred_region
        %s580 = ssub.s32 %s38, 1
        // Predicated region
        $region13: #{tpu_custom_call.1} parent=11 // pred_check
          %p581 = pneg %p123
        $region14: #{tpu_custom_call.1} parent=11 // pred_check_branch
          %583 = sbr.rel (%p581) target = $region16
        $region15: #{tpu_custom_call.1} parent=11 // pred_region
          %s585 = ssub.s32 128, 128
          %586 = vsyncadd [#allocation7], %s585
          %s588 = sshll.u32 [#allocation8], 4
          %s589 = int_to_ptr.vmem [resolvable:$true] %s588
          %591 = dma.hbm_to_vmem [thread:$0]  %s2, 128, %s589, [#allocation7]
        $region16: #{tpu_custom_call.1} parent=11 // pred_fallthru
          _
        // Predicated region
        $region17: #{tpu_custom_call.1} parent=11 // pred_check
          %p592 = pneg %p144
        $region18: #{tpu_custom_call.1} parent=11 // pred_check_branch
          %594 = sbr.rel (%p592) target = $region20
        $region19: #{tpu_custom_call.1} parent=11 // pred_region
          %s596 = ssub.s32 128, 128
          %597 = vsyncadd [#allocation10], %s596
          %s599 = sshll.u32 [#allocation9], 4
          %s600 = int_to_ptr.vmem [resolvable:$true] %s599
          %602 = dma.hbm_to_vmem [thread:$0]  %s3, 128, %s600, [#allocation10]
        $region20: #{tpu_custom_call.1} parent=11 // pred_fallthru
          _
        // Predicated region
        $region21: #{tpu_custom_call.1} parent=11 // pred_check
          %p603 = pneg %p165
        $region22: #{tpu_custom_call.1} parent=11 // pred_check_branch
          %605 = sbr.rel (%p603) target = $region24
        $region23: #{tpu_custom_call.1} parent=11 // pred_region
          %s607 = ssub.s32 128, 128
          %608 = vsyncadd [#allocation10], %s607
          %s610 = sshll.u32 [#allocation11], 4
          %s611 = int_to_ptr.vmem [resolvable:$true] %s610
          %613 = dma.hbm_to_vmem [thread:$0]  %s4, 128, %s611, [#allocation10]
        $region24: #{tpu_custom_call.1} parent=11 // pred_fallthru
          _
        // Predicated region
        $region25: #{tpu_custom_call.1} parent=11 // pred_check
          %p614 = pneg %p186
        $region26: #{tpu_custom_call.1} parent=11 // pred_check_branch
          %616 = sbr.rel (%p614) target = $region28
        $region27: #{tpu_custom_call.1} parent=11 // pred_region
          %s618 = ssub.s32 16, 16
          %619 = vsyncadd [#allocation13], %s618
          %s621 = sshll.u32 [#allocation12], 4
          %s622 = int_to_ptr.vmem [resolvable:$true] %s621
          %624 = dma.hbm_to_vmem [thread:$0]  %s5, 16, %s622, [#allocation13]
        $region28: #{tpu_custom_call.1} parent=11 // pred_fallthru
          _
        // Predicated region
        $region29: #{tpu_custom_call.1} parent=11 // pred_check
          %p625 = pneg %p207
        $region30: #{tpu_custom_call.1} parent=11 // pred_check_branch
          %627 = sbr.rel (%p625) target = $region32
        $region31: #{tpu_custom_call.1} parent=11 // pred_region
          %s629 = ssub.s32 16, 16
          %630 = vsyncadd [#allocation13], %s629
          %s632 = sshll.u32 [#allocation14], 4
          %s633 = int_to_ptr.vmem [resolvable:$true] %s632
          %635 = dma.hbm_to_vmem [thread:$0]  %s6, 16, %s633, [#allocation13]
        $region32: #{tpu_custom_call.1} parent=11 // pred_fallthru
          _
        // Predicated region
        $region33: #{tpu_custom_call.1} parent=11 // pred_check
          %p636 = pneg %p228
        $region34: #{tpu_custom_call.1} parent=11 // pred_check_branch
          %638 = sbr.rel (%p636) target = $region36
        $region35: #{tpu_custom_call.1} parent=11 // pred_region
          %s640 = ssub.s32 16, 16
          %641 = vsyncadd [#allocation16], %s640
          %s643 = sshll.u32 [#allocation15], 4
          %s644 = int_to_ptr.vmem [resolvable:$true] %s643
          %646 = dma.hbm_to_vmem [thread:$0]  %s7, 16, %s644, [#allocation16]
        $region36: #{tpu_custom_call.1} parent=11 // pred_fallthru
          _
      $region12: #{tpu_custom_call.1} parent=5 // pred_fallthru
        _
      %p647 = scmp.lt.s32.totalorder %s38, 4
      // Predicated region
      $region37: #{tpu_custom_call.1} parent=5 // pred_check
        %p648 = pneg %p647
      $region38: #{tpu_custom_call.1} parent=5 // pred_check_branch
        %650 = sbr.rel (%p648) target = $region40
      $region39: #{tpu_custom_call.1} parent=5 // pred_region
        // Predicated region
        $region41: #{tpu_custom_call.1} parent=39 // pred_check
          %p651 = pneg %p70
        $region42: #{tpu_custom_call.1} parent=39 // pred_check_branch
          %653 = sbr.rel (%p651) target = $region44
        $region43: #{tpu_custom_call.1} parent=39 // pred_region
          %s654 = sand.u32 %s60, 1
          %s655 = scalar_lea.sflag [#allocation4], %s654
          %s656 = sand.u32 %s60, 1
          %s657 = smul.addr %s656, 8
          %s658 = scalar_lea.vmem [#allocation3], %s657
          %s660 = ssub.s32 128, 128
          %661 = vsyncadd %s655, %s660
          %s662 = smul.addr %s45, 128
          %s663 = scalar_lea.hbm %s0, %s662
          %s665 = sshll.u32 %s658, 4
          %s666 = int_to_ptr.vmem [resolvable:$true] %s665
          %668 = dma.hbm_to_vmem [thread:$0]  %s663, 128, %s666, %s655
        $region44: #{tpu_custom_call.1} parent=39 // pred_fallthru
          _
        // Predicated region
        $region45: #{tpu_custom_call.1} parent=39 // pred_check
          %p669 = pneg %p96
        $region46: #{tpu_custom_call.1} parent=39 // pred_check_branch
          %671 = sbr.rel (%p669) target = $region48
        $region47: #{tpu_custom_call.1} parent=39 // pred_region
          %s672 = sand.u32 %s38, 1
          %s673 = scalar_lea.sflag [#allocation7], %s672
          %s674 = sand.u32 %s86, 1
          %s675 = scalar_lea.vmem [#allocation6], %s674
          %s677 = ssub.s32 16, 16
          %678 = vsyncadd %s673, %s677
          %s679 = smul.addr %s45, 16
          %s680 = scalar_lea.hbm %s1, %s679
          %s682 = sshll.u32 %s675, 4
          %s683 = int_to_ptr.vmem [resolvable:$true] %s682
          %685 = dma.hbm_to_vmem [thread:$0]  %s680, 16, %s683, %s673
        $region48: #{tpu_custom_call.1} parent=39 // pred_fallthru
          _
        // Predicated region
        $region49: #{tpu_custom_call.1} parent=39 // pred_check
          %p686 = pneg %p248
        $region50: #{tpu_custom_call.1} parent=39 // pred_check_branch
          %688 = sbr.rel (%p686) target = $region52
        $region51: #{tpu_custom_call.1} parent=39 // pred_region
          %p689 = scmp.lt.s32.totalorder %s46, 1
          %s690 = scalar_select %p689, %s46, 1
          %s691 = smul.addr %s690, 4
          %s692 = smul.addr %s691, 8
          %s693 = scalar_lea.vmem %s8, %s692
        $region52: #{tpu_custom_call.1} parent=39 // pred_fallthru
          _
        // Predicated region
        $region53: #{tpu_custom_call.1} parent=39 // pred_check
          %p694 = pneg %p274
        $region54: #{tpu_custom_call.1} parent=39 // pred_check_branch
          %696 = sbr.rel (%p694) target = $region56
        $region55: #{tpu_custom_call.1} parent=39 // pred_region
          %p697 = scmp.lt.s32.totalorder %s46, 1
          %s698 = scalar_select %p697, %s46, 1
          %s699 = scalar_lea.vmem %s9, %s698
        $region56: #{tpu_custom_call.1} parent=39 // pred_fallthru
          _
        // Predicated region
        $region57: #{tpu_custom_call.1} parent=39 // pred_check
          %p700 = pneg %p300
        $region58: #{tpu_custom_call.1} parent=39 // pred_check_branch
          %702 = sbr.rel (%p700) target = $region60
        $region59: #{tpu_custom_call.1} parent=39 // pred_region
          %p703 = scmp.lt.s32.totalorder %s46, 1
          %s704 = scalar_select %p703, %s46, 1
          %s705 = smul.addr %s704, 4
          %s706 = smul.addr %s705, 8
          %s707 = scalar_lea.vmem %s10, %s706
        $region60: #{tpu_custom_call.1} parent=39 // pred_fallthru
          _
        // Predicated region
        $region61: #{tpu_custom_call.1} parent=39 // pred_check
          %p708 = pneg %p326
        $region62: #{tpu_custom_call.1} parent=39 // pred_check_branch
          %710 = sbr.rel (%p708) target = $region64
        $region63: #{tpu_custom_call.1} parent=39 // pred_region
          %p711 = scmp.lt.s32.totalorder %s46, 1
          %s712 = scalar_select %p711, %s46, 1
          %s713 = scalar_lea.vmem %s11, %s712
        $region64: #{tpu_custom_call.1} parent=39 // pred_fallthru
          _
        // Predicated region
        $region65: #{tpu_custom_call.1} parent=39 // pred_check
          %p714 = pneg %p352
        $region66: #{tpu_custom_call.1} parent=39 // pred_check_branch
          %716 = sbr.rel (%p714) target = $region68
        $region67: #{tpu_custom_call.1} parent=39 // pred_region
          %p717 = scmp.lt.s32.totalorder %s46, 1
          %s718 = scalar_select %p717, %s46, 1
          %s719 = scalar_lea.vmem %s12, %s718
        $region68: #{tpu_custom_call.1} parent=39 // pred_fallthru
          _
        // Predicated region
        $region69: #{tpu_custom_call.1} parent=39 // pred_check
          %p720 = pneg %p378
        $region70: #{tpu_custom_call.1} parent=39 // pred_check_branch
          %722 = sbr.rel (%p720) target = $region72
        $region71: #{tpu_custom_call.1} parent=39 // pred_region
          %p723 = scmp.lt.s32.totalorder %s46, 1
          %s724 = scalar_select %p723, %s46, 1
          %s725 = scalar_lea.vmem %s13, %s724
        $region72: #{tpu_custom_call.1} parent=39 // pred_fallthru
          _
        // Predicated region
        $region73: #{tpu_custom_call.1} parent=39 // pred_check
          %p726 = pneg %p404
        $region74: #{tpu_custom_call.1} parent=39 // pred_check_branch
          %728 = sbr.rel (%p726) target = $region76
        $region75: #{tpu_custom_call.1} parent=39 // pred_region
          %p729 = scmp.lt.s32.totalorder %s46, 1
          %s730 = scalar_select %p729, %s46, 1
          %s731 = smul.addr %s730, 4
          %s732 = smul.addr %s731, 8
          %s733 = scalar_lea.vmem %s14, %s732
        $region76: #{tpu_custom_call.1} parent=39 // pred_fallthru
          _
        // Predicated region
        $region77: #{tpu_custom_call.1} parent=39 // pred_check
          %p734 = pneg %p430
        $region78: #{tpu_custom_call.1} parent=39 // pred_check_branch
          %736 = sbr.rel (%p734) target = $region80
        $region79: #{tpu_custom_call.1} parent=39 // pred_region
          %p737 = scmp.lt.s32.totalorder %s46, 1
          %s738 = scalar_select %p737, %s46, 1
          %s739 = scalar_lea.vmem %s15, %s738
        $region80: #{tpu_custom_call.1} parent=39 // pred_fallthru
          _
        // Predicated region
        $region81: #{tpu_custom_call.1} parent=39 // pred_check
          %p740 = pneg %p456
        $region82: #{tpu_custom_call.1} parent=39 // pred_check_branch
          %742 = sbr.rel (%p740) target = $region84
        $region83: #{tpu_custom_call.1} parent=39 // pred_region
          %p743 = scmp.lt.s32.totalorder %s46, 1
          %s744 = scalar_select %p743, %s46, 1
          %s745 = smul.addr %s744, 8
          %s746 = smul.addr %s745, 8
          %s747 = scalar_lea.vmem %s16, %s746
        $region84: #{tpu_custom_call.1} parent=39 // pred_fallthru
          _
        // Predicated region
        $region85: #{tpu_custom_call.1} parent=39 // pred_check
          %p748 = pneg %p482
        $region86: #{tpu_custom_call.1} parent=39 // pred_check_branch
          %750 = sbr.rel (%p748) target = $region88
        $region87: #{tpu_custom_call.1} parent=39 // pred_region
          %p751 = scmp.lt.s32.totalorder %s46, 1
          %s752 = scalar_select %p751, %s46, 1
          %s753 = scalar_lea.vmem %s17, %s752
        $region88: #{tpu_custom_call.1} parent=39 // pred_fallthru
          _
        // Predicated region
        $region89: #{tpu_custom_call.1} parent=39 // pred_check
          %p754 = pneg %p508
        $region90: #{tpu_custom_call.1} parent=39 // pred_check_branch
          %756 = sbr.rel (%p754) target = $region92
        $region91: #{tpu_custom_call.1} parent=39 // pred_region
          %p757 = scmp.lt.s32.totalorder %s46, 1
          %s758 = scalar_select %p757, %s46, 1
          %s759 = scalar_lea.vmem %s18, %s758
        $region92: #{tpu_custom_call.1} parent=39 // pred_fallthru
          _
        // Predicated region
        $region93: #{tpu_custom_call.1} parent=39 // pred_check
          %p760 = pneg %p534
        $region94: #{tpu_custom_call.1} parent=39 // pred_check_branch
          %762 = sbr.rel (%p760) target = $region96
        $region95: #{tpu_custom_call.1} parent=39 // pred_region
          %p763 = scmp.lt.s32.totalorder %s46, 1
          %s764 = scalar_select %p763, %s46, 1
          %s765 = scalar_lea.vmem %s19, %s764
        $region96: #{tpu_custom_call.1} parent=39 // pred_fallthru
          _
      $region40: #{tpu_custom_call.1} parent=5 // pred_fallthru
        _
      %p766 = scmp.le.s32.totalorder 1, %s38
      %p767 = scmp.lt.s32.totalorder %s38, 5
      %p768 = pnand %p766, %p767
      %p769 = pneg %p768
      // Predicated region
      $region97: #{tpu_custom_call.1} parent=5 // pred_check
        _
      $region98: #{tpu_custom_call.1} parent=5 // pred_check_branch
        %771 = sbr.rel (%p768) target = $region100
      $region99: #{tpu_custom_call.1} parent=5 // pred_region
        %s772 = ssub.s32 %s38, 1
        %s773 = sand.u32 %s63, 1
        %s774 = scalar_lea.sflag [#allocation4], %s773
        %s775 = sand.u32 %s63, 1
        %s776 = smul.addr %s775, 8
        %s777 = scalar_lea.vmem [#allocation3], %s776
        // Predicated region
        $region101: #{tpu_custom_call.1} parent=99 // pred_check
          %p778 = pneg %p76
        $region102: #{tpu_custom_call.1} parent=99 // pred_check_branch
          %780 = sbr.rel (%p778) target = $region104
        $region103: #{tpu_custom_call.1} parent=99 // pred_region
          %781 = dma.done %s774, 128
        $region104: #{tpu_custom_call.1} parent=99 // pred_fallthru
          _
        %s782 = sand.u32 %s43, 1
        %s783 = scalar_lea.sflag [#allocation7], %s782
        %s784 = sand.u32 %s89, 1
        %s785 = scalar_lea.vmem [#allocation6], %s784
        // Predicated region
        $region105: #{tpu_custom_call.1} parent=99 // pred_check
          %p786 = pneg %p102
        $region106: #{tpu_custom_call.1} parent=99 // pred_check_branch
          %788 = sbr.rel (%p786) target = $region108
        $region107: #{tpu_custom_call.1} parent=99 // pred_region
          %789 = dma.done %s783, 16
        $region108: #{tpu_custom_call.1} parent=99 // pred_fallthru
          _
        // Predicated region
        $region109: #{tpu_custom_call.1} parent=99 // pred_check
          %p790 = pneg %p123
        $region110: #{tpu_custom_call.1} parent=99 // pred_check_branch
          %792 = sbr.rel (%p790) target = $region112
        $region111: #{tpu_custom_call.1} parent=99 // pred_region
          %793 = dma.done [#allocation7], 128
        $region112: #{tpu_custom_call.1} parent=99 // pred_fallthru
          _
        // Predicated region
        $region113: #{tpu_custom_call.1} parent=99 // pred_check
          %p794 = pneg %p144
        $region114: #{tpu_custom_call.1} parent=99 // pred_check_branch
          %796 = sbr.rel (%p794) target = $region116
        $region115: #{tpu_custom_call.1} parent=99 // pred_region
          %797 = dma.done [#allocation10], 128
        $region116: #{tpu_custom_call.1} parent=99 // pred_fallthru
          _
        // Predicated region
        $region117: #{tpu_custom_call.1} parent=99 // pred_check
          %p798 = pneg %p165
        $region118: #{tpu_custom_call.1} parent=99 // pred_check_branch
          %800 = sbr.rel (%p798) target = $region120
        $region119: #{tpu_custom_call.1} parent=99 // pred_region
          %801 = dma.done [#allocation10], 128
        $region120: #{tpu_custom_call.1} parent=99 // pred_fallthru
          _
        // Predicated region
        $region121: #{tpu_custom_call.1} parent=99 // pred_check
          %p802 = pneg %p186
        $region122: #{tpu_custom_call.1} parent=99 // pred_check_branch
          %804 = sbr.rel (%p802) target = $region124
        $region123: #{tpu_custom_call.1} parent=99 // pred_region
          %805 = dma.done [#allocation13], 16
        $region124: #{tpu_custom_call.1} parent=99 // pred_fallthru
          _
        // Predicated region
        $region125: #{tpu_custom_call.1} parent=99 // pred_check
          %p806 = pneg %p207
        $region126: #{tpu_custom_call.1} parent=99 // pred_check_branch
          %808 = sbr.rel (%p806) target = $region128
        $region127: #{tpu_custom_call.1} parent=99 // pred_region
          %809 = dma.done [#allocation13], 16
        $region128: #{tpu_custom_call.1} parent=99 // pred_fallthru
          _
        // Predicated region
        $region129: #{tpu_custom_call.1} parent=99 // pred_check
          %p810 = pneg %p228
        $region130: #{tpu_custom_call.1} parent=99 // pred_check_branch
          %812 = sbr.rel (%p810) target = $region132
        $region131: #{tpu_custom_call.1} parent=99 // pred_region
          %813 = dma.done [#allocation16], 16
        $region132: #{tpu_custom_call.1} parent=99 // pred_fallthru
          _
        %s814 = sand.u32 %s63, 1
        %s815 = scalar_lea.sflag [#allocation4], %s814
        %s816 = sand.u32 %s63, 1
        %s817 = smul.addr %s816, 8
        %s818 = scalar_lea.vmem [#allocation3], %s817
        %p819 = pneg %p76
        %p820 = pneg %p73
        %s821 = sand.u32 %s43, 1
        %s822 = scalar_lea.sflag [#allocation7], %s821
        %s823 = sand.u32 %s89, 1
        %s824 = scalar_lea.vmem [#allocation6], %s823
        %p825 = pneg %p102
        %p826 = pneg %p99
        %p827 = pneg %p123
        %p828 = pneg %p120
        %p829 = pneg %p144
        %p830 = pneg %p141
        %p831 = pneg %p165
        %p832 = pneg %p162
        %p833 = pneg %p186
        %p834 = pneg %p183
        %p835 = pneg %p207
        %p836 = pneg %p204
        %p837 = pneg %p228
        %p838 = pneg %p225
        %p839 = scmp.lt.s32.totalorder %s48, 1
        %s840 = scalar_select %p839, %s48, 1
        %s841 = smul.addr %s840, 4
        %s842 = smul.addr %s841, 8
        %s843 = scalar_lea.vmem %s8, %s842
        %p844 = pneg %p254
        %p845 = pneg %p251
        %p846 = scmp.lt.s32.totalorder %s48, 1
        %s847 = scalar_select %p846, %s48, 1
        %s848 = scalar_lea.vmem %s9, %s847
        %p849 = pneg %p280
        %p850 = pneg %p277
        %p851 = scmp.lt.s32.totalorder %s48, 1
        %s852 = scalar_select %p851, %s48, 1
        %s853 = smul.addr %s852, 4
        %s854 = smul.addr %s853, 8
        %s855 = scalar_lea.vmem %s10, %s854
        %p856 = pneg %p306
        %p857 = pneg %p303
        %p858 = scmp.lt.s32.totalorder %s48, 1
        %s859 = scalar_select %p858, %s48, 1
        %s860 = scalar_lea.vmem %s11, %s859
        %p861 = pneg %p332
        %p862 = pneg %p329
        %p863 = scmp.lt.s32.totalorder %s48, 1
        %s864 = scalar_select %p863, %s48, 1
        %s865 = scalar_lea.vmem %s12, %s864
        %p866 = pneg %p358
        %p867 = pneg %p355
        %p868 = scmp.lt.s32.totalorder %s48, 1
        %s869 = scalar_select %p868, %s48, 1
        %s870 = scalar_lea.vmem %s13, %s869
        %p871 = pneg %p384
        %p872 = pneg %p381
        %p873 = scmp.lt.s32.totalorder %s48, 1
        %s874 = scalar_select %p873, %s48, 1
        %s875 = smul.addr %s874, 4
        %s876 = smul.addr %s875, 8
        %s877 = scalar_lea.vmem %s14, %s876
        %p878 = pneg %p410
        %p879 = pneg %p407
        %p880 = scmp.lt.s32.totalorder %s48, 1
        %s881 = scalar_select %p880, %s48, 1
        %s882 = scalar_lea.vmem %s15, %s881
        %p883 = pneg %p436
        %p884 = pneg %p433
        %p885 = scmp.lt.s32.totalorder %s48, 1
        %s886 = scalar_select %p885, %s48, 1
        %s887 = smul.addr %s886, 8
        %s888 = smul.addr %s887, 8
        %s889 = scalar_lea.vmem %s16, %s888
        %p890 = pneg %p462
        %p891 = pneg %p459
        %p892 = scmp.lt.s32.totalorder %s48, 1
        %s893 = scalar_select %p892, %s48, 1
        %s894 = scalar_lea.vmem %s17, %s893
        %p895 = pneg %p488
        %p896 = pneg %p485
        %p897 = scmp.lt.s32.totalorder %s48, 1
        %s898 = scalar_select %p897, %s48, 1
        %s899 = scalar_lea.vmem %s18, %s898
        %p900 = pneg %p514
        %p901 = pneg %p511
        %p902 = scmp.lt.s32.totalorder %s48, 1
        %s903 = scalar_select %p902, %s48, 1
        %s904 = scalar_lea.vmem %s19, %s903
        %p905 = pneg %p540
        %p906 = pneg %p537
        %p907 = pneg %p566
        %p908 = pneg %p563
        %s909 = sand.u32 %s553, 1
        %s910 = scalar_lea.sflag [#allocation5], %s909
        %s911 = sand.u32 %s553, 1
        %s912 = scalar_lea.vmem [#allocation17], %s911
        %p913 = scmp.lt.s32.totalorder %s48, 1
        %s914 = scalar_select %p913, %s48, 1
        %s915 = smul.addr %s914, 4
        %s916 = smul.addr %s915, 8
        %s917 = scalar_lea.vmem %s8, %s916
        %p918 = scmp.lt.s32.totalorder %s48, 1
        %s919 = scalar_select %p918, %s48, 1
        %s920 = scalar_lea.vmem %s9, %s919
        %p921 = scmp.lt.s32.totalorder %s48, 1
        %s922 = scalar_select %p921, %s48, 1
        %s923 = smul.addr %s922, 4
        %s924 = smul.addr %s923, 8
        %s925 = scalar_lea.vmem %s10, %s924
        %p926 = scmp.lt.s32.totalorder %s48, 1
        %s927 = scalar_select %p926, %s48, 1
        %s928 = scalar_lea.vmem %s11, %s927
        %p929 = scmp.lt.s32.totalorder %s48, 1
        %s930 = scalar_select %p929, %s48, 1
        %s931 = scalar_lea.vmem %s12, %s930
        %p932 = scmp.lt.s32.totalorder %s48, 1
        %s933 = scalar_select %p932, %s48, 1
        %s934 = scalar_lea.vmem %s13, %s933
        %p935 = scmp.lt.s32.totalorder %s48, 1
        %s936 = scalar_select %p935, %s48, 1
        %s937 = smul.addr %s936, 4
        %s938 = smul.addr %s937, 8
        %s939 = scalar_lea.vmem %s14, %s938
        %p940 = scmp.lt.s32.totalorder %s48, 1
        %s941 = scalar_select %p940, %s48, 1
        %s942 = scalar_lea.vmem %s15, %s941
        %p943 = scmp.lt.s32.totalorder %s48, 1
        %s944 = scalar_select %p943, %s48, 1
        %s945 = smul.addr %s944, 8
        %s946 = smul.addr %s945, 8
        %s947 = scalar_lea.vmem %s16, %s946
        %p948 = scmp.lt.s32.totalorder %s48, 1
        %s949 = scalar_select %p948, %s48, 1
        %s950 = scalar_lea.vmem %s17, %s949
        %p951 = scmp.lt.s32.totalorder %s48, 1
        %s952 = scalar_select %p951, %s48, 1
        %s953 = scalar_lea.vmem %s18, %s952
        %p954 = scmp.lt.s32.totalorder %s48, 1
        %s955 = scalar_select %p954, %s48, 1
        %s956 = scalar_lea.vmem %s19, %s955
        %p957 = scmp.eq.s32.totalorder %s48, 0
        // Predicated region
        $region133: #{tpu_custom_call.1} parent=99 // pred_check
          %p958 = pneg %p957
        $region134: #{tpu_custom_call.1} parent=99 // pred_check_branch
          %960 = sbr.rel (%p958) target = $region136
        $region135: #{tpu_custom_call.1} parent=99 // pred_region
          %v961 = vld [vmem:[%s777] sm:$0xff]
          %v962 = vld [vmem:[#allocation12] sm:$0x1]
          %v964 = vlaneseq
          %v965 = vshrl.u32 %v964, 7
          %v966 = vsub.s32 0, %v965
          %v967 = vrot.slane %v962, %v966
          %v969 = vadd.f32 %v961, %v967
          %v970 = vld [vmem:[#allocation14] sm:$0x1]
          %v971 = vld [vmem:[#allocation15] sm:$0x1]
          %vm972 = vcmask 261120
          %v973 = vsel %vm972, %v969, 0.0
          %974 = vadd.xlane.f32.xlu0 %v973
          %v975 = vpop.xlane.xlu0 %974
          %v976 = vrcp.pop 32.0
          %v977 = vmul.f32 %v975, %v976
          %v978 = vsub.f32 %v969, %v977
          %v979 = vmul.f32 %v978, %v978
          %v980 = vsel %vm972, %v979, 0.0
          %981 = vadd.xlane.f32.xlu0 %v980
          %v982 = vpop.xlane.xlu0 %981
          %v983 = vmul.f32 %v982, %v976
          %v984 = vadd.f32 %v983, 1e-12
          %v985 = vrsqrt.pop %v984
          %v986 = vmul.f32 %v978, %v985
          %v988 = vlaneseq
          %v989 = vshrl.u32 %v988, 7
          %v990 = vsub.s32 0, %v989
          %v991 = vrot.slane %v970, %v990
          %v993 = vmul.f32 %v986, %v991
          %v995 = vlaneseq
          %v996 = vshrl.u32 %v995, 7
          %v997 = vsub.s32 0, %v996
          %v998 = vrot.slane %v971, %v997
          %v1000 = vadd.f32 %v993, %v998
          %1001 = vst.msk [vmem:[#allocation2] sm:$0xff] %vm972, %v1000
        $region136: #{tpu_custom_call.1} parent=99 // pred_fallthru
          _
        %v1002 = vld [vmem:[#allocation2] sm:$0xff]
        %v1003 = vld [vmem:[#allocation8] sm:$0xff]
        %v1004 = vld [vmem:[#allocation9] sm:$0xff]
        %v1005 = vld [vmem:[#allocation11] sm:$0xff]
        %v1006 = vld [vmem:[%s917] sm:$0xff]
        %v1007 = vld [vmem:[%s917 + $0x8] sm:$0xff]
        %v1008 = vld [vmem:[%s917 + $0x10] sm:$0xff]
        %v1009 = vld [vmem:[%s917 + $0x18] sm:$0xff]
        %v1010 = vld [vmem:[%s920] sm:$0x1]
        %v1012 = vlaneseq
        %v1013 = vshrl.u32 %v1012, 7
        %v1014 = vsub.s32 0, %v1013
        %v1015 = vrot.slane %v1010, %v1014
        %vm1017 = vcmask 261120
        %v1019 = vsel %vm1017, %v1002, 0
        %1021 = vmatprep.subr.mxu0 0.0
        %1022 = vmatpush1.msra.mxu0 0.0
        %1023 = vmatprep.subr.mxu0 0.0
        %1024 = vmatpush1.msra.mxu0 0.0
        %1025 = vmatprep.subr.mxu0 0.0
        %1026 = vmatpush1.msra.mxu0 0.0
        %1027 = vmatprep.subr.mxu0 0.0
        %1028 = vmatpush1.msra.mxu0 0.0
        %1029 = vmatprep.subr.mxu0 0.0
        %1030 = vmatpush1.msra.mxu0 0.0
        %1031 = vmatprep.subr.mxu0 0.0
        %1032 = vmatpush1.msra.mxu0 0.0
        %1033 = vmatprep.subr.mxu0 0.0
        %1034 = vmatpush1.msra.mxu0 0.0
        %1035 = vmatprep.subr.mxu0 0.0
        %1036 = vmatpush1.msra.mxu0 0.0
        %1037 = vmatprep.subr.mxu0 0.0
        %1038 = vmatpush1.msra.mxu0 0.0
        %1039 = vmatprep.subr.mxu0 0.0
        %1040 = vmatpush1.msra.mxu0 0.0
        %1041 = vmatprep.subr.mxu0 0.0
        %1042 = vmatpush1.msra.mxu0 0.0
        %1043 = vmatprep.subr.mxu0 0.0
        %1044 = vmatpush1.msra.mxu0 0.0
        %1045 = vmatprep.subr.mxu0 0.0
        %1046 = vmatpush1.msra.mxu0 %v1009
        %1047 = vmatprep.subr.mxu0 0.0
        %1048 = vmatpush1.msra.mxu0 %v1008
        %1049 = vmatprep.subr.mxu0 0.0
        %1050 = vmatpush1.msra.mxu0 %v1007
        %1051 = vmatprep.subr.mxu0 0.0
        %1052 = vmatpush1.msra.mxu0 %v1006
        %1053 = vmatprep.subr.mxu0 0.0
        %1054 = vmatpush2.msra.mxu0 0.0
        %1055 = vmatprep.subr.mxu0 0.0
        %1056 = vmatpush2.msra.mxu0 0.0
        %1057 = vmatprep.subr.mxu0 0.0
        %1058 = vmatpush2.msra.mxu0 0.0
        %1059 = vmatprep.subr.mxu0 0.0
        %1060 = vmatpush2.msra.mxu0 0.0
        %1061 = vmatprep.subr.mxu0 0.0
        %1062 = vmatpush2.msra.mxu0 0.0
        %1063 = vmatprep.subr.mxu0 0.0
        %1064 = vmatpush2.msra.mxu0 0.0
        %1065 = vmatprep.subr.mxu0 0.0
        %1066 = vmatpush2.msra.mxu0 0.0
        %1067 = vmatprep.subr.mxu0 0.0
        %1068 = vmatpush2.msra.mxu0 0.0
        %1069 = vmatprep.subr.mxu0 0.0
        %1070 = vmatpush2.msra.mxu0 0.0
        %1071 = vmatprep.subr.mxu0 0.0
        %1072 = vmatpush2.msra.mxu0 0.0
        %1073 = vmatprep.subr.mxu0 0.0
        %1074 = vmatpush2.msra.mxu0 0.0
        %1075 = vmatprep.subr.mxu0 0.0
        %1076 = vmatpush2.msra.mxu0 0.0
        %1077 = vmatprep.subr.mxu0 0.0
        %1078 = vmatpush2.msra.mxu0 0.0
        %1079 = vmatprep.subr.mxu0 0.0
        %1080 = vmatpush2.msra.mxu0 0.0
        %1081 = vmatprep.subr.mxu0 0.0
        %1082 = vmatpush2.msra.mxu0 0.0
        %1083 = vmatprep.subr.mxu0 0.0
        %1084 = vmatpush2.msra.mxu0 0.0
        %1085 = vmatprep.mubr.f32.mxu0 0.0
        %1086 = vmatmul.mubr.f32.gmra.mxu0 %v1019
        %v1087 = vpop.f32.mrf.mxu0
        %v1088 = vadd.f32 %v1015, %v1087
        %v1089 = vpop.f32.mrf.mxu0
        %1090 = vdwg.mxu0
        %v1091 = vmul.f32 %v1088, %v1003
        %vm1092 = vcmask 1047808
        %1093 = vrot.lane.b32.xlu0 %v1088, 32
        %v1094 = vpop.permute.xlu0 %1093
        %v1095 = vsel %vm1092, %v1094, %v1088
        %1096 = vrot.lane.b32.xlu0 %v1095, 32
        %v1097 = vpop.permute.xlu0 %1096
        %v1098 = vsel %vm1092, %v1097, %v1088
        %1100 = vrot.lane.b32.xlu0 %v1004, 1
        %v1101 = vpop.permute.xlu0 %1100
        %v1103 = vmul.f32 %v1098, %v1101
        %1105 = vrot.lane.b32.xlu0 %v1103, 127
        %v1106 = vpop.permute.xlu0 %1105
        %v1108 = vadd.f32 %v1091, %v1106
        %1110 = vrot.lane.b32.xlu0 %v1005, 31
        %v1111 = vpop.permute.xlu0 %1110
        %v1113 = vmul.f32 %v1098, %v1111
        %1115 = vrot.lane.b32.xlu0 %v1113, 97
        %v1116 = vpop.permute.xlu0 %1115
        %v1118 = vadd.f32 %v1108, %v1116
        %1120 = vrot.lane.b32.xlu0 %v1003, 32
        %v1121 = vpop.permute.xlu0 %1120
        %v1123 = vmul.f32 %v1088, %v1121
        %1125 = vrot.lane.b32.xlu0 %v1088, 96
        %v1126 = vpop.permute.xlu0 %1125
        %1128 = vrot.lane.b32.xlu0 %v1126, 32
        %v1129 = vpop.permute.xlu0 %1128
        %v1130 = vsel %vm1092, %v1129, %v1126
        %1131 = vrot.lane.b32.xlu0 %v1130, 32
        %v1132 = vpop.permute.xlu0 %1131
        %v1133 = vsel %vm1092, %v1132, %v1126
        %v1134 = vmul.f32 %v1133, %v1101
        %1136 = vrot.lane.b32.xlu0 %v1134, 31
        %v1137 = vpop.permute.xlu0 %1136
        %v1139 = vadd.f32 %v1123, %v1137
        %v1140 = vmul.f32 %v1133, %v1111
        %1142 = vrot.lane.b32.xlu0 %v1140, 1
        %v1143 = vpop.permute.xlu0 %1142
        %v1145 = vadd.f32 %v1139, %v1143
        %1146 = vrot.lane.b32.xlu0 %v1003, 64
        %v1147 = vpop.permute.xlu0 %1146
        %v1149 = vmul.f32 %v1088, %v1147
        %1150 = vrot.lane.b32.xlu0 %v1088, 64
        %v1151 = vpop.permute.xlu0 %1150
        %1153 = vrot.lane.b32.xlu0 %v1151, 32
        %v1154 = vpop.permute.xlu0 %1153
        %v1155 = vsel %vm1092, %v1154, %v1151
        %1156 = vrot.lane.b32.xlu0 %v1155, 32
        %v1157 = vpop.permute.xlu0 %1156
        %v1158 = vsel %vm1092, %v1157, %v1151
        %v1159 = vmul.f32 %v1158, %v1101
        %1161 = vrot.lane.b32.xlu0 %v1159, 63
        %v1162 = vpop.permute.xlu0 %1161
        %v1164 = vadd.f32 %v1149, %v1162
        %v1165 = vmul.f32 %v1158, %v1111
        %1167 = vrot.lane.b32.xlu0 %v1165, 33
        %v1168 = vpop.permute.xlu0 %1167
        %v1170 = vadd.f32 %v1164, %v1168
        %1172 = vrot.lane.b32.xlu0 %v1118, 120
        %v1173 = vpop.permute.xlu0 %1172
        %1175 = vrot.lane.b32.xlu0 %v1118, 112
        %v1176 = vpop.permute.xlu0 %1175
        %1178 = vrot.lane.b32.xlu0 %v1118, 104
        %v1179 = vpop.permute.xlu0 %1178
        %v1181 = vcombine.low %v1118, %v1176
        %v1182 = vcombine.high %v1118, %v1176
        %v1184 = vunpack.c.l.s4 1983009808
        %v1185 = vunpack.c.0.s8 %v1184
        %v1186 = vlaneseq
        %v1187 = vshrl.u32 %v1186, 7
        %v1188 = vsub.s32 %v1185, %v1187
        %v1189 = vrot.slane %v1181, %v1188
        %v1191 = vunpack.c.l.s4 1983009808
        %v1192 = vunpack.c.0.s8 %v1191
        %v1193 = vlaneseq
        %v1194 = vshrl.u32 %v1193, 7
        %v1195 = vsub.s32 %v1192, %v1194
        %v1196 = vrot.slane %v1182, %v1195
        %v1197 = vcombine.low %v1173, %v1179
        %v1198 = vcombine.high %v1173, %v1179
        %v1200 = vunpack.c.l.s4 1983009808
        %v1201 = vunpack.c.0.s8 %v1200
        %v1202 = vlaneseq
        %v1203 = vshrl.u32 %v1202, 7
        %v1204 = vsub.s32 %v1201, %v1203
        %v1205 = vrot.slane %v1197, %v1204
        %v1207 = vunpack.c.l.s4 1983009808
        %v1208 = vunpack.c.0.s8 %v1207
        %v1209 = vlaneseq
        %v1210 = vshrl.u32 %v1209, 7
        %v1211 = vsub.s32 %v1208, %v1210
        %v1212 = vrot.slane %v1198, %v1211
        %v1213 = vcombine.low %v1189, %v1205
        %v1214 = vcombine.high %v1189, %v1205
        %v1216 = vunpack.c.l.s4 1934713408
        %v1217 = vunpack.c.0.s8 %v1216
        %v1218 = vlaneseq
        %v1219 = vshrl.u32 %v1218, 7
        %v1220 = vsub.s32 %v1217, %v1219
        %v1221 = vrot.slane %v1213, %v1220
        %v1223 = vunpack.c.l.s4 1934713408
        %v1224 = vunpack.c.0.s8 %v1223
        %v1225 = vlaneseq
        %v1226 = vshrl.u32 %v1225, 7
        %v1227 = vsub.s32 %v1224, %v1226
        %v1228 = vrot.slane %v1214, %v1227
        %v1229 = vcombine.low %v1196, %v1212
        %v1230 = vcombine.high %v1196, %v1212
        %v1232 = vunpack.c.l.s4 1934713408
        %v1233 = vunpack.c.0.s8 %v1232
        %v1234 = vlaneseq
        %v1235 = vshrl.u32 %v1234, 7
        %v1236 = vsub.s32 %v1233, %v1235
        %v1237 = vrot.slane %v1229, %v1236
        %v1239 = vunpack.c.l.s4 1934713408
        %v1240 = vunpack.c.0.s8 %v1239
        %v1241 = vlaneseq
        %v1242 = vshrl.u32 %v1241, 7
        %v1243 = vsub.s32 %v1240, %v1242
        %v1244 = vrot.slane %v1230, %v1243
        %v1245 = vcombine.high %v1221, 0.0
        %v1246 = vcombine.high %v1228, 0.0
        %v1247 = vcombine.high %v1237, 0.0
        %v1248 = vcombine.high %v1244, 0.0
        %v1249 = vcombine.low %v1221, %v1228
        %v1251 = vunpack.c.l.s4 1983009808
        %v1252 = vunpack.c.0.s8 %v1251
        %v1253 = vlaneseq
        %v1254 = vshrl.u32 %v1253, 7
        %v1255 = vsub.s32 %v1252, %v1254
        %v1256 = vrot.slane %v1249, %v1255
        %v1257 = vcombine.low %v1245, %v1246
        %v1259 = vunpack.c.l.s4 1983009808
        %v1260 = vunpack.c.0.s8 %v1259
        %v1261 = vlaneseq
        %v1262 = vshrl.u32 %v1261, 7
        %v1263 = vsub.s32 %v1260, %v1262
        %v1264 = vrot.slane %v1257, %v1263
        %v1265 = vcombine.low %v1237, %v1244
        %v1267 = vunpack.c.l.s4 1983009808
        %v1268 = vunpack.c.0.s8 %v1267
        %v1269 = vlaneseq
        %v1270 = vshrl.u32 %v1269, 7
        %v1271 = vsub.s32 %v1268, %v1270
        %v1272 = vrot.slane %v1265, %v1271
        %v1273 = vcombine.low %v1247, %v1248
        %v1275 = vunpack.c.l.s4 1983009808
        %v1276 = vunpack.c.0.s8 %v1275
        %v1277 = vlaneseq
        %v1278 = vshrl.u32 %v1277, 7
        %v1279 = vsub.s32 %v1276, %v1278
        %v1280 = vrot.slane %v1273, %v1279
        %v1281 = vcombine.low %v1256, %v1264
        %v1282 = vcombine.high %v1256, %v1264
        %v1284 = vunpack.c.l.s4 1934713408
        %v1285 = vunpack.c.0.s8 %v1284
        %v1286 = vlaneseq
        %v1287 = vshrl.u32 %v1286, 7
        %v1288 = vsub.s32 %v1285, %v1287
        %v1289 = vrot.slane %v1281, %v1288
        %v1291 = vunpack.c.l.s4 1934713408
        %v1292 = vunpack.c.0.s8 %v1291
        %v1293 = vlaneseq
        %v1294 = vshrl.u32 %v1293, 7
        %v1295 = vsub.s32 %v1292, %v1294
        %v1296 = vrot.slane %v1282, %v1295
        %v1297 = vcombine.low %v1272, %v1280
        %v1298 = vcombine.high %v1272, %v1280
        %v1300 = vunpack.c.l.s4 1934713408
        %v1301 = vunpack.c.0.s8 %v1300
        %v1302 = vlaneseq
        %v1303 = vshrl.u32 %v1302, 7
        %v1304 = vsub.s32 %v1301, %v1303
        %v1305 = vrot.slane %v1297, %v1304
        %v1307 = vunpack.c.l.s4 1934713408
        %v1308 = vunpack.c.0.s8 %v1307
        %v1309 = vlaneseq
        %v1310 = vshrl.u32 %v1309, 7
        %v1311 = vsub.s32 %v1308, %v1310
        %v1312 = vrot.slane %v1298, %v1311
        %v1313 = vcombine.low %v1289, %v1305
        %v1314 = vcombine.high %v1289, %v1305
        %v1315 = vcombine.low %v1296, %v1312
        %v1316 = vcombine.high %v1296, %v1312
        %1318 = vrot.lane.b32.xlu0 %v1145, 120
        %v1319 = vpop.permute.xlu0 %1318
        %1320 = vrot.lane.b32.xlu0 %v1145, 112
        %v1321 = vpop.permute.xlu0 %1320
        %1322 = vrot.lane.b32.xlu0 %v1145, 104
        %v1323 = vpop.permute.xlu0 %1322
        %1324 = vrot.lane.b32.xlu0 %v1145, 96
        %v1325 = vpop.permute.xlu0 %1324
        %1326 = vrot.lane.b32.xlu0 %v1319, 96
        %v1327 = vpop.permute.xlu0 %1326
        %1328 = vrot.lane.b32.xlu0 %v1321, 96
        %v1329 = vpop.permute.xlu0 %1328
        %1330 = vrot.lane.b32.xlu0 %v1323, 96
        %v1331 = vpop.permute.xlu0 %1330
        %v1336 = vcombine.low %v1325, %v1329
        %v1337 = vcombine.high %v1325, %v1329
        %v1339 = vunpack.c.l.s4 1983009808
        %v1340 = vunpack.c.0.s8 %v1339
        %v1341 = vlaneseq
        %v1342 = vshrl.u32 %v1341, 7
        %v1343 = vsub.s32 %v1340, %v1342
        %v1344 = vrot.slane %v1336, %v1343
        %v1346 = vunpack.c.l.s4 1983009808
        %v1347 = vunpack.c.0.s8 %v1346
        %v1348 = vlaneseq
        %v1349 = vshrl.u32 %v1348, 7
        %v1350 = vsub.s32 %v1347, %v1349
        %v1351 = vrot.slane %v1337, %v1350
        %v1352 = vcombine.low %v1327, %v1331
        %v1353 = vcombine.high %v1327, %v1331
        %v1355 = vunpack.c.l.s4 1983009808
        %v1356 = vunpack.c.0.s8 %v1355
        %v1357 = vlaneseq
        %v1358 = vshrl.u32 %v1357, 7
        %v1359 = vsub.s32 %v1356, %v1358
        %v1360 = vrot.slane %v1352, %v1359
        %v1362 = vunpack.c.l.s4 1983009808
        %v1363 = vunpack.c.0.s8 %v1362
        %v1364 = vlaneseq
        %v1365 = vshrl.u32 %v1364, 7
        %v1366 = vsub.s32 %v1363, %v1365
        %v1367 = vrot.slane %v1353, %v1366
        %v1368 = vcombine.low %v1344, %v1360
        %v1369 = vcombine.high %v1344, %v1360
        %v1371 = vunpack.c.l.s4 1934713408
        %v1372 = vunpack.c.0.s8 %v1371
        %v1373 = vlaneseq
        %v1374 = vshrl.u32 %v1373, 7
        %v1375 = vsub.s32 %v1372, %v1374
        %v1376 = vrot.slane %v1368, %v1375
        %v1378 = vunpack.c.l.s4 1934713408
        %v1379 = vunpack.c.0.s8 %v1378
        %v1380 = vlaneseq
        %v1381 = vshrl.u32 %v1380, 7
        %v1382 = vsub.s32 %v1379, %v1381
        %v1383 = vrot.slane %v1369, %v1382
        %v1384 = vcombine.low %v1351, %v1367
        %v1385 = vcombine.high %v1351, %v1367
        %v1387 = vunpack.c.l.s4 1934713408
        %v1388 = vunpack.c.0.s8 %v1387
        %v1389 = vlaneseq
        %v1390 = vshrl.u32 %v1389, 7
        %v1391 = vsub.s32 %v1388, %v1390
        %v1392 = vrot.slane %v1384, %v1391
        %v1394 = vunpack.c.l.s4 1934713408
        %v1395 = vunpack.c.0.s8 %v1394
        %v1396 = vlaneseq
        %v1397 = vshrl.u32 %v1396, 7
        %v1398 = vsub.s32 %v1395, %v1397
        %v1399 = vrot.slane %v1385, %v1398
        %v1400 = vcombine.high %v1376, 0.0
        %v1401 = vcombine.high %v1383, 0.0
        %v1402 = vcombine.high %v1392, 0.0
        %v1403 = vcombine.high %v1399, 0.0
        %v1404 = vcombine.low %v1376, %v1383
        %v1406 = vunpack.c.l.s4 1983009808
        %v1407 = vunpack.c.0.s8 %v1406
        %v1408 = vlaneseq
        %v1409 = vshrl.u32 %v1408, 7
        %v1410 = vsub.s32 %v1407, %v1409
        %v1411 = vrot.slane %v1404, %v1410
        %v1412 = vcombine.low %v1400, %v1401
        %v1414 = vunpack.c.l.s4 1983009808
        %v1415 = vunpack.c.0.s8 %v1414
        %v1416 = vlaneseq
        %v1417 = vshrl.u32 %v1416, 7
        %v1418 = vsub.s32 %v1415, %v1417
        %v1419 = vrot.slane %v1412, %v1418
        %v1420 = vcombine.low %v1392, %v1399
        %v1422 = vunpack.c.l.s4 1983009808
        %v1423 = vunpack.c.0.s8 %v1422
        %v1424 = vlaneseq
        %v1425 = vshrl.u32 %v1424, 7
        %v1426 = vsub.s32 %v1423, %v1425
        %v1427 = vrot.slane %v1420, %v1426
        %v1428 = vcombine.low %v1402, %v1403
        %v1430 = vunpack.c.l.s4 1983009808
        %v1431 = vunpack.c.0.s8 %v1430
        %v1432 = vlaneseq
        %v1433 = vshrl.u32 %v1432, 7
        %v1434 = vsub.s32 %v1431, %v1433
        %v1435 = vrot.slane %v1428, %v1434
        %v1436 = vcombine.low %v1411, %v1419
        %v1437 = vcombine.high %v1411, %v1419
        %v1439 = vunpack.c.l.s4 1934713408
        %v1440 = vunpack.c.0.s8 %v1439
        %v1441 = vlaneseq
        %v1442 = vshrl.u32 %v1441, 7
        %v1443 = vsub.s32 %v1440, %v1442
        %v1444 = vrot.slane %v1436, %v1443
        %v1446 = vunpack.c.l.s4 1934713408
        %v1447 = vunpack.c.0.s8 %v1446
        %v1448 = vlaneseq
        %v1449 = vshrl.u32 %v1448, 7
        %v1450 = vsub.s32 %v1447, %v1449
        %v1451 = vrot.slane %v1437, %v1450
        %v1452 = vcombine.low %v1427, %v1435
        %v1453 = vcombine.high %v1427, %v1435
        %v1455 = vunpack.c.l.s4 1934713408
        %v1456 = vunpack.c.0.s8 %v1455
        %v1457 = vlaneseq
        %v1458 = vshrl.u32 %v1457, 7
        %v1459 = vsub.s32 %v1456, %v1458
        %v1460 = vrot.slane %v1452, %v1459
        %v1462 = vunpack.c.l.s4 1934713408
        %v1463 = vunpack.c.0.s8 %v1462
        %v1464 = vlaneseq
        %v1465 = vshrl.u32 %v1464, 7
        %v1466 = vsub.s32 %v1463, %v1465
        %v1467 = vrot.slane %v1453, %v1466
        %v1468 = vcombine.low %v1444, %v1460
        %v1469 = vcombine.high %v1444, %v1460
        %v1470 = vcombine.low %v1451, %v1467
        %v1471 = vcombine.high %v1451, %v1467
        %1473 = vrot.lane.b32.xlu0 %v1170, 120
        %v1474 = vpop.permute.xlu0 %1473
        %1475 = vrot.lane.b32.xlu0 %v1170, 112
        %v1476 = vpop.permute.xlu0 %1475
        %1477 = vrot.lane.b32.xlu0 %v1170, 104
        %v1478 = vpop.permute.xlu0 %1477
        %1479 = vrot.lane.b32.xlu0 %v1170, 64
        %v1480 = vpop.permute.xlu0 %1479
        %1481 = vrot.lane.b32.xlu0 %v1474, 64
        %v1482 = vpop.permute.xlu0 %1481
        %1483 = vrot.lane.b32.xlu0 %v1476, 64
        %v1484 = vpop.permute.xlu0 %1483
        %1485 = vrot.lane.b32.xlu0 %v1478, 64
        %v1486 = vpop.permute.xlu0 %1485
        %v1491 = vcombine.low %v1480, %v1484
        %v1492 = vcombine.high %v1480, %v1484
        %v1494 = vunpack.c.l.s4 1983009808
        %v1495 = vunpack.c.0.s8 %v1494
        %v1496 = vlaneseq
        %v1497 = vshrl.u32 %v1496, 7
        %v1498 = vsub.s32 %v1495, %v1497
        %v1499 = vrot.slane %v1491, %v1498
        %v1501 = vunpack.c.l.s4 1983009808
        %v1502 = vunpack.c.0.s8 %v1501
        %v1503 = vlaneseq
        %v1504 = vshrl.u32 %v1503, 7
        %v1505 = vsub.s32 %v1502, %v1504
        %v1506 = vrot.slane %v1492, %v1505
        %v1507 = vcombine.low %v1482, %v1486
        %v1508 = vcombine.high %v1482, %v1486
        %v1510 = vunpack.c.l.s4 1983009808
        %v1511 = vunpack.c.0.s8 %v1510
        %v1512 = vlaneseq
        %v1513 = vshrl.u32 %v1512, 7
        %v1514 = vsub.s32 %v1511, %v1513
        %v1515 = vrot.slane %v1507, %v1514
        %v1517 = vunpack.c.l.s4 1983009808
        %v1518 = vunpack.c.0.s8 %v1517
        %v1519 = vlaneseq
        %v1520 = vshrl.u32 %v1519, 7
        %v1521 = vsub.s32 %v1518, %v1520
        %v1522 = vrot.slane %v1508, %v1521
        %v1523 = vcombine.low %v1499, %v1515
        %v1524 = vcombine.high %v1499, %v1515
        %v1526 = vunpack.c.l.s4 1934713408
        %v1527 = vunpack.c.0.s8 %v1526
        %v1528 = vlaneseq
        %v1529 = vshrl.u32 %v1528, 7
        %v1530 = vsub.s32 %v1527, %v1529
        %v1531 = vrot.slane %v1523, %v1530
        %v1533 = vunpack.c.l.s4 1934713408
        %v1534 = vunpack.c.0.s8 %v1533
        %v1535 = vlaneseq
        %v1536 = vshrl.u32 %v1535, 7
        %v1537 = vsub.s32 %v1534, %v1536
        %v1538 = vrot.slane %v1524, %v1537
        %v1539 = vcombine.low %v1506, %v1522
        %v1540 = vcombine.high %v1506, %v1522
        %v1542 = vunpack.c.l.s4 1934713408
        %v1543 = vunpack.c.0.s8 %v1542
        %v1544 = vlaneseq
        %v1545 = vshrl.u32 %v1544, 7
        %v1546 = vsub.s32 %v1543, %v1545
        %v1547 = vrot.slane %v1539, %v1546
        %v1549 = vunpack.c.l.s4 1934713408
        %v1550 = vunpack.c.0.s8 %v1549
        %v1551 = vlaneseq
        %v1552 = vshrl.u32 %v1551, 7
        %v1553 = vsub.s32 %v1550, %v1552
        %v1554 = vrot.slane %v1540, %v1553
        %v1555 = vcombine.high %v1531, 0.0
        %v1556 = vcombine.high %v1538, 0.0
        %v1557 = vcombine.high %v1547, 0.0
        %v1558 = vcombine.high %v1554, 0.0
        %v1559 = vcombine.low %v1531, %v1538
        %v1561 = vunpack.c.l.s4 1983009808
        %v1562 = vunpack.c.0.s8 %v1561
        %v1563 = vlaneseq
        %v1564 = vshrl.u32 %v1563, 7
        %v1565 = vsub.s32 %v1562, %v1564
        %v1566 = vrot.slane %v1559, %v1565
        %v1567 = vcombine.low %v1555, %v1556
        %v1569 = vunpack.c.l.s4 1983009808
        %v1570 = vunpack.c.0.s8 %v1569
        %v1571 = vlaneseq
        %v1572 = vshrl.u32 %v1571, 7
        %v1573 = vsub.s32 %v1570, %v1572
        %v1574 = vrot.slane %v1567, %v1573
        %v1575 = vcombine.low %v1547, %v1554
        %v1577 = vunpack.c.l.s4 1983009808
        %v1578 = vunpack.c.0.s8 %v1577
        %v1579 = vlaneseq
        %v1580 = vshrl.u32 %v1579, 7
        %v1581 = vsub.s32 %v1578, %v1580
        %v1582 = vrot.slane %v1575, %v1581
        %v1583 = vcombine.low %v1557, %v1558
        %v1585 = vunpack.c.l.s4 1983009808
        %v1586 = vunpack.c.0.s8 %v1585
        %v1587 = vlaneseq
        %v1588 = vshrl.u32 %v1587, 7
        %v1589 = vsub.s32 %v1586, %v1588
        %v1590 = vrot.slane %v1583, %v1589
        %v1591 = vcombine.low %v1566, %v1574
        %v1592 = vcombine.high %v1566, %v1574
        %v1594 = vunpack.c.l.s4 1934713408
        %v1595 = vunpack.c.0.s8 %v1594
        %v1596 = vlaneseq
        %v1597 = vshrl.u32 %v1596, 7
        %v1598 = vsub.s32 %v1595, %v1597
        %v1599 = vrot.slane %v1591, %v1598
        %v1601 = vunpack.c.l.s4 1934713408
        %v1602 = vunpack.c.0.s8 %v1601
        %v1603 = vlaneseq
        %v1604 = vshrl.u32 %v1603, 7
        %v1605 = vsub.s32 %v1602, %v1604
        %v1606 = vrot.slane %v1592, %v1605
        %v1607 = vcombine.low %v1582, %v1590
        %v1608 = vcombine.high %v1582, %v1590
        %v1610 = vunpack.c.l.s4 1934713408
        %v1611 = vunpack.c.0.s8 %v1610
        %v1612 = vlaneseq
        %v1613 = vshrl.u32 %v1612, 7
        %v1614 = vsub.s32 %v1611, %v1613
        %v1615 = vrot.slane %v1607, %v1614
        %v1617 = vunpack.c.l.s4 1934713408
        %v1618 = vunpack.c.0.s8 %v1617
        %v1619 = vlaneseq
        %v1620 = vshrl.u32 %v1619, 7
        %v1621 = vsub.s32 %v1618, %v1620
        %v1622 = vrot.slane %v1608, %v1621
        %v1623 = vcombine.low %v1599, %v1615
        %v1624 = vcombine.high %v1599, %v1615
        %v1625 = vcombine.low %v1606, %v1622
        %v1626 = vcombine.high %v1606, %v1622
        %v1627 = vld [vmem:[%s785] sm:$0x1]
        %vm1628 = vcmask 64512
        %v1630 = vsel %vm1628, %v1313, 0
        %v1633 = vsel %vm1628, %v1468, 0
        %1635 = vmatprep.subr.mxu0 0.0
        %1636 = vmatpush1.xpose.msra.mxu0 0.0
        %1637 = vmatprep.subr.mxu0 0.0
        %1638 = vmatpush1.xpose.msra.mxu0 0.0
        %1639 = vmatprep.subr.mxu0 0.0
        %1640 = vmatpush1.xpose.msra.mxu0 0.0
        %1641 = vmatprep.subr.mxu0 0.0
        %1642 = vmatpush1.xpose.msra.mxu0 0.0
        %1643 = vmatprep.subr.mxu0 0.0
        %1644 = vmatpush1.xpose.msra.mxu0 0.0
        %1645 = vmatprep.subr.mxu0 0.0
        %1646 = vmatpush1.xpose.msra.mxu0 0.0
        %1647 = vmatprep.subr.mxu0 0.0
        %1648 = vmatpush1.xpose.msra.mxu0 0.0
        %1649 = vmatprep.subr.mxu0 0.0
        %1650 = vmatpush1.xpose.msra.mxu0 0.0
        %1651 = vmatprep.subr.mxu0 0.0
        %1652 = vmatpush1.xpose.msra.mxu0 0.0
        %1653 = vmatprep.subr.mxu0 0.0
        %1654 = vmatpush1.xpose.msra.mxu0 0.0
        %1655 = vmatprep.subr.mxu0 0.0
        %1656 = vmatpush1.xpose.msra.mxu0 0.0
        %1657 = vmatprep.subr.mxu0 0.0
        %1658 = vmatpush1.xpose.msra.mxu0 0.0
        %1659 = vmatprep.subr.mxu0 0.0
        %1660 = vmatpush1.xpose.msra.mxu0 0.0
        %1661 = vmatprep.subr.mxu0 0.0
        %1662 = vmatpush1.xpose.msra.mxu0 0.0
        %1663 = vmatprep.subr.mxu0 0.0
        %1664 = vmatpush1.xpose.msra.mxu0 0.0
        %1665 = vmatprep.subr.mxu0 0.0
        %1666 = vmatpush1.xpose.msra.mxu0 %v1633
        %1667 = vmatprep.subr.mxu0 0.0
        %1668 = vmatpush2.xpose.msra.mxu0 0.0
        %1669 = vmatprep.subr.mxu0 0.0
        %1670 = vmatpush2.xpose.msra.mxu0 0.0
        %1671 = vmatprep.subr.mxu0 0.0
        %1672 = vmatpush2.xpose.msra.mxu0 0.0
        %1673 = vmatprep.subr.mxu0 0.0
        %1674 = vmatpush2.xpose.msra.mxu0 0.0
        %1675 = vmatprep.subr.mxu0 0.0
        %1676 = vmatpush2.xpose.msra.mxu0 0.0
        %1677 = vmatprep.subr.mxu0 0.0
        %1678 = vmatpush2.xpose.msra.mxu0 0.0
        %1679 = vmatprep.subr.mxu0 0.0
        %1680 = vmatpush2.xpose.msra.mxu0 0.0
        %1681 = vmatprep.subr.mxu0 0.0
        %1682 = vmatpush2.xpose.msra.mxu0 0.0
        %1683 = vmatprep.subr.mxu0 0.0
        %1684 = vmatpush2.xpose.msra.mxu0 0.0
        %1685 = vmatprep.subr.mxu0 0.0
        %1686 = vmatpush2.xpose.msra.mxu0 0.0
        %1687 = vmatprep.subr.mxu0 0.0
        %1688 = vmatpush2.xpose.msra.mxu0 0.0
        %1689 = vmatprep.subr.mxu0 0.0
        %1690 = vmatpush2.xpose.msra.mxu0 0.0
        %1691 = vmatprep.subr.mxu0 0.0
        %1692 = vmatpush2.xpose.msra.mxu0 0.0
        %1693 = vmatprep.subr.mxu0 0.0
        %1694 = vmatpush2.xpose.msra.mxu0 0.0
        %1695 = vmatprep.subr.mxu0 0.0
        %1696 = vmatpush2.xpose.msra.mxu0 0.0
        %1697 = vmatprep.subr.mxu0 0.0
        %1698 = vmatpush2.xpose.msra.mxu0 0.0
        %1699 = vmatprep.mubr.f32.mxu0 0.0
        %1700 = vmatmul.mubr.f32.gmra.mxu0 %v1630
        %v1701 = vpop.f32.mrf.mxu0
        %v1702 = vadd.f32 0.0, %v1701
        %v1703 = vpop.f32.mrf.mxu0
        %1704 = vdwg.mxu0
        %v1706 = vsel %vm1628, %v1314, 0
        %v1709 = vsel %vm1628, %v1469, 0
        %1711 = vmatprep.subr.mxu0 0.0
        %1712 = vmatpush1.xpose.msra.mxu0 0.0
        %1713 = vmatprep.subr.mxu0 0.0
        %1714 = vmatpush1.xpose.msra.mxu0 0.0
        %1715 = vmatprep.subr.mxu0 0.0
        %1716 = vmatpush1.xpose.msra.mxu0 0.0
        %1717 = vmatprep.subr.mxu0 0.0
        %1718 = vmatpush1.xpose.msra.mxu0 0.0
        %1719 = vmatprep.subr.mxu0 0.0
        %1720 = vmatpush1.xpose.msra.mxu0 0.0
        %1721 = vmatprep.subr.mxu0 0.0
        %1722 = vmatpush1.xpose.msra.mxu0 0.0
        %1723 = vmatprep.subr.mxu0 0.0
        %1724 = vmatpush1.xpose.msra.mxu0 0.0
        %1725 = vmatprep.subr.mxu0 0.0
        %1726 = vmatpush1.xpose.msra.mxu0 0.0
        %1727 = vmatprep.subr.mxu0 0.0
        %1728 = vmatpush1.xpose.msra.mxu0 0.0
        %1729 = vmatprep.subr.mxu0 0.0
        %1730 = vmatpush1.xpose.msra.mxu0 0.0
        %1731 = vmatprep.subr.mxu0 0.0
        %1732 = vmatpush1.xpose.msra.mxu0 0.0
        %1733 = vmatprep.subr.mxu0 0.0
        %1734 = vmatpush1.xpose.msra.mxu0 0.0
        %1735 = vmatprep.subr.mxu0 0.0
        %1736 = vmatpush1.xpose.msra.mxu0 0.0
        %1737 = vmatprep.subr.mxu0 0.0
        %1738 = vmatpush1.xpose.msra.mxu0 0.0
        %1739 = vmatprep.subr.mxu0 0.0
        %1740 = vmatpush1.xpose.msra.mxu0 0.0
        %1741 = vmatprep.subr.mxu0 0.0
        %1742 = vmatpush1.xpose.msra.mxu0 %v1709
        %1743 = vmatprep.subr.mxu0 0.0
        %1744 = vmatpush2.xpose.msra.mxu0 0.0
        %1745 = vmatprep.subr.mxu0 0.0
        %1746 = vmatpush2.xpose.msra.mxu0 0.0
        %1747 = vmatprep.subr.mxu0 0.0
        %1748 = vmatpush2.xpose.msra.mxu0 0.0
        %1749 = vmatprep.subr.mxu0 0.0
        %1750 = vmatpush2.xpose.msra.mxu0 0.0
        %1751 = vmatprep.subr.mxu0 0.0
        %1752 = vmatpush2.xpose.msra.mxu0 0.0
        %1753 = vmatprep.subr.mxu0 0.0
        %1754 = vmatpush2.xpose.msra.mxu0 0.0
        %1755 = vmatprep.subr.mxu0 0.0
        %1756 = vmatpush2.xpose.msra.mxu0 0.0
        %1757 = vmatprep.subr.mxu0 0.0
        %1758 = vmatpush2.xpose.msra.mxu0 0.0
        %1759 = vmatprep.subr.mxu0 0.0
        %1760 = vmatpush2.xpose.msra.mxu0 0.0
        %1761 = vmatprep.subr.mxu0 0.0
        %1762 = vmatpush2.xpose.msra.mxu0 0.0
        %1763 = vmatprep.subr.mxu0 0.0
        %1764 = vmatpush2.xpose.msra.mxu0 0.0
        %1765 = vmatprep.subr.mxu0 0.0
        %1766 = vmatpush2.xpose.msra.mxu0 0.0
        %1767 = vmatprep.subr.mxu0 0.0
        %1768 = vmatpush2.xpose.msra.mxu0 0.0
        %1769 = vmatprep.subr.mxu0 0.0
        %1770 = vmatpush2.xpose.msra.mxu0 0.0
        %1771 = vmatprep.subr.mxu0 0.0
        %1772 = vmatpush2.xpose.msra.mxu0 0.0
        %1773 = vmatprep.subr.mxu0 0.0
        %1774 = vmatpush2.xpose.msra.mxu0 0.0
        %1775 = vmatprep.mubr.f32.mxu0 0.0
        %1776 = vmatmul.mubr.f32.gmra.mxu0 %v1706
        %v1777 = vpop.f32.mrf.mxu0
        %v1778 = vadd.f32 0.0, %v1777
        %v1779 = vpop.f32.mrf.mxu0
        %1780 = vdwg.mxu0
        %v1782 = vsel %vm1628, %v1315, 0
        %v1785 = vsel %vm1628, %v1470, 0
        %1787 = vmatprep.subr.mxu0 0.0
        %1788 = vmatpush1.xpose.msra.mxu0 0.0
        %1789 = vmatprep.subr.mxu0 0.0
        %1790 = vmatpush1.xpose.msra.mxu0 0.0
        %1791 = vmatprep.subr.mxu0 0.0
        %1792 = vmatpush1.xpose.msra.mxu0 0.0
        %1793 = vmatprep.subr.mxu0 0.0
        %1794 = vmatpush1.xpose.msra.mxu0 0.0
        %1795 = vmatprep.subr.mxu0 0.0
        %1796 = vmatpush1.xpose.msra.mxu0 0.0
        %1797 = vmatprep.subr.mxu0 0.0
        %1798 = vmatpush1.xpose.msra.mxu0 0.0
        %1799 = vmatprep.subr.mxu0 0.0
        %1800 = vmatpush1.xpose.msra.mxu0 0.0
        %1801 = vmatprep.subr.mxu0 0.0
        %1802 = vmatpush1.xpose.msra.mxu0 0.0
        %1803 = vmatprep.subr.mxu0 0.0
        %1804 = vmatpush1.xpose.msra.mxu0 0.0
        %1805 = vmatprep.subr.mxu0 0.0
        %1806 = vmatpush1.xpose.msra.mxu0 0.0
        %1807 = vmatprep.subr.mxu0 0.0
        %1808 = vmatpush1.xpose.msra.mxu0 0.0
        %1809 = vmatprep.subr.mxu0 0.0
        %1810 = vmatpush1.xpose.msra.mxu0 0.0
        %1811 = vmatprep.subr.mxu0 0.0
        %1812 = vmatpush1.xpose.msra.mxu0 0.0
        %1813 = vmatprep.subr.mxu0 0.0
        %1814 = vmatpush1.xpose.msra.mxu0 0.0
        %1815 = vmatprep.subr.mxu0 0.0
        %1816 = vmatpush1.xpose.msra.mxu0 0.0
        %1817 = vmatprep.subr.mxu0 0.0
        %1818 = vmatpush1.xpose.msra.mxu0 %v1785
        %1819 = vmatprep.subr.mxu0 0.0
        %1820 = vmatpush2.xpose.msra.mxu0 0.0
        %1821 = vmatprep.subr.mxu0 0.0
        %1822 = vmatpush2.xpose.msra.mxu0 0.0
        %1823 = vmatprep.subr.mxu0 0.0
        %1824 = vmatpush2.xpose.msra.mxu0 0.0
        %1825 = vmatprep.subr.mxu0 0.0
        %1826 = vmatpush2.xpose.msra.mxu0 0.0
        %1827 = vmatprep.subr.mxu0 0.0
        %1828 = vmatpush2.xpose.msra.mxu0 0.0
        %1829 = vmatprep.subr.mxu0 0.0
        %1830 = vmatpush2.xpose.msra.mxu0 0.0
        %1831 = vmatprep.subr.mxu0 0.0
        %1832 = vmatpush2.xpose.msra.mxu0 0.0
        %1833 = vmatprep.subr.mxu0 0.0
        %1834 = vmatpush2.xpose.msra.mxu0 0.0
        %1835 = vmatprep.subr.mxu0 0.0
        %1836 = vmatpush2.xpose.msra.mxu0 0.0
        %1837 = vmatprep.subr.mxu0 0.0
        %1838 = vmatpush2.xpose.msra.mxu0 0.0
        %1839 = vmatprep.subr.mxu0 0.0
        %1840 = vmatpush2.xpose.msra.mxu0 0.0
        %1841 = vmatprep.subr.mxu0 0.0
        %1842 = vmatpush2.xpose.msra.mxu0 0.0
        %1843 = vmatprep.subr.mxu0 0.0
        %1844 = vmatpush2.xpose.msra.mxu0 0.0
        %1845 = vmatprep.subr.mxu0 0.0
        %1846 = vmatpush2.xpose.msra.mxu0 0.0
        %1847 = vmatprep.subr.mxu0 0.0
        %1848 = vmatpush2.xpose.msra.mxu0 0.0
        %1849 = vmatprep.subr.mxu0 0.0
        %1850 = vmatpush2.xpose.msra.mxu0 0.0
        %1851 = vmatprep.mubr.f32.mxu0 0.0
        %1852 = vmatmul.mubr.f32.gmra.mxu0 %v1782
        %v1853 = vpop.f32.mrf.mxu0
        %v1854 = vadd.f32 0.0, %v1853
        %v1855 = vpop.f32.mrf.mxu0
        %1856 = vdwg.mxu0
        %v1858 = vsel %vm1628, %v1316, 0
        %v1861 = vsel %vm1628, %v1471, 0
        %1863 = vmatprep.subr.mxu0 0.0
        %1864 = vmatpush1.xpose.msra.mxu0 0.0
        %1865 = vmatprep.subr.mxu0 0.0
        %1866 = vmatpush1.xpose.msra.mxu0 0.0
        %1867 = vmatprep.subr.mxu0 0.0
        %1868 = vmatpush1.xpose.msra.mxu0 0.0
        %1869 = vmatprep.subr.mxu0 0.0
        %1870 = vmatpush1.xpose.msra.mxu0 0.0
        %1871 = vmatprep.subr.mxu0 0.0
        %1872 = vmatpush1.xpose.msra.mxu0 0.0
        %1873 = vmatprep.subr.mxu0 0.0
        %1874 = vmatpush1.xpose.msra.mxu0 0.0
        %1875 = vmatprep.subr.mxu0 0.0
        %1876 = vmatpush1.xpose.msra.mxu0 0.0
        %1877 = vmatprep.subr.mxu0 0.0
        %1878 = vmatpush1.xpose.msra.mxu0 0.0
        %1879 = vmatprep.subr.mxu0 0.0
        %1880 = vmatpush1.xpose.msra.mxu0 0.0
        %1881 = vmatprep.subr.mxu0 0.0
        %1882 = vmatpush1.xpose.msra.mxu0 0.0
        %1883 = vmatprep.subr.mxu0 0.0
        %1884 = vmatpush1.xpose.msra.mxu0 0.0
        %1885 = vmatprep.subr.mxu0 0.0
        %1886 = vmatpush1.xpose.msra.mxu0 0.0
        %1887 = vmatprep.subr.mxu0 0.0
        %1888 = vmatpush1.xpose.msra.mxu0 0.0
        %1889 = vmatprep.subr.mxu0 0.0
        %1890 = vmatpush1.xpose.msra.mxu0 0.0
        %1891 = vmatprep.subr.mxu0 0.0
        %1892 = vmatpush1.xpose.msra.mxu0 0.0
        %1893 = vmatprep.subr.mxu0 0.0
        %1894 = vmatpush1.xpose.msra.mxu0 %v1861
        %1895 = vmatprep.subr.mxu0 0.0
        %1896 = vmatpush2.xpose.msra.mxu0 0.0
        %1897 = vmatprep.subr.mxu0 0.0
        %1898 = vmatpush2.xpose.msra.mxu0 0.0
        %1899 = vmatprep.subr.mxu0 0.0
        %1900 = vmatpush2.xpose.msra.mxu0 0.0
        %1901 = vmatprep.subr.mxu0 0.0
        %1902 = vmatpush2.xpose.msra.mxu0 0.0
        %1903 = vmatprep.subr.mxu0 0.0
        %1904 = vmatpush2.xpose.msra.mxu0 0.0
        %1905 = vmatprep.subr.mxu0 0.0
        %1906 = vmatpush2.xpose.msra.mxu0 0.0
        %1907 = vmatprep.subr.mxu0 0.0
        %1908 = vmatpush2.xpose.msra.mxu0 0.0
        %1909 = vmatprep.subr.mxu0 0.0
        %1910 = vmatpush2.xpose.msra.mxu0 0.0
        %1911 = vmatprep.subr.mxu0 0.0
        %1912 = vmatpush2.xpose.msra.mxu0 0.0
        %1913 = vmatprep.subr.mxu0 0.0
        %1914 = vmatpush2.xpose.msra.mxu0 0.0
        %1915 = vmatprep.subr.mxu0 0.0
        %1916 = vmatpush2.xpose.msra.mxu0 0.0
        %1917 = vmatprep.subr.mxu0 0.0
        %1918 = vmatpush2.xpose.msra.mxu0 0.0
        %1919 = vmatprep.subr.mxu0 0.0
        %1920 = vmatpush2.xpose.msra.mxu0 0.0
        %1921 = vmatprep.subr.mxu0 0.0
        %1922 = vmatpush2.xpose.msra.mxu0 0.0
        %1923 = vmatprep.subr.mxu0 0.0
        %1924 = vmatpush2.xpose.msra.mxu0 0.0
        %1925 = vmatprep.subr.mxu0 0.0
        %1926 = vmatpush2.xpose.msra.mxu0 0.0
        %1927 = vmatprep.mubr.f32.mxu0 0.0
        %1928 = vmatmul.mubr.f32.gmra.mxu0 %v1858
        %v1929 = vpop.f32.mrf.mxu0
        %v1930 = vadd.f32 0.0, %v1929
        %v1931 = vpop.f32.mrf.mxu0
        %1932 = vdwg.mxu0
        %v1933 = vmul.f32 %v1702, 0.35355338
        %v1934 = vmul.f32 %v1778, 0.35355338
        %v1935 = vmul.f32 %v1854, 0.35355338
        %v1936 = vmul.f32 %v1930, 0.35355338
        %v1938 = vlaneseq
        %v1939 = vshrl.u32 %v1938, 7
        %v1940 = vsub.s32 0, %v1939
        %v1941 = vrot.slane %v1627, %v1940
        %v1943 = vadd.f32 %v1933, %v1941
        %v1944 = vadd.f32 %v1934, %v1941
        %v1945 = vadd.f32 %v1935, %v1941
        %v1946 = vadd.f32 %v1936, %v1941
        %v1947 = vsel %vm1628, %v1943, -inf
        %1948 = vmax.xlane.f32.xlu0 %v1947
        %v1949 = vpop.xlane.xlu0 %1948
        %v1950 = vsel %vm1628, %v1944, -inf
        %1951 = vmax.xlane.f32.xlu0 %v1950
        %v1952 = vpop.xlane.xlu0 %1951
        %v1953 = vsel %vm1628, %v1945, -inf
        %1954 = vmax.xlane.f32.xlu0 %v1953
        %v1955 = vpop.xlane.xlu0 %1954
        %v1956 = vsel %vm1628, %v1946, -inf
        %1957 = vmax.xlane.f32.xlu0 %v1956
        %v1958 = vpop.xlane.xlu0 %1957
        %v1959 = vsub.f32 %v1943, %v1949
        %v1960 = vsub.f32 %v1944, %v1952
        %v1961 = vsub.f32 %v1945, %v1955
        %v1962 = vsub.f32 %v1946, %v1958
        %v1963 = vmul.f32 %v1959, 1.442695
        %v1964 = vpow.pop %v1963
        %v1965 = vmul.f32 %v1960, 1.442695
        %v1966 = vpow.pop %v1965
        %v1967 = vmul.f32 %v1961, 1.442695
        %v1968 = vpow.pop %v1967
        %v1969 = vmul.f32 %v1962, 1.442695
        %v1970 = vpow.pop %v1969
        %v1971 = vsel %vm1628, %v1964, 0.0
        %1972 = vadd.xlane.f32.xlu0 %v1971
        %v1973 = vpop.xlane.xlu0 %1972
        %v1974 = vsel %vm1628, %v1966, 0.0
        %1975 = vadd.xlane.f32.xlu0 %v1974
        %v1976 = vpop.xlane.xlu0 %1975
        %v1977 = vsel %vm1628, %v1968, 0.0
        %1978 = vadd.xlane.f32.xlu0 %v1977
        %v1979 = vpop.xlane.xlu0 %1978
        %v1980 = vsel %vm1628, %v1970, 0.0
        %1981 = vadd.xlane.f32.xlu0 %v1980
        %v1982 = vpop.xlane.xlu0 %1981
        %v1983 = vrcp.pop %v1973
        %v1984 = vrcp.pop %v1976
        %v1985 = vrcp.pop %v1979
        %v1986 = vrcp.pop %v1982
        %v1987 = vmul.f32 %v1964, %v1983
        %v1988 = vmul.f32 %v1966, %v1984
        %v1989 = vmul.f32 %v1968, %v1985
        %v1990 = vmul.f32 %v1970, %v1986
        %v1992 = vsel %vm1628, %v1987, 0
        %1994 = vmatprep.subr.mxu0 0.0
        %1995 = vmatpush1.msra.mxu0 0.0
        %1996 = vmatprep.subr.mxu0 0.0
        %1997 = vmatpush1.msra.mxu0 0.0
        %1998 = vmatprep.subr.mxu0 0.0
        %1999 = vmatpush1.msra.mxu0 0.0
        %2000 = vmatprep.subr.mxu0 0.0
        %2001 = vmatpush1.msra.mxu0 0.0
        %2002 = vmatprep.subr.mxu0 0.0
        %2003 = vmatpush1.msra.mxu0 0.0
        %2004 = vmatprep.subr.mxu0 0.0
        %2005 = vmatpush1.msra.mxu0 0.0
        %2006 = vmatprep.subr.mxu0 0.0
        %2007 = vmatpush1.msra.mxu0 0.0
        %2008 = vmatprep.subr.mxu0 0.0
        %2009 = vmatpush1.msra.mxu0 0.0
        %2010 = vmatprep.subr.mxu0 0.0
        %2011 = vmatpush1.msra.mxu0 0.0
        %2012 = vmatprep.subr.mxu0 0.0
        %2013 = vmatpush1.msra.mxu0 0.0
        %2014 = vmatprep.subr.mxu0 0.0
        %2015 = vmatpush1.msra.mxu0 0.0
        %2016 = vmatprep.subr.mxu0 0.0
        %2017 = vmatpush1.msra.mxu0 0.0
        %2018 = vmatprep.subr.mxu0 0.0
        %2019 = vmatpush1.msra.mxu0 0.0
        %2020 = vmatprep.subr.mxu0 0.0
        %2021 = vmatpush1.msra.mxu0 0.0
        %2022 = vmatprep.subr.mxu0 0.0
        %2023 = vmatpush1.msra.mxu0 0.0
        %2024 = vmatprep.subr.mxu0 0.0
        %2025 = vmatpush1.msra.mxu0 %v1623
        %2026 = vmatprep.subr.mxu0 0.0
        %2027 = vmatpush2.msra.mxu0 0.0
        %2028 = vmatprep.subr.mxu0 0.0
        %2029 = vmatpush2.msra.mxu0 0.0
        %2030 = vmatprep.subr.mxu0 0.0
        %2031 = vmatpush2.msra.mxu0 0.0
        %2032 = vmatprep.subr.mxu0 0.0
        %2033 = vmatpush2.msra.mxu0 0.0
        %2034 = vmatprep.subr.mxu0 0.0
        %2035 = vmatpush2.msra.mxu0 0.0
        %2036 = vmatprep.subr.mxu0 0.0
        %2037 = vmatpush2.msra.mxu0 0.0
        %2038 = vmatprep.subr.mxu0 0.0
        %2039 = vmatpush2.msra.mxu0 0.0
        %2040 = vmatprep.subr.mxu0 0.0
        %2041 = vmatpush2.msra.mxu0 0.0
        %2042 = vmatprep.subr.mxu0 0.0
        %2043 = vmatpush2.msra.mxu0 0.0
        %2044 = vmatprep.subr.mxu0 0.0
        %2045 = vmatpush2.msra.mxu0 0.0
        %2046 = vmatprep.subr.mxu0 0.0
        %2047 = vmatpush2.msra.mxu0 0.0
        %2048 = vmatprep.subr.mxu0 0.0
        %2049 = vmatpush2.msra.mxu0 0.0
        %2050 = vmatprep.subr.mxu0 0.0
        %2051 = vmatpush2.msra.mxu0 0.0
        %2052 = vmatprep.subr.mxu0 0.0
        %2053 = vmatpush2.msra.mxu0 0.0
        %2054 = vmatprep.subr.mxu0 0.0
        %2055 = vmatpush2.msra.mxu0 0.0
        %2056 = vmatprep.subr.mxu0 0.0
        %2057 = vmatpush2.msra.mxu0 0.0
        %2058 = vmatprep.mubr.f32.mxu0 0.0
        %2059 = vmatmul.mubr.f32.gmra.mxu0 %v1992
        %v2060 = vpop.f32.mrf.mxu0
        %v2061 = vadd.f32 0.0, %v2060
        %v2062 = vpop.f32.mrf.mxu0
        %2063 = vdwg.mxu0
        %v2065 = vsel %vm1628, %v1988, 0
        %2067 = vmatprep.subr.mxu0 0.0
        %2068 = vmatpush1.msra.mxu0 0.0
        %2069 = vmatprep.subr.mxu0 0.0
        %2070 = vmatpush1.msra.mxu0 0.0
        %2071 = vmatprep.subr.mxu0 0.0
        %2072 = vmatpush1.msra.mxu0 0.0
        %2073 = vmatprep.subr.mxu0 0.0
        %2074 = vmatpush1.msra.mxu0 0.0
        %2075 = vmatprep.subr.mxu0 0.0
        %2076 = vmatpush1.msra.mxu0 0.0
        %2077 = vmatprep.subr.mxu0 0.0
        %2078 = vmatpush1.msra.mxu0 0.0
        %2079 = vmatprep.subr.mxu0 0.0
        %2080 = vmatpush1.msra.mxu0 0.0
        %2081 = vmatprep.subr.mxu0 0.0
        %2082 = vmatpush1.msra.mxu0 0.0
        %2083 = vmatprep.subr.mxu0 0.0
        %2084 = vmatpush1.msra.mxu0 0.0
        %2085 = vmatprep.subr.mxu0 0.0
        %2086 = vmatpush1.msra.mxu0 0.0
        %2087 = vmatprep.subr.mxu0 0.0
        %2088 = vmatpush1.msra.mxu0 0.0
        %2089 = vmatprep.subr.mxu0 0.0
        %2090 = vmatpush1.msra.mxu0 0.0
        %2091 = vmatprep.subr.mxu0 0.0
        %2092 = vmatpush1.msra.mxu0 0.0
        %2093 = vmatprep.subr.mxu0 0.0
        %2094 = vmatpush1.msra.mxu0 0.0
        %2095 = vmatprep.subr.mxu0 0.0
        %2096 = vmatpush1.msra.mxu0 0.0
        %2097 = vmatprep.subr.mxu0 0.0
        %2098 = vmatpush1.msra.mxu0 %v1624
        %2099 = vmatprep.subr.mxu0 0.0
        %2100 = vmatpush2.msra.mxu0 0.0
        %2101 = vmatprep.subr.mxu0 0.0
        %2102 = vmatpush2.msra.mxu0 0.0
        %2103 = vmatprep.subr.mxu0 0.0
        %2104 = vmatpush2.msra.mxu0 0.0
        %2105 = vmatprep.subr.mxu0 0.0
        %2106 = vmatpush2.msra.mxu0 0.0
        %2107 = vmatprep.subr.mxu0 0.0
        %2108 = vmatpush2.msra.mxu0 0.0
        %2109 = vmatprep.subr.mxu0 0.0
        %2110 = vmatpush2.msra.mxu0 0.0
        %2111 = vmatprep.subr.mxu0 0.0
        %2112 = vmatpush2.msra.mxu0 0.0
        %2113 = vmatprep.subr.mxu0 0.0
        %2114 = vmatpush2.msra.mxu0 0.0
        %2115 = vmatprep.subr.mxu0 0.0
        %2116 = vmatpush2.msra.mxu0 0.0
        %2117 = vmatprep.subr.mxu0 0.0
        %2118 = vmatpush2.msra.mxu0 0.0
        %2119 = vmatprep.subr.mxu0 0.0
        %2120 = vmatpush2.msra.mxu0 0.0
        %2121 = vmatprep.subr.mxu0 0.0
        %2122 = vmatpush2.msra.mxu0 0.0
        %2123 = vmatprep.subr.mxu0 0.0
        %2124 = vmatpush2.msra.mxu0 0.0
        %2125 = vmatprep.subr.mxu0 0.0
        %2126 = vmatpush2.msra.mxu0 0.0
        %2127 = vmatprep.subr.mxu0 0.0
        %2128 = vmatpush2.msra.mxu0 0.0
        %2129 = vmatprep.subr.mxu0 0.0
        %2130 = vmatpush2.msra.mxu0 0.0
        %2131 = vmatprep.mubr.f32.mxu0 0.0
        %2132 = vmatmul.mubr.f32.gmra.mxu0 %v2065
        %v2133 = vpop.f32.mrf.mxu0
        %v2134 = vadd.f32 0.0, %v2133
        %v2135 = vpop.f32.mrf.mxu0
        %2136 = vdwg.mxu0
        %v2138 = vsel %vm1628, %v1989, 0
        %2140 = vmatprep.subr.mxu0 0.0
        %2141 = vmatpush1.msra.mxu0 0.0
        %2142 = vmatprep.subr.mxu0 0.0
        %2143 = vmatpush1.msra.mxu0 0.0
        %2144 = vmatprep.subr.mxu0 0.0
        %2145 = vmatpush1.msra.mxu0 0.0
        %2146 = vmatprep.subr.mxu0 0.0
        %2147 = vmatpush1.msra.mxu0 0.0
        %2148 = vmatprep.subr.mxu0 0.0
        %2149 = vmatpush1.msra.mxu0 0.0
        %2150 = vmatprep.subr.mxu0 0.0
        %2151 = vmatpush1.msra.mxu0 0.0
        %2152 = vmatprep.subr.mxu0 0.0
        %2153 = vmatpush1.msra.mxu0 0.0
        %2154 = vmatprep.subr.mxu0 0.0
        %2155 = vmatpush1.msra.mxu0 0.0
        %2156 = vmatprep.subr.mxu0 0.0
        %2157 = vmatpush1.msra.mxu0 0.0
        %2158 = vmatprep.subr.mxu0 0.0
        %2159 = vmatpush1.msra.mxu0 0.0
        %2160 = vmatprep.subr.mxu0 0.0
        %2161 = vmatpush1.msra.mxu0 0.0
        %2162 = vmatprep.subr.mxu0 0.0
        %2163 = vmatpush1.msra.mxu0 0.0
        %2164 = vmatprep.subr.mxu0 0.0
        %2165 = vmatpush1.msra.mxu0 0.0
        %2166 = vmatprep.subr.mxu0 0.0
        %2167 = vmatpush1.msra.mxu0 0.0
        %2168 = vmatprep.subr.mxu0 0.0
        %2169 = vmatpush1.msra.mxu0 0.0
        %2170 = vmatprep.subr.mxu0 0.0
        %2171 = vmatpush1.msra.mxu0 %v1625
        %2172 = vmatprep.subr.mxu0 0.0
        %2173 = vmatpush2.msra.mxu0 0.0
        %2174 = vmatprep.subr.mxu0 0.0
        %2175 = vmatpush2.msra.mxu0 0.0
        %2176 = vmatprep.subr.mxu0 0.0
        %2177 = vmatpush2.msra.mxu0 0.0
        %2178 = vmatprep.subr.mxu0 0.0
        %2179 = vmatpush2.msra.mxu0 0.0
        %2180 = vmatprep.subr.mxu0 0.0
        %2181 = vmatpush2.msra.mxu0 0.0
        %2182 = vmatprep.subr.mxu0 0.0
        %2183 = vmatpush2.msra.mxu0 0.0
        %2184 = vmatprep.subr.mxu0 0.0
        %2185 = vmatpush2.msra.mxu0 0.0
        %2186 = vmatprep.subr.mxu0 0.0
        %2187 = vmatpush2.msra.mxu0 0.0
        %2188 = vmatprep.subr.mxu0 0.0
        %2189 = vmatpush2.msra.mxu0 0.0
        %2190 = vmatprep.subr.mxu0 0.0
        %2191 = vmatpush2.msra.mxu0 0.0
        %2192 = vmatprep.subr.mxu0 0.0
        %2193 = vmatpush2.msra.mxu0 0.0
        %2194 = vmatprep.subr.mxu0 0.0
        %2195 = vmatpush2.msra.mxu0 0.0
        %2196 = vmatprep.subr.mxu0 0.0
        %2197 = vmatpush2.msra.mxu0 0.0
        %2198 = vmatprep.subr.mxu0 0.0
        %2199 = vmatpush2.msra.mxu0 0.0
        %2200 = vmatprep.subr.mxu0 0.0
        %2201 = vmatpush2.msra.mxu0 0.0
        %2202 = vmatprep.subr.mxu0 0.0
        %2203 = vmatpush2.msra.mxu0 0.0
        %2204 = vmatprep.mubr.f32.mxu0 0.0
        %2205 = vmatmul.mubr.f32.gmra.mxu0 %v2138
        %v2206 = vpop.f32.mrf.mxu0
        %v2207 = vadd.f32 0.0, %v2206
        %v2208 = vpop.f32.mrf.mxu0
        %2209 = vdwg.mxu0
        %v2211 = vsel %vm1628, %v1990, 0
        %2213 = vmatprep.subr.mxu0 0.0
        %2214 = vmatpush1.msra.mxu0 0.0
        %2215 = vmatprep.subr.mxu0 0.0
        %2216 = vmatpush1.msra.mxu0 0.0
        %2217 = vmatprep.subr.mxu0 0.0
        %2218 = vmatpush1.msra.mxu0 0.0
        %2219 = vmatprep.subr.mxu0 0.0
        %2220 = vmatpush1.msra.mxu0 0.0
        %2221 = vmatprep.subr.mxu0 0.0
        %2222 = vmatpush1.msra.mxu0 0.0
        %2223 = vmatprep.subr.mxu0 0.0
        %2224 = vmatpush1.msra.mxu0 0.0
        %2225 = vmatprep.subr.mxu0 0.0
        %2226 = vmatpush1.msra.mxu0 0.0
        %2227 = vmatprep.subr.mxu0 0.0
        %2228 = vmatpush1.msra.mxu0 0.0
        %2229 = vmatprep.subr.mxu0 0.0
        %2230 = vmatpush1.msra.mxu0 0.0
        %2231 = vmatprep.subr.mxu0 0.0
        %2232 = vmatpush1.msra.mxu0 0.0
        %2233 = vmatprep.subr.mxu0 0.0
        %2234 = vmatpush1.msra.mxu0 0.0
        %2235 = vmatprep.subr.mxu0 0.0
        %2236 = vmatpush1.msra.mxu0 0.0
        %2237 = vmatprep.subr.mxu0 0.0
        %2238 = vmatpush1.msra.mxu0 0.0
        %2239 = vmatprep.subr.mxu0 0.0
        %2240 = vmatpush1.msra.mxu0 0.0
        %2241 = vmatprep.subr.mxu0 0.0
        %2242 = vmatpush1.msra.mxu0 0.0
        %2243 = vmatprep.subr.mxu0 0.0
        %2244 = vmatpush1.msra.mxu0 %v1626
        %2245 = vmatprep.subr.mxu0 0.0
        %2246 = vmatpush2.msra.mxu0 0.0
        %2247 = vmatprep.subr.mxu0 0.0
        %2248 = vmatpush2.msra.mxu0 0.0
        %2249 = vmatprep.subr.mxu0 0.0
        %2250 = vmatpush2.msra.mxu0 0.0
        %2251 = vmatprep.subr.mxu0 0.0
        %2252 = vmatpush2.msra.mxu0 0.0
        %2253 = vmatprep.subr.mxu0 0.0
        %2254 = vmatpush2.msra.mxu0 0.0
        %2255 = vmatprep.subr.mxu0 0.0
        %2256 = vmatpush2.msra.mxu0 0.0
        %2257 = vmatprep.subr.mxu0 0.0
        %2258 = vmatpush2.msra.mxu0 0.0
        %2259 = vmatprep.subr.mxu0 0.0
        %2260 = vmatpush2.msra.mxu0 0.0
        %2261 = vmatprep.subr.mxu0 0.0
        %2262 = vmatpush2.msra.mxu0 0.0
        %2263 = vmatprep.subr.mxu0 0.0
        %2264 = vmatpush2.msra.mxu0 0.0
        %2265 = vmatprep.subr.mxu0 0.0
        %2266 = vmatpush2.msra.mxu0 0.0
        %2267 = vmatprep.subr.mxu0 0.0
        %2268 = vmatpush2.msra.mxu0 0.0
        %2269 = vmatprep.subr.mxu0 0.0
        %2270 = vmatpush2.msra.mxu0 0.0
        %2271 = vmatprep.subr.mxu0 0.0
        %2272 = vmatpush2.msra.mxu0 0.0
        %2273 = vmatprep.subr.mxu0 0.0
        %2274 = vmatpush2.msra.mxu0 0.0
        %2275 = vmatprep.subr.mxu0 0.0
        %2276 = vmatpush2.msra.mxu0 0.0
        %2277 = vmatprep.mubr.f32.mxu0 0.0
        %2278 = vmatmul.mubr.f32.gmra.mxu0 %v2211
        %v2279 = vpop.f32.mrf.mxu0
        %v2280 = vadd.f32 0.0, %v2279
        %v2281 = vpop.f32.mrf.mxu0
        %2282 = vdwg.mxu0
        %v2283 = vcombine.low %v2061, %v2207
        %v2284 = vcombine.high %v2061, %v2207
        %v2286 = vunpack.c.l.s4 1983009808
        %v2287 = vunpack.c.0.s8 %v2286
        %v2288 = vlaneseq
        %v2289 = vshrl.u32 %v2288, 7
        %v2290 = vsub.s32 %v2287, %v2289
        %v2291 = vrot.slane %v2283, %v2290
        %v2293 = vunpack.c.l.s4 1983009808
        %v2294 = vunpack.c.0.s8 %v2293
        %v2295 = vlaneseq
        %v2296 = vshrl.u32 %v2295, 7
        %v2297 = vsub.s32 %v2294, %v2296
        %v2298 = vrot.slane %v2284, %v2297
        %v2299 = vcombine.low %v2134, %v2280
        %v2300 = vcombine.high %v2134, %v2280
        %v2302 = vunpack.c.l.s4 1983009808
        %v2303 = vunpack.c.0.s8 %v2302
        %v2304 = vlaneseq
        %v2305 = vshrl.u32 %v2304, 7
        %v2306 = vsub.s32 %v2303, %v2305
        %v2307 = vrot.slane %v2299, %v2306
        %v2309 = vunpack.c.l.s4 1983009808
        %v2310 = vunpack.c.0.s8 %v2309
        %v2311 = vlaneseq
        %v2312 = vshrl.u32 %v2311, 7
        %v2313 = vsub.s32 %v2310, %v2312
        %v2314 = vrot.slane %v2300, %v2313
        %v2315 = vcombine.low %v2291, %v2307
        %v2316 = vcombine.high %v2291, %v2307
        %v2318 = vunpack.c.l.s4 1934713408
        %v2319 = vunpack.c.0.s8 %v2318
        %v2320 = vlaneseq
        %v2321 = vshrl.u32 %v2320, 7
        %v2322 = vsub.s32 %v2319, %v2321
        %v2323 = vrot.slane %v2315, %v2322
        %v2325 = vunpack.c.l.s4 1934713408
        %v2326 = vunpack.c.0.s8 %v2325
        %v2327 = vlaneseq
        %v2328 = vshrl.u32 %v2327, 7
        %v2329 = vsub.s32 %v2326, %v2328
        %v2330 = vrot.slane %v2316, %v2329
        %v2331 = vcombine.low %v2298, %v2314
        %v2332 = vcombine.high %v2298, %v2314
        %v2334 = vunpack.c.l.s4 1934713408
        %v2335 = vunpack.c.0.s8 %v2334
        %v2336 = vlaneseq
        %v2337 = vshrl.u32 %v2336, 7
        %v2338 = vsub.s32 %v2335, %v2337
        %v2339 = vrot.slane %v2331, %v2338
        %v2341 = vunpack.c.l.s4 1934713408
        %v2342 = vunpack.c.0.s8 %v2341
        %v2343 = vlaneseq
        %v2344 = vshrl.u32 %v2343, 7
        %v2345 = vsub.s32 %v2342, %v2344
        %v2346 = vrot.slane %v2332, %v2345
        %v2347 = vcombine.high %v2323, 0.0
        %v2348 = vcombine.high %v2330, 0.0
        %v2349 = vcombine.high %v2339, 0.0
        %v2350 = vcombine.high %v2346, 0.0
        %v2351 = vcombine.low %v2323, %v2330
        %v2353 = vunpack.c.l.s4 1983009808
        %v2354 = vunpack.c.0.s8 %v2353
        %v2355 = vlaneseq
        %v2356 = vshrl.u32 %v2355, 7
        %v2357 = vsub.s32 %v2354, %v2356
        %v2358 = vrot.slane %v2351, %v2357
        %v2359 = vcombine.low %v2347, %v2348
        %v2361 = vunpack.c.l.s4 1983009808
        %v2362 = vunpack.c.0.s8 %v2361
        %v2363 = vlaneseq
        %v2364 = vshrl.u32 %v2363, 7
        %v2365 = vsub.s32 %v2362, %v2364
        %v2366 = vrot.slane %v2359, %v2365
        %v2367 = vcombine.low %v2339, %v2346
        %v2369 = vunpack.c.l.s4 1983009808
        %v2370 = vunpack.c.0.s8 %v2369
        %v2371 = vlaneseq
        %v2372 = vshrl.u32 %v2371, 7
        %v2373 = vsub.s32 %v2370, %v2372
        %v2374 = vrot.slane %v2367, %v2373
        %v2375 = vcombine.low %v2349, %v2350
        %v2377 = vunpack.c.l.s4 1983009808
        %v2378 = vunpack.c.0.s8 %v2377
        %v2379 = vlaneseq
        %v2380 = vshrl.u32 %v2379, 7
        %v2381 = vsub.s32 %v2378, %v2380
        %v2382 = vrot.slane %v2375, %v2381
        %v2383 = vcombine.low %v2358, %v2366
        %v2384 = vcombine.high %v2358, %v2366
        %v2386 = vunpack.c.l.s4 1934713408
        %v2387 = vunpack.c.0.s8 %v2386
        %v2388 = vlaneseq
        %v2389 = vshrl.u32 %v2388, 7
        %v2390 = vsub.s32 %v2387, %v2389
        %v2391 = vrot.slane %v2383, %v2390
        %v2393 = vunpack.c.l.s4 1934713408
        %v2394 = vunpack.c.0.s8 %v2393
        %v2395 = vlaneseq
        %v2396 = vshrl.u32 %v2395, 7
        %v2397 = vsub.s32 %v2394, %v2396
        %v2398 = vrot.slane %v2384, %v2397
        %v2399 = vcombine.low %v2374, %v2382
        %v2400 = vcombine.high %v2374, %v2382
        %v2402 = vunpack.c.l.s4 1934713408
        %v2403 = vunpack.c.0.s8 %v2402
        %v2404 = vlaneseq
        %v2405 = vshrl.u32 %v2404, 7
        %v2406 = vsub.s32 %v2403, %v2405
        %v2407 = vrot.slane %v2399, %v2406
        %v2409 = vunpack.c.l.s4 1934713408
        %v2410 = vunpack.c.0.s8 %v2409
        %v2411 = vlaneseq
        %v2412 = vshrl.u32 %v2411, 7
        %v2413 = vsub.s32 %v2410, %v2412
        %v2414 = vrot.slane %v2400, %v2413
        %v2415 = vcombine.low %v2391, %v2407
        %v2416 = vcombine.high %v2391, %v2407
        %v2417 = vcombine.low %v2398, %v2414
        %v2418 = vcombine.high %v2398, %v2414
        %2420 = vrot.lane.b32.xlu0 %v2416, 8
        %v2421 = vpop.permute.xlu0 %2420
        %2424 = vrot.lane.b32.xlu0 %v2417, 16
        %v2425 = vpop.permute.xlu0 %2424
        %2428 = vrot.lane.b32.xlu0 %v2418, 24
        %v2429 = vpop.permute.xlu0 %2428
        %v2431 = vsel %vm1628, %v2415, %v2421
        %vm2432 = vcmask 130048
        %v2433 = vsel %vm2432, %v2431, %v2425
        %vm2434 = vcmask 195584
        %v2435 = vsel %vm2434, %v2433, %v2429
        %v2436 = vld [vmem:[%s925] sm:$0xff]
        %v2437 = vld [vmem:[%s925 + $0x8] sm:$0xff]
        %v2438 = vld [vmem:[%s925 + $0x10] sm:$0xff]
        %v2439 = vld [vmem:[%s925 + $0x18] sm:$0xff]
        %v2440 = vld [vmem:[%s928] sm:$0x1]
        %v2442 = vlaneseq
        %v2443 = vshrl.u32 %v2442, 7
        %v2444 = vsub.s32 0, %v2443
        %v2445 = vrot.slane %v2440, %v2444
        %v2448 = vsel %vm1017, %v2435, 0
        %2450 = vmatprep.subr.mxu0 0.0
        %2451 = vmatpush1.msra.mxu0 0.0
        %2452 = vmatprep.subr.mxu0 0.0
        %2453 = vmatpush1.msra.mxu0 0.0
        %2454 = vmatprep.subr.mxu0 0.0
        %2455 = vmatpush1.msra.mxu0 0.0
        %2456 = vmatprep.subr.mxu0 0.0
        %2457 = vmatpush1.msra.mxu0 0.0
        %2458 = vmatprep.subr.mxu0 0.0
        %2459 = vmatpush1.msra.mxu0 0.0
        %2460 = vmatprep.subr.mxu0 0.0
        %2461 = vmatpush1.msra.mxu0 0.0
        %2462 = vmatprep.subr.mxu0 0.0
        %2463 = vmatpush1.msra.mxu0 0.0
        %2464 = vmatprep.subr.mxu0 0.0
        %2465 = vmatpush1.msra.mxu0 0.0
        %2466 = vmatprep.subr.mxu0 0.0
        %2467 = vmatpush1.msra.mxu0 0.0
        %2468 = vmatprep.subr.mxu0 0.0
        %2469 = vmatpush1.msra.mxu0 0.0
        %2470 = vmatprep.subr.mxu0 0.0
        %2471 = vmatpush1.msra.mxu0 0.0
        %2472 = vmatprep.subr.mxu0 0.0
        %2473 = vmatpush1.msra.mxu0 0.0
        %2474 = vmatprep.subr.mxu0 0.0
        %2475 = vmatpush1.msra.mxu0 %v2439
        %2476 = vmatprep.subr.mxu0 0.0
        %2477 = vmatpush1.msra.mxu0 %v2438
        %2478 = vmatprep.subr.mxu0 0.0
        %2479 = vmatpush1.msra.mxu0 %v2437
        %2480 = vmatprep.subr.mxu0 0.0
        %2481 = vmatpush1.msra.mxu0 %v2436
        %2482 = vmatprep.subr.mxu0 0.0
        %2483 = vmatpush2.msra.mxu0 0.0
        %2484 = vmatprep.subr.mxu0 0.0
        %2485 = vmatpush2.msra.mxu0 0.0
        %2486 = vmatprep.subr.mxu0 0.0
        %2487 = vmatpush2.msra.mxu0 0.0
        %2488 = vmatprep.subr.mxu0 0.0
        %2489 = vmatpush2.msra.mxu0 0.0
        %2490 = vmatprep.subr.mxu0 0.0
        %2491 = vmatpush2.msra.mxu0 0.0
        %2492 = vmatprep.subr.mxu0 0.0
        %2493 = vmatpush2.msra.mxu0 0.0
        %2494 = vmatprep.subr.mxu0 0.0
        %2495 = vmatpush2.msra.mxu0 0.0
        %2496 = vmatprep.subr.mxu0 0.0
        %2497 = vmatpush2.msra.mxu0 0.0
        %2498 = vmatprep.subr.mxu0 0.0
        %2499 = vmatpush2.msra.mxu0 0.0
        %2500 = vmatprep.subr.mxu0 0.0
        %2501 = vmatpush2.msra.mxu0 0.0
        %2502 = vmatprep.subr.mxu0 0.0
        %2503 = vmatpush2.msra.mxu0 0.0
        %2504 = vmatprep.subr.mxu0 0.0
        %2505 = vmatpush2.msra.mxu0 0.0
        %2506 = vmatprep.subr.mxu0 0.0
        %2507 = vmatpush2.msra.mxu0 0.0
        %2508 = vmatprep.subr.mxu0 0.0
        %2509 = vmatpush2.msra.mxu0 0.0
        %2510 = vmatprep.subr.mxu0 0.0
        %2511 = vmatpush2.msra.mxu0 0.0
        %2512 = vmatprep.subr.mxu0 0.0
        %2513 = vmatpush2.msra.mxu0 0.0
        %2514 = vmatprep.mubr.f32.mxu0 0.0
        %2515 = vmatmul.mubr.f32.gmra.mxu0 %v2448
        %v2516 = vpop.f32.mrf.mxu0
        %v2517 = vadd.f32 %v2445, %v2516
        %v2518 = vpop.f32.mrf.mxu0
        %2519 = vdwg.mxu0
        %v2520 = vadd.f32 %v2517, %v1002
        %v2521 = vld [vmem:[%s931] sm:$0x1]
        %v2522 = vld [vmem:[%s934] sm:$0x1]
        %v2523 = vsel %vm1017, %v2520, 0.0
        %2524 = vadd.xlane.f32.xlu0 %v2523
        %v2525 = vpop.xlane.xlu0 %2524
        %v2526 = vrcp.pop 32.0
        %v2527 = vmul.f32 %v2525, %v2526
        %v2528 = vsub.f32 %v2520, %v2527
        %v2529 = vmul.f32 %v2528, %v2528
        %v2530 = vsel %vm1017, %v2529, 0.0
        %2531 = vadd.xlane.f32.xlu0 %v2530
        %v2532 = vpop.xlane.xlu0 %2531
        %v2533 = vmul.f32 %v2532, %v2526
        %v2534 = vadd.f32 %v2533, 1e-12
        %v2535 = vrsqrt.pop %v2534
        %v2536 = vmul.f32 %v2528, %v2535
        %v2538 = vlaneseq
        %v2539 = vshrl.u32 %v2538, 7
        %v2540 = vsub.s32 0, %v2539
        %v2541 = vrot.slane %v2521, %v2540
        %v2543 = vmul.f32 %v2536, %v2541
        %v2545 = vlaneseq
        %v2546 = vshrl.u32 %v2545, 7
        %v2547 = vsub.s32 0, %v2546
        %v2548 = vrot.slane %v2522, %v2547
        %v2550 = vadd.f32 %v2543, %v2548
        %v2551 = vld [vmem:[%s939] sm:$0xff]
        %v2552 = vld [vmem:[%s939 + $0x8] sm:$0xff]
        %v2553 = vld [vmem:[%s939 + $0x10] sm:$0xff]
        %v2554 = vld [vmem:[%s939 + $0x18] sm:$0xff]
        %v2555 = vld [vmem:[%s942] sm:$0x1]
        %v2557 = vlaneseq
        %v2558 = vshrl.u32 %v2557, 7
        %v2559 = vsub.s32 0, %v2558
        %v2560 = vrot.slane %v2555, %v2559
        %v2563 = vsel %vm1017, %v2550, 0
        %2565 = vmatprep.subr.mxu0 0.0
        %2566 = vmatpush1.msra.mxu0 0.0
        %2567 = vmatprep.subr.mxu0 0.0
        %2568 = vmatpush1.msra.mxu0 0.0
        %2569 = vmatprep.subr.mxu0 0.0
        %2570 = vmatpush1.msra.mxu0 0.0
        %2571 = vmatprep.subr.mxu0 0.0
        %2572 = vmatpush1.msra.mxu0 0.0
        %2573 = vmatprep.subr.mxu0 0.0
        %2574 = vmatpush1.msra.mxu0 0.0
        %2575 = vmatprep.subr.mxu0 0.0
        %2576 = vmatpush1.msra.mxu0 0.0
        %2577 = vmatprep.subr.mxu0 0.0
        %2578 = vmatpush1.msra.mxu0 0.0
        %2579 = vmatprep.subr.mxu0 0.0
        %2580 = vmatpush1.msra.mxu0 0.0
        %2581 = vmatprep.subr.mxu0 0.0
        %2582 = vmatpush1.msra.mxu0 0.0
        %2583 = vmatprep.subr.mxu0 0.0
        %2584 = vmatpush1.msra.mxu0 0.0
        %2585 = vmatprep.subr.mxu0 0.0
        %2586 = vmatpush1.msra.mxu0 0.0
        %2587 = vmatprep.subr.mxu0 0.0
        %2588 = vmatpush1.msra.mxu0 0.0
        %2589 = vmatprep.subr.mxu0 0.0
        %2590 = vmatpush1.msra.mxu0 %v2554
        %2591 = vmatprep.subr.mxu0 0.0
        %2592 = vmatpush1.msra.mxu0 %v2553
        %2593 = vmatprep.subr.mxu0 0.0
        %2594 = vmatpush1.msra.mxu0 %v2552
        %2595 = vmatprep.subr.mxu0 0.0
        %2596 = vmatpush1.msra.mxu0 %v2551
        %2597 = vmatprep.subr.mxu0 0.0
        %2598 = vmatpush2.msra.mxu0 0.0
        %2599 = vmatprep.subr.mxu0 0.0
        %2600 = vmatpush2.msra.mxu0 0.0
        %2601 = vmatprep.subr.mxu0 0.0
        %2602 = vmatpush2.msra.mxu0 0.0
        %2603 = vmatprep.subr.mxu0 0.0
        %2604 = vmatpush2.msra.mxu0 0.0
        %2605 = vmatprep.subr.mxu0 0.0
        %2606 = vmatpush2.msra.mxu0 0.0
        %2607 = vmatprep.subr.mxu0 0.0
        %2608 = vmatpush2.msra.mxu0 0.0
        %2609 = vmatprep.subr.mxu0 0.0
        %2610 = vmatpush2.msra.mxu0 0.0
        %2611 = vmatprep.subr.mxu0 0.0
        %2612 = vmatpush2.msra.mxu0 0.0
        %2613 = vmatprep.subr.mxu0 0.0
        %2614 = vmatpush2.msra.mxu0 0.0
        %2615 = vmatprep.subr.mxu0 0.0
        %2616 = vmatpush2.msra.mxu0 0.0
        %2617 = vmatprep.subr.mxu0 0.0
        %2618 = vmatpush2.msra.mxu0 0.0
        %2619 = vmatprep.subr.mxu0 0.0
        %2620 = vmatpush2.msra.mxu0 0.0
        %2621 = vmatprep.subr.mxu0 0.0
        %2622 = vmatpush2.msra.mxu0 0.0
        %2623 = vmatprep.subr.mxu0 0.0
        %2624 = vmatpush2.msra.mxu0 0.0
        %2625 = vmatprep.subr.mxu0 0.0
        %2626 = vmatpush2.msra.mxu0 0.0
        %2627 = vmatprep.subr.mxu0 0.0
        %2628 = vmatpush2.msra.mxu0 0.0
        %2629 = vmatprep.mubr.f32.mxu0 0.0
        %2630 = vmatmul.mubr.f32.gmra.mxu0 %v2563
        %v2631 = vpop.f32.mrf.mxu0
        %v2632 = vadd.f32 %v2560, %v2631
        %v2633 = vpop.f32.mrf.mxu0
        %2634 = vdwg.mxu0
        %v2635 = vmul.f32 %v2632, 0.5
        %v2636 = vmul.f32 %v2632, 0.70710677
        %v2637 = vand.u32 2147483647, %v2636
        %v2638 = vmul.f32 %v2637, 0.3275911
        %v2639 = vadd.f32 %v2638, 1.0
        %v2640 = vrcp.pop %v2639
        %v2641 = vmul.f32 %v2640, 1.0614054
        %v2642 = vadd.f32 %v2641, -1.4531521
        %v2643 = vmul.f32 %v2642, %v2640
        %v2644 = vadd.f32 %v2643, 1.4214138
        %v2645 = vmul.f32 %v2644, %v2640
        %v2646 = vadd.f32 %v2645, -0.28449672
        %v2647 = vmul.f32 %v2646, %v2640
        %v2648 = vadd.f32 %v2647, 0.2548296
        %v2649 = vmul.f32 %v2648, %v2640
        %v2650 = vsub.f32 0.0, %v2637
        %v2651 = vmul.f32 %v2650, %v2637
        %v2652 = vmul.f32 %v2651, 1.442695
        %v2653 = vpow.pop %v2652
        %v2654 = vmul.f32 %v2649, %v2653
        %v2655 = vsub.f32 1.0, %v2654
        %vm2656 = vcmp.ge.f32.partialorder %v2636, 0.0
        %v2657 = vsub.f32 0.0, %v2655
        %v2658 = vsel %vm2656, %v2655, %v2657
        %v2659 = vadd.f32 %v2658, 1.0
        %v2660 = vmul.f32 %v2635, %v2659
        %v2661 = vld [vmem:[%s947] sm:$0xff]
        %v2662 = vld [vmem:[%s947 + $0x8] sm:$0xff]
        %v2663 = vld [vmem:[%s947 + $0x10] sm:$0xff]
        %v2664 = vld [vmem:[%s947 + $0x18] sm:$0xff]
        %v2665 = vld [vmem:[%s947 + $0x20] sm:$0xff]
        %v2666 = vld [vmem:[%s947 + $0x28] sm:$0xff]
        %v2667 = vld [vmem:[%s947 + $0x30] sm:$0xff]
        %v2668 = vld [vmem:[%s947 + $0x38] sm:$0xff]
        %v2669 = vld [vmem:[%s950] sm:$0x1]
        %v2671 = vlaneseq
        %v2672 = vshrl.u32 %v2671, 7
        %v2673 = vsub.s32 0, %v2672
        %v2674 = vrot.slane %v2669, %v2673
        %vm2676 = vcmask 523264
        %v2678 = vsel %vm2676, %v2660, 0
        %2680 = vmatprep.subr.mxu0 0.0
        %2681 = vmatpush1.msra.mxu0 0.0
        %2682 = vmatprep.subr.mxu0 0.0
        %2683 = vmatpush1.msra.mxu0 0.0
        %2684 = vmatprep.subr.mxu0 0.0
        %2685 = vmatpush1.msra.mxu0 0.0
        %2686 = vmatprep.subr.mxu0 0.0
        %2687 = vmatpush1.msra.mxu0 0.0
        %2688 = vmatprep.subr.mxu0 0.0
        %2689 = vmatpush1.msra.mxu0 0.0
        %2690 = vmatprep.subr.mxu0 0.0
        %2691 = vmatpush1.msra.mxu0 0.0
        %2692 = vmatprep.subr.mxu0 0.0
        %2693 = vmatpush1.msra.mxu0 0.0
        %2694 = vmatprep.subr.mxu0 0.0
        %2695 = vmatpush1.msra.mxu0 0.0
        %2696 = vmatprep.subr.mxu0 0.0
        %2697 = vmatpush1.msra.mxu0 %v2668
        %2698 = vmatprep.subr.mxu0 0.0
        %2699 = vmatpush1.msra.mxu0 %v2667
        %2700 = vmatprep.subr.mxu0 0.0
        %2701 = vmatpush1.msra.mxu0 %v2666
        %2702 = vmatprep.subr.mxu0 0.0
        %2703 = vmatpush1.msra.mxu0 %v2665
        %2704 = vmatprep.subr.mxu0 0.0
        %2705 = vmatpush1.msra.mxu0 %v2664
        %2706 = vmatprep.subr.mxu0 0.0
        %2707 = vmatpush1.msra.mxu0 %v2663
        %2708 = vmatprep.subr.mxu0 0.0
        %2709 = vmatpush1.msra.mxu0 %v2662
        %2710 = vmatprep.subr.mxu0 0.0
        %2711 = vmatpush1.msra.mxu0 %v2661
        %2712 = vmatprep.subr.mxu0 0.0
        %2713 = vmatpush2.msra.mxu0 0.0
        %2714 = vmatprep.subr.mxu0 0.0
        %2715 = vmatpush2.msra.mxu0 0.0
        %2716 = vmatprep.subr.mxu0 0.0
        %2717 = vmatpush2.msra.mxu0 0.0
        %2718 = vmatprep.subr.mxu0 0.0
        %2719 = vmatpush2.msra.mxu0 0.0
        %2720 = vmatprep.subr.mxu0 0.0
        %2721 = vmatpush2.msra.mxu0 0.0
        %2722 = vmatprep.subr.mxu0 0.0
        %2723 = vmatpush2.msra.mxu0 0.0
        %2724 = vmatprep.subr.mxu0 0.0
        %2725 = vmatpush2.msra.mxu0 0.0
        %2726 = vmatprep.subr.mxu0 0.0
        %2727 = vmatpush2.msra.mxu0 0.0
        %2728 = vmatprep.subr.mxu0 0.0
        %2729 = vmatpush2.msra.mxu0 0.0
        %2730 = vmatprep.subr.mxu0 0.0
        %2731 = vmatpush2.msra.mxu0 0.0
        %2732 = vmatprep.subr.mxu0 0.0
        %2733 = vmatpush2.msra.mxu0 0.0
        %2734 = vmatprep.subr.mxu0 0.0
        %2735 = vmatpush2.msra.mxu0 0.0
        %2736 = vmatprep.subr.mxu0 0.0
        %2737 = vmatpush2.msra.mxu0 0.0
        %2738 = vmatprep.subr.mxu0 0.0
        %2739 = vmatpush2.msra.mxu0 0.0
        %2740 = vmatprep.subr.mxu0 0.0
        %2741 = vmatpush2.msra.mxu0 0.0
        %2742 = vmatprep.subr.mxu0 0.0
        %2743 = vmatpush2.msra.mxu0 0.0
        %2744 = vmatprep.mubr.f32.mxu0 0.0
        %2745 = vmatmul.mubr.f32.gmra.mxu0 %v2678
        %v2746 = vpop.f32.mrf.mxu0
        %v2747 = vadd.f32 %v2674, %v2746
        %v2748 = vpop.f32.mrf.mxu0
        %2749 = vdwg.mxu0
        %v2750 = vadd.f32 %v2747, %v2550
        %v2751 = vld [vmem:[%s953] sm:$0x1]
        %v2752 = vld [vmem:[%s956] sm:$0x1]
        %v2753 = vsel %vm1017, %v2750, 0.0
        %2754 = vadd.xlane.f32.xlu0 %v2753
        %v2755 = vpop.xlane.xlu0 %2754
        %v2756 = vmul.f32 %v2755, %v2526
        %v2757 = vsub.f32 %v2750, %v2756
        %v2758 = vmul.f32 %v2757, %v2757
        %v2759 = vsel %vm1017, %v2758, 0.0
        %2760 = vadd.xlane.f32.xlu0 %v2759
        %v2761 = vpop.xlane.xlu0 %2760
        %v2762 = vmul.f32 %v2761, %v2526
        %v2763 = vadd.f32 %v2762, 1e-12
        %v2764 = vrsqrt.pop %v2763
        %v2765 = vmul.f32 %v2757, %v2764
        %v2767 = vlaneseq
        %v2768 = vshrl.u32 %v2767, 7
        %v2769 = vsub.s32 0, %v2768
        %v2770 = vrot.slane %v2751, %v2769
        %v2772 = vmul.f32 %v2765, %v2770
        %v2774 = vlaneseq
        %v2775 = vshrl.u32 %v2774, 7
        %v2776 = vsub.s32 0, %v2775
        %v2777 = vrot.slane %v2752, %v2776
        %v2779 = vadd.f32 %v2772, %v2777
        %2780 = vst.msk [vmem:[#allocation2] sm:$0xff] %vm1017, %v2779
        %p2781 = scmp.eq.s32.totalorder %s48, 1
        // Predicated region
        $region137: #{tpu_custom_call.1} parent=99 // pred_check
          %p2782 = pneg %p2781
        $region138: #{tpu_custom_call.1} parent=99 // pred_check_branch
          %2784 = sbr.rel (%p2782) target = $region140
        $region139: #{tpu_custom_call.1} parent=99 // pred_region
          %vm2785 = vcmask 253952
          %2786 = vst.msk [vmem:[%s912] sm:$0x1] %vm2785, %v2779
        $region140: #{tpu_custom_call.1} parent=99 // pred_fallthru
          _
        %s2787 = sand.u32 %s553, 1
        %s2788 = scalar_lea.sflag [#allocation5], %s2787
        %s2789 = sand.u32 %s553, 1
        %s2790 = scalar_lea.vmem [#allocation17], %s2789
        // Predicated region
        $region141: #{tpu_custom_call.1} parent=99 // pred_check
          %p2791 = pneg %p563
        $region142: #{tpu_custom_call.1} parent=99 // pred_check_branch
          %2793 = sbr.rel (%p2791) target = $region144
        $region143: #{tpu_custom_call.1} parent=99 // pred_region
          %s2795 = ssub.s32 16, 16
          %2796 = vsyncadd %s2788, %s2795
          %s2797 = smul.addr %s47, 16
          %s2798 = scalar_lea.hbm %s20, %s2797
          %s2800 = sshll.u32 %s2790, 4
          %s2801 = int_to_ptr.vmem [resolvable:$true] %s2800
          %2803 = dma.vmem_to_hbm [thread:$0]  %s2801, 16, %s2798, %s2788
        $region144: #{tpu_custom_call.1} parent=99 // pred_fallthru
          _
      $region100: #{tpu_custom_call.1} parent=5 // pred_fallthru
        _
      %p2804 = scmp.le.s32.totalorder 2, %s38
      // Predicated region
      $region145: #{tpu_custom_call.1} parent=5 // pred_check
        %p2805 = pneg %p2804
      $region146: #{tpu_custom_call.1} parent=5 // pred_check_branch
        %2807 = sbr.rel (%p2805) target = $region148
      $region147: #{tpu_custom_call.1} parent=5 // pred_region
        %s2808 = ssub.s32 %s38, 2
        // Predicated region
        $region149: #{tpu_custom_call.1} parent=147 // pred_check
          %p2809 = pneg %p569
        $region150: #{tpu_custom_call.1} parent=147 // pred_check_branch
          %2811 = sbr.rel (%p2809) target = $region152
        $region151: #{tpu_custom_call.1} parent=147 // pred_region
          %s2812 = sand.u32 %s554, 1
          %s2813 = scalar_lea.sflag [#allocation5], %s2812
          %s2814 = sand.u32 %s554, 1
          %s2815 = scalar_lea.vmem [#allocation17], %s2814
          %2816 = dma.done %s2813, 16
        $region152: #{tpu_custom_call.1} parent=147 // pred_fallthru
          _
      $region148: #{tpu_custom_call.1} parent=5 // pred_fallthru
        _
    $region6: #{tpu_custom_call.1} parent=1 // loop_footer
      %s42 = sadd.s32 1, %s38
    $region7: #{tpu_custom_call.1} parent=1 // loop_footer_branch
      %37 = sbr.rel target = $region3
    $region8: #{tpu_custom_call.1} parent=1 // loop_exit
      _
    %2817 = vsyncpa [#allocation4], 1
    %s2818 = scalar_lea.sflag [#allocation4], 1
    %2819 = vsyncpa %s2818, 1
    %2820 = vsyncpa [#allocation7], 1
    %s2821 = scalar_lea.sflag [#allocation7], 1
    %2822 = vsyncpa %s2821, 1
    %2823 = vsyncpa [#allocation10], 1
    %2824 = vsyncpa [#allocation13], 1
    %2825 = vsyncpa [#allocation16], 1
    %2826 = vsyncpa [#allocation5], 1
    %s2827 = scalar_lea.sflag [#allocation5], 1
    %2828 = vsyncpa %s2827, 1

</llo_original>
